<compile_context>
chip_gen: v6e
topology: v6e:2x2x1
jax: 0.10.0
libtpu: 0.0.40
codegen_flags: <defaults>
</compile_context>

<pallas_src>
import functools

import jax
import jax.numpy as jnp
from jax import lax
from jax.experimental import pallas as pl
from jax.experimental.pallas import tpu as pltpu


# ----------------------------------------------------------------------------
# In-kernel helpers
# ----------------------------------------------------------------------------
def _conv3x3_bias_relu(a, w_ref, b_ref):
    """3x3 'SAME' conv via tap-folded im2col + one MXU matmul, then bias + ReLU.

    a:     (H, W, Cin)  bf16 activation (value, lives in VMEM/vregs)
    w_ref: (9*Cin, Cout) bf16 folded weights (BN scale already folded in)
    b_ref: (1, Cout)     f32 folded BN bias
    returns (H, W, Cout) f32
    """
    H, W, Cin = a.shape
    Cout = w_ref.shape[1]

    # Zero halo built in VMEM (no HBM padding pass): rows then columns.
    zrow = jnp.zeros((1, W, Cin), a.dtype)
    ah = jnp.concatenate([zrow, a, zrow], axis=0)            # (H+2, W, Cin)
    zcol = jnp.zeros((H + 2, 1, Cin), a.dtype)
    ap = jnp.concatenate([zcol, ah, zcol], axis=1)           # (H+2, W+2, Cin)

    # im2col: fold all 9 taps into the contraction dim -> K = 9*Cin.
    taps = [ap[ky:ky + H, kx:kx + W, :] for ky in range(3) for kx in range(3)]
    patches = jnp.concatenate(taps, axis=-1).reshape(H * W, 9 * Cin)

    acc = jnp.dot(patches, w_ref[...], preferred_element_type=jnp.float32)
    y = jnp.maximum(acc + b_ref[...], 0.0)                   # bias(BN) + ReLU, f32
    return y.reshape(H, W, Cout)


def _make_fused_kernel(num_layers):
    def kernel(*refs):
        # refs = x, (w_0, b_0), (w_1, b_1), ..., o_ref, idx_ref
        x_ref = refs[0]
        w_refs = [refs[1 + 2 * l] for l in range(num_layers)]
        b_refs = [refs[2 + 2 * l] for l in range(num_layers)]
        o_ref = refs[1 + 2 * num_layers]
        idx_ref = refs[2 + 2 * num_layers]

        act = x_ref[0]                                       # (H, W, Cin) bf16
        for l in range(num_layers):
            y = _conv3x3_bias_relu(act, w_refs[l], b_refs[l])  # f32
            # keep the last layer in f32 for pooling; earlier layers feed the next matmul in bf16
            act = y.astype(jnp.bfloat16) if l + 1 < num_layers else y

        # ---- fused 2x2 / stride-2 max-pool with argmax indices -------------
        H, W, C = act.shape
        Ho, Wo = H // 2, W // 2
        r = act.reshape(Ho, 2, Wo, 2, C)
        cands = [r[:, dh, :, dw, :] for dh in range(2) for dw in range(2)]  # p = dh*2 + dw

        best = cands[0]
        off = jnp.zeros((Ho, Wo, C), jnp.int32)              # chosen tap offset dh*W + dw
        for p in range(1, 4):
            dh, dw = divmod(p, 2)
            take = cands[p] > best                            # strict '>' keeps first max
            best = jnp.where(take, cands[p], best)
            off = jnp.where(take, dh * W + dw, off)

        # hoisted base index, broadcast over channels once
        ii = lax.broadcasted_iota(jnp.int32, (Ho, Wo, 1), 0)
        jj = lax.broadcasted_iota(jnp.int32, (Ho, Wo, 1), 1)
        base = (2 * ii) * W + 2 * jj                          # (Ho, Wo, 1)

        o_ref[...] = best[None].astype(o_ref.dtype)
        idx_ref[...] = (base + off)[None]

    return kernel


# ----------------------------------------------------------------------------
# Wrapper: NCHW in / NCHW out, single fused pallas_call
# ----------------------------------------------------------------------------
def downsample_block_forward(x_nchw, params):
    """params: list of (w_folded (3,3,Cin,Cout) bf16, bias (Cout,) f32) per ConvBNAct layer."""
    N, Cin, H, W = x_nchw.shape
    assert H % 2 == 0 and W % 2 == 0, "MaxPool2d(2,2) expects even spatial dims"
    num_layers = len(params)
    Cout = params[-1][0].shape[-1]
    Ho, Wo = H // 2, W // 2

    x = jnp.transpose(x_nchw, (0, 2, 3, 1)).astype(jnp.bfloat16)   # NHWC, bf16

    flat_inputs = [x]
    in_specs = [pl.BlockSpec((1, H, W, Cin), lambda n: (n, 0, 0, 0))]
    flops = 0
    bytes_accessed = x.size * 2 + N * Ho * Wo * Cout * (4 + 4)
    for (w, b) in params:
        cin_l, cout_l = w.shape[2], w.shape[3]
        w2d = w.reshape(9 * cin_l, cout_l)                   # (ky,kx,cin) flattened -> K
        b2d = b.reshape(1, cout_l)
        flat_inputs += [w2d, b2d]
        in_specs += [
            pl.BlockSpec((9 * cin_l, cout_l), lambda n: (0, 0)),
            pl.BlockSpec((1, cout_l), lambda n: (0, 0)),
        ]
        flops += 2 * N * H * W * 9 * cin_l * cout_l
        bytes_accessed += w2d.size * 2 + b2d.size * 4

    kernel = _make_fused_kernel(num_layers)
    pooled, indices = pl.pallas_call(
        kernel,
        out_shape=(jax.ShapeDtypeStruct((N, Ho, Wo, Cout), jnp.float32),
                   jax.ShapeDtypeStruct((N, Ho, Wo, Cout), jnp.int32)),
        grid=(N,),
        in_specs=in_specs,
        out_specs=(pl.BlockSpec((1, Ho, Wo, Cout), lambda n: (n, 0, 0, 0)),
                   pl.BlockSpec((1, Ho, Wo, Cout), lambda n: (n, 0, 0, 0))),
        compiler_params=pltpu.CompilerParams(
            dimension_semantics=("parallel",),
            vmem_limit_bytes=32 * 1024 * 1024),
        cost_estimate=pl.CostEstimate(flops=flops, transcendentals=0,
                                      bytes_accessed=int(bytes_accessed)),
    )(*flat_inputs)

    pooled = jnp.transpose(pooled, (0, 3, 1, 2))             # NHWC -> NCHW
    indices = jnp.transpose(indices, (0, 3, 1, 2))
    return pooled, indices


# ----------------------------------------------------------------------------
# Parameter construction: fold BN into the conv weights (host side)
# ----------------------------------------------------------------------------
def init_params(key, in_channels, out_channels, extra_conv=False, eps=1e-5):
    cfgs = [(in_channels, out_channels), (out_channels, out_channels)]
    if extra_conv:
        cfgs.append((out_channels, out_channels))
    params = []
    for (cin, cout) in cfgs:
        key, k1, k2, k3, k4, k5 = jax.random.split(key, 6)
        w = jax.random.normal(k1, (3, 3, cin, cout), jnp.float32) * 0.1   # HWIO
        gamma = 1.0 + 0.1 * jax.random.normal(k2, (cout,), jnp.float32)
        beta = 0.1 * jax.random.normal(k3, (cout,), jnp.float32)
        mean = 0.1 * jax.random.normal(k4, (cout,), jnp.float32)
        var = jnp.abs(jax.random.normal(k5, (cout,), jnp.float32)) + 0.5
        scale = gamma / jnp.sqrt(var + eps)                   # fold BN scale into W
        w_folded = (w * scale[None, None, None, :]).astype(jnp.bfloat16)
        bias = (beta - mean * scale).astype(jnp.float32)
        params.append((w_folded, bias))
    return params


# ----------------------------------------------------------------------------
# Pure-JAX reference (same bf16 operand precision as the kernel)
# ----------------------------------------------------------------------------
def reference_forward(x_nchw, params):
    x = jnp.transpose(x_nchw, (0, 2, 3, 1))
    for (w, b) in params:
        y = lax.conv_general_dilated(
            x.astype(jnp.bfloat16), w.astype(jnp.bfloat16),
            window_strides=(1, 1), padding="SAME",
            dimension_numbers=("NHWC", "HWIO", "NHWC"),
            preferred_element_type=jnp.float32)
        x = jnp.maximum(y + b[None, None, None, :], 0.0)
    N, H, W, C = x.shape
    Ho, Wo = H // 2, W // 2
    win = (x.reshape(N, Ho, 2, Wo, 2, C)
           .transpose(0, 1, 3, 5, 2, 4)
           .reshape(N, Ho, Wo, C, 4))
    pmax = win.max(-1)
    parg = win.argmax(-1).astype(jnp.int32)
    dh, dw = parg // 2, parg % 2
    ii = jnp.arange(Ho, dtype=jnp.int32)[None, :, None, None]
    jj = jnp.arange(Wo, dtype=jnp.int32)[None, None, :, None]
    idx = (2 * ii + dh) * W + (2 * jj + dw)
    return (jnp.transpose(pmax, (0, 3, 1, 2)),
            jnp.transpose(idx, (0, 3, 1, 2)),
            jnp.transpose(x, (0, 3, 1, 2)))                   # pre-pool activation, NCHW


if __name__ == "__main__":
    key = jax.random.PRNGKey(0)
    kx, kp = jax.random.split(key)

    N, Cin, Cout, H, W = 2, 4, 8, 16, 16
    x = jax.random.normal(kx, (N, Cin, H, W), jnp.float32)    # PyTorch-style NCHW input
    params = init_params(kp, Cin, Cout, extra_conv=False)

    fwd = jax.jit(functools.partial(downsample_block_forward, params=params))
    pooled, indices = fwd(x)
    jax.block_until_ready(pooled)
    jax.block_until_ready(indices)

    ref_pooled, ref_idx, ref_prepool = reference_forward(x, params)
    Ho, Wo = H // 2, W // 2

    assert pooled.shape == (N, Cout, Ho, Wo)
    assert indices.shape == (N, Cout, Ho, Wo)
    assert jnp.allclose(pooled, ref_pooled, atol=2e-3, rtol=2e-3)

    # indices must point at entries of the pre-pool map that equal the pooled max
    gathered = jnp.take_along_axis(
        ref_prepool.reshape(N, Cout, H * W),
        indices.reshape(N, Cout, Ho * Wo), axis=-1).reshape(N, Cout, Ho, Wo)
    assert jnp.allclose(gathered, ref_pooled, atol=2e-3, rtol=2e-3)

    # exact index parity, tolerating (extremely rare) near-tie flips from bf16 rounding
    match = jnp.mean((indices == ref_idx).astype(jnp.float32))
    assert match >= 0.995

    print("KERNEL_OK")
</pallas_src>

<mosaic_0001>
module attributes {stable_mosaic.version = 11 : i64} {
  func.func @kernel(%arg0: i32, %arg1: memref<1x16x16x4xbf16, #tpu.memory_space<vmem>>, %arg2: memref<36x8xbf16, #tpu.memory_space<vmem>>, %arg3: memref<1x8xf32, #tpu.memory_space<vmem>>, %arg4: memref<72x8xbf16, #tpu.memory_space<vmem>>, %arg5: memref<1x8xf32, #tpu.memory_space<vmem>>, %arg6: memref<1x8x8x8xf32, #tpu.memory_space<vmem>>, %arg7: memref<1x8x8x8xi32, #tpu.memory_space<vmem>>) attributes {dimension_semantics = [#tpu.dimension_semantics<parallel>], iteration_bounds = array<i64: 2>, scalar_prefetch = 0 : i64, scratch_operands = 0 : i64, tpu.core_type = #tpu.core_type<tc>, window_params = [{transform_indices = @transform_0, window_bounds = array<i64: 1, 16, 16, 4>}, {pipeline_mode = #tpu.pipeline_mode<synchronous>, transform_indices = @transform_1, window_bounds = array<i64: 36, 8>}, {pipeline_mode = #tpu.pipeline_mode<synchronous>, transform_indices = @transform_2, window_bounds = array<i64: 1, 8>}, {pipeline_mode = #tpu.pipeline_mode<synchronous>, transform_indices = @transform_3, window_bounds = array<i64: 72, 8>}, {pipeline_mode = #tpu.pipeline_mode<synchronous>, transform_indices = @transform_4, window_bounds = array<i64: 1, 8>}, {transform_indices = @transform_5, window_bounds = array<i64: 1, 8, 8, 8>}, {transform_indices = @transform_6, window_bounds = array<i64: 1, 8, 8, 8>}]} {
    %c0 = arith.constant 0 : index
    %c0_0 = arith.constant 0 : index
    %c0_1 = arith.constant 0 : index
    %c0_2 = arith.constant 0 : index
    %0 = vector.load %arg1[%c0, %c0_0, %c0_1, %c0_2] : memref<1x16x16x4xbf16, #tpu.memory_space<vmem>>, vector<1x16x16x4xbf16>
    %1 = vector.shape_cast %0 : vector<1x16x16x4xbf16> to vector<16x16x4xbf16>
    %cst = arith.constant 0.000000e+00 : bf16
    %2 = vector.broadcast %cst : bf16 to vector<1x16x4xbf16>
    %3 = tpu.concatenate %2, %1, %2 in 0 : vector<1x16x4xbf16>, vector<16x16x4xbf16>, vector<1x16x4xbf16> -> vector<18x16x4xbf16>
    %cst_3 = arith.constant 0.000000e+00 : bf16
    %4 = vector.broadcast %cst_3 : bf16 to vector<18x1x4xbf16>
    %5 = tpu.concatenate %4, %3, %4 in 1 : vector<18x1x4xbf16>, vector<18x16x4xbf16>, vector<18x1x4xbf16> -> vector<18x18x4xbf16>
    %6 = vector.extract_strided_slice %5 {offsets = [0, 0, 0], sizes = [16, 16, 4], strides = [1, 1, 1]} : vector<18x18x4xbf16> to vector<16x16x4xbf16>
    %7 = vector.extract_strided_slice %5 {offsets = [0, 1, 0], sizes = [16, 16, 4], strides = [1, 1, 1]} : vector<18x18x4xbf16> to vector<16x16x4xbf16>
    %8 = vector.extract_strided_slice %5 {offsets = [0, 2, 0], sizes = [16, 16, 4], strides = [1, 1, 1]} : vector<18x18x4xbf16> to vector<16x16x4xbf16>
    %9 = vector.extract_strided_slice %5 {offsets = [1, 0, 0], sizes = [16, 16, 4], strides = [1, 1, 1]} : vector<18x18x4xbf16> to vector<16x16x4xbf16>
    %10 = vector.extract_strided_slice %5 {offsets = [1, 1, 0], sizes = [16, 16, 4], strides = [1, 1, 1]} : vector<18x18x4xbf16> to vector<16x16x4xbf16>
    %11 = vector.extract_strided_slice %5 {offsets = [1, 2, 0], sizes = [16, 16, 4], strides = [1, 1, 1]} : vector<18x18x4xbf16> to vector<16x16x4xbf16>
    %12 = vector.extract_strided_slice %5 {offsets = [2, 0, 0], sizes = [16, 16, 4], strides = [1, 1, 1]} : vector<18x18x4xbf16> to vector<16x16x4xbf16>
    %13 = vector.extract_strided_slice %5 {offsets = [2, 1, 0], sizes = [16, 16, 4], strides = [1, 1, 1]} : vector<18x18x4xbf16> to vector<16x16x4xbf16>
    %14 = vector.extract_strided_slice %5 {offsets = [2, 2, 0], sizes = [16, 16, 4], strides = [1, 1, 1]} : vector<18x18x4xbf16> to vector<16x16x4xbf16>
    %15 = tpu.concatenate %6, %7, %8, %9, %10, %11, %12, %13, %14 in 2 : vector<16x16x4xbf16>, vector<16x16x4xbf16>, vector<16x16x4xbf16>, vector<16x16x4xbf16>, vector<16x16x4xbf16>, vector<16x16x4xbf16>, vector<16x16x4xbf16>, vector<16x16x4xbf16>, vector<16x16x4xbf16> -> vector<16x16x36xbf16>
    %16 = vector.shape_cast %15 : vector<16x16x36xbf16> to vector<256x36xbf16>
    %c0_4 = arith.constant 0 : index
    %c0_5 = arith.constant 0 : index
    %17 = vector.load %arg2[%c0_4, %c0_5] : memref<36x8xbf16, #tpu.memory_space<vmem>>, vector<36x8xbf16>
    %cst_6 = arith.constant dense<0.000000e+00> : vector<256x8xf32>
    %18 = tpu.matmul %16, %17, %cst_6 {dimension_numbers = #tpu.dot_dimension_numbers<[1], [0], [0], [1], [0, 0, 1, 1], [], []>} : vector<256x36xbf16>, vector<36x8xbf16>, vector<256x8xf32> -> vector<256x8xf32>
    %c0_7 = arith.constant 0 : index
    %c0_8 = arith.constant 0 : index
    %19 = vector.load %arg3[%c0_7, %c0_8] : memref<1x8xf32, #tpu.memory_space<vmem>>, vector<1x8xf32>
    %20 = vector.broadcast %19 : vector<1x8xf32> to vector<256x8xf32>
    %21 = arith.addf %18, %20 : vector<256x8xf32>
    %cst_9 = arith.constant 0.000000e+00 : f32
    %22 = vector.broadcast %cst_9 : f32 to vector<256x8xf32>
    %23 = arith.maximumf %21, %22 : vector<256x8xf32>
    %24 = vector.shape_cast %23 : vector<256x8xf32> to vector<16x16x8xf32>
    %25 = arith.truncf %24 : vector<16x16x8xf32> to vector<16x16x8xbf16>
    %cst_10 = arith.constant 0.000000e+00 : bf16
    %26 = vector.broadcast %cst_10 : bf16 to vector<1x16x8xbf16>
    %27 = tpu.concatenate %26, %25, %26 in 0 : vector<1x16x8xbf16>, vector<16x16x8xbf16>, vector<1x16x8xbf16> -> vector<18x16x8xbf16>
    %cst_11 = arith.constant 0.000000e+00 : bf16
    %28 = vector.broadcast %cst_11 : bf16 to vector<18x1x8xbf16>
    %29 = tpu.concatenate %28, %27, %28 in 1 : vector<18x1x8xbf16>, vector<18x16x8xbf16>, vector<18x1x8xbf16> -> vector<18x18x8xbf16>
    %30 = vector.extract_strided_slice %29 {offsets = [0, 0, 0], sizes = [16, 16, 8], strides = [1, 1, 1]} : vector<18x18x8xbf16> to vector<16x16x8xbf16>
    %31 = vector.extract_strided_slice %29 {offsets = [0, 1, 0], sizes = [16, 16, 8], strides = [1, 1, 1]} : vector<18x18x8xbf16> to vector<16x16x8xbf16>
    %32 = vector.extract_strided_slice %29 {offsets = [0, 2, 0], sizes = [16, 16, 8], strides = [1, 1, 1]} : vector<18x18x8xbf16> to vector<16x16x8xbf16>
    %33 = vector.extract_strided_slice %29 {offsets = [1, 0, 0], sizes = [16, 16, 8], strides = [1, 1, 1]} : vector<18x18x8xbf16> to vector<16x16x8xbf16>
    %34 = vector.extract_strided_slice %29 {offsets = [1, 1, 0], sizes = [16, 16, 8], strides = [1, 1, 1]} : vector<18x18x8xbf16> to vector<16x16x8xbf16>
    %35 = vector.extract_strided_slice %29 {offsets = [1, 2, 0], sizes = [16, 16, 8], strides = [1, 1, 1]} : vector<18x18x8xbf16> to vector<16x16x8xbf16>
    %36 = vector.extract_strided_slice %29 {offsets = [2, 0, 0], sizes = [16, 16, 8], strides = [1, 1, 1]} : vector<18x18x8xbf16> to vector<16x16x8xbf16>
    %37 = vector.extract_strided_slice %29 {offsets = [2, 1, 0], sizes = [16, 16, 8], strides = [1, 1, 1]} : vector<18x18x8xbf16> to vector<16x16x8xbf16>
    %38 = vector.extract_strided_slice %29 {offsets = [2, 2, 0], sizes = [16, 16, 8], strides = [1, 1, 1]} : vector<18x18x8xbf16> to vector<16x16x8xbf16>
    %39 = tpu.concatenate %30, %31, %32, %33, %34, %35, %36, %37, %38 in 2 : vector<16x16x8xbf16>, vector<16x16x8xbf16>, vector<16x16x8xbf16>, vector<16x16x8xbf16>, vector<16x16x8xbf16>, vector<16x16x8xbf16>, vector<16x16x8xbf16>, vector<16x16x8xbf16>, vector<16x16x8xbf16> -> vector<16x16x72xbf16>
    %40 = vector.shape_cast %39 : vector<16x16x72xbf16> to vector<256x72xbf16>
    %c0_12 = arith.constant 0 : index
    %c0_13 = arith.constant 0 : index
    %41 = vector.load %arg4[%c0_12, %c0_13] : memref<72x8xbf16, #tpu.memory_space<vmem>>, vector<72x8xbf16>
    %cst_14 = arith.constant dense<0.000000e+00> : vector<256x8xf32>
    %42 = tpu.matmul %40, %41, %cst_14 {dimension_numbers = #tpu.dot_dimension_numbers<[1], [0], [0], [1], [0, 0, 1, 1], [], []>} : vector<256x72xbf16>, vector<72x8xbf16>, vector<256x8xf32> -> vector<256x8xf32>
    %c0_15 = arith.constant 0 : index
    %c0_16 = arith.constant 0 : index
    %43 = vector.load %arg5[%c0_15, %c0_16] : memref<1x8xf32, #tpu.memory_space<vmem>>, vector<1x8xf32>
    %44 = vector.broadcast %43 : vector<1x8xf32> to vector<256x8xf32>
    %45 = arith.addf %42, %44 : vector<256x8xf32>
    %cst_17 = arith.constant 0.000000e+00 : f32
    %46 = vector.broadcast %cst_17 : f32 to vector<256x8xf32>
    %47 = arith.maximumf %45, %46 : vector<256x8xf32>
    %48 = vector.shape_cast %47 : vector<256x8xf32> to vector<16x16x8xf32>
    %49 = vector.shape_cast %48 : vector<16x16x8xf32> to vector<8x2x8x2x8xf32>
    %50 = vector.extract_strided_slice %49 {offsets = [0, 0, 0, 0, 0], sizes = [8, 1, 8, 1, 8], strides = [1, 1, 1, 1, 1]} : vector<8x2x8x2x8xf32> to vector<8x1x8x1x8xf32>
    %51 = vector.shape_cast %50 : vector<8x1x8x1x8xf32> to vector<8x8x8xf32>
    %52 = vector.extract_strided_slice %49 {offsets = [0, 0, 0, 1, 0], sizes = [8, 1, 8, 1, 8], strides = [1, 1, 1, 1, 1]} : vector<8x2x8x2x8xf32> to vector<8x1x8x1x8xf32>
    %53 = vector.shape_cast %52 : vector<8x1x8x1x8xf32> to vector<8x8x8xf32>
    %54 = vector.extract_strided_slice %49 {offsets = [0, 1, 0, 0, 0], sizes = [8, 1, 8, 1, 8], strides = [1, 1, 1, 1, 1]} : vector<8x2x8x2x8xf32> to vector<8x1x8x1x8xf32>
    %55 = vector.shape_cast %54 : vector<8x1x8x1x8xf32> to vector<8x8x8xf32>
    %56 = vector.extract_strided_slice %49 {offsets = [0, 1, 0, 1, 0], sizes = [8, 1, 8, 1, 8], strides = [1, 1, 1, 1, 1]} : vector<8x2x8x2x8xf32> to vector<8x1x8x1x8xf32>
    %57 = vector.shape_cast %56 : vector<8x1x8x1x8xf32> to vector<8x8x8xf32>
    %c0_i32 = arith.constant 0 : i32
    %58 = vector.broadcast %c0_i32 : i32 to vector<8x8x8xi32>
    %59 = arith.cmpf ogt, %53, %51 : vector<8x8x8xf32>
    %60 = arith.select %59, %53, %51 : vector<8x8x8xi1>, vector<8x8x8xf32>
    %c1_i32 = arith.constant 1 : i32
    %61 = vector.broadcast %c1_i32 : i32 to vector<8x8x8xi32>
    %62 = arith.select %59, %61, %58 : vector<8x8x8xi1>, vector<8x8x8xi32>
    %63 = arith.cmpf ogt, %55, %60 : vector<8x8x8xf32>
    %64 = arith.select %63, %55, %60 : vector<8x8x8xi1>, vector<8x8x8xf32>
    %c16_i32 = arith.constant 16 : i32
    %65 = vector.broadcast %c16_i32 : i32 to vector<8x8x8xi32>
    %66 = arith.select %63, %65, %62 : vector<8x8x8xi1>, vector<8x8x8xi32>
    %67 = arith.cmpf ogt, %57, %64 : vector<8x8x8xf32>
    %68 = arith.select %67, %57, %64 : vector<8x8x8xi1>, vector<8x8x8xf32>
    %c17_i32 = arith.constant 17 : i32
    %69 = vector.broadcast %c17_i32 : i32 to vector<8x8x8xi32>
    %70 = arith.select %67, %69, %66 : vector<8x8x8xi1>, vector<8x8x8xi32>
    %71 = tpu.iota {dimensions = array<i32: 0>} : vector<8x8x1xi32>
    %72 = tpu.iota {dimensions = array<i32: 1>} : vector<8x8x1xi32>
    %c2_i32 = arith.constant 2 : i32
    %73 = vector.broadcast %c2_i32 : i32 to vector<8x8x1xi32>
    %74 = arith.muli %73, %71 : vector<8x8x1xi32>
    %c16_i32_18 = arith.constant 16 : i32
    %75 = vector.broadcast %c16_i32_18 : i32 to vector<8x8x1xi32>
    %76 = arith.muli %74, %75 : vector<8x8x1xi32>
    %c2_i32_19 = arith.constant 2 : i32
    %77 = vector.broadcast %c2_i32_19 : i32 to vector<8x8x1xi32>
    %78 = arith.muli %77, %72 : vector<8x8x1xi32>
    %79 = arith.addi %76, %78 : vector<8x8x1xi32>
    %80 = vector.shape_cast %68 : vector<8x8x8xf32> to vector<1x8x8x8xf32>
    %c0_20 = arith.constant 0 : index
    %c0_21 = arith.constant 0 : index
    %c0_22 = arith.constant 0 : index
    %c0_23 = arith.constant 0 : index
    %81 = vector.load %arg6[%c0_20, %c0_21, %c0_22, %c0_23] : memref<1x8x8x8xf32, #tpu.memory_space<vmem>>, vector<1x8x8x8xf32>
    tpu.vector_store %arg6[%c0_20, %c0_21, %c0_22, %c0_23], %80 {strides = array<i32>} : memref<1x8x8x8xf32, #tpu.memory_space<vmem>>, vector<1x8x8x8xf32>,
    %82 = vector.broadcast %79 : vector<8x8x1xi32> to vector<8x8x8xi32>
    %83 = arith.addi %82, %70 : vector<8x8x8xi32>
    %84 = vector.shape_cast %83 : vector<8x8x8xi32> to vector<1x8x8x8xi32>
    %c0_24 = arith.constant 0 : index
    %c0_25 = arith.constant 0 : index
    %c0_26 = arith.constant 0 : index
    %c0_27 = arith.constant 0 : index
    %85 = vector.load %arg7[%c0_24, %c0_25, %c0_26, %c0_27] : memref<1x8x8x8xi32, #tpu.memory_space<vmem>>, vector<1x8x8x8xi32>
    tpu.vector_store %arg7[%c0_24, %c0_25, %c0_26, %c0_27], %84 {strides = array<i32>} : memref<1x8x8x8xi32, #tpu.memory_space<vmem>>, vector<1x8x8x8xi32>,
    return
  }
  func.func @transform_0(%arg0: i32) -> (i32, i32, i32, i32) {
    %c0_i32 = arith.constant 0 : i32
    %c0_i32_0 = arith.constant 0 : i32
    %c0_i32_1 = arith.constant 0 : i32
    %c0_i32_2 = arith.constant 0 : i32
    return %arg0, %c0_i32, %c0_i32_0, %c0_i32_1 : i32, i32, i32, i32
  }
  func.func @transform_1(%arg0: i32) -> (i32, i32) {
    %c0_i32 = arith.constant 0 : i32
    %c0_i32_0 = arith.constant 0 : i32
    %c0_i32_1 = arith.constant 0 : i32
    return %c0_i32, %c0_i32_0 : i32, i32
  }
  func.func @transform_2(%arg0: i32) -> (i32, i32) {
    %c0_i32 = arith.constant 0 : i32
    %c0_i32_0 = arith.constant 0 : i32
    %c0_i32_1 = arith.constant 0 : i32
    return %c0_i32, %c0_i32_0 : i32, i32
  }
  func.func @transform_3(%arg0: i32) -> (i32, i32) {
    %c0_i32 = arith.constant 0 : i32
    %c0_i32_0 = arith.constant 0 : i32
    %c0_i32_1 = arith.constant 0 : i32
    return %c0_i32, %c0_i32_0 : i32, i32
  }
  func.func @transform_4(%arg0: i32) -> (i32, i32) {
    %c0_i32 = arith.constant 0 : i32
    %c0_i32_0 = arith.constant 0 : i32
    %c0_i32_1 = arith.constant 0 : i32
    return %c0_i32, %c0_i32_0 : i32, i32
  }
  func.func @transform_5(%arg0: i32) -> (i32, i32, i32, i32) {
    %c0_i32 = arith.constant 0 : i32
    %c0_i32_0 = arith.constant 0 : i32
    %c0_i32_1 = arith.constant 0 : i32
    %c0_i32_2 = arith.constant 0 : i32
    return %arg0, %c0_i32, %c0_i32_0, %c0_i32_1 : i32, i32, i32, i32
  }
  func.func @transform_6(%arg0: i32) -> (i32, i32, i32, i32) {
    %c0_i32 = arith.constant 0 : i32
    %c0_i32_0 = arith.constant 0 : i32
    %c0_i32_1 = arith.constant 0 : i32
    %c0_i32_2 = arith.constant 0 : i32
    return %arg0, %c0_i32, %c0_i32_0, %c0_i32_1 : i32, i32, i32, i32
  }
}

</mosaic_0001>

<llo_original>
// kernel: downsample_block_forward.1
$region0: #{downsample_block_forward.1}
  #allocation0 [shape = 'u32[]', space=smem, size = 0x4, offset = 0x4, fixed_abs, tag = 'smem constant byte address 0x4 - core index']
  #allocation1 [shape = 'u32[144,128]{1,0:T(1,128)}', space=vmem, size = 0x12000, scoped, tag = 'internal scratch']
  %s0 = inlined_call_operand.vmem [shape: bf16[2,16,16,4], index: 0, kind: input, shape index: {}]
  %s1 = inlined_call_operand.vmem [shape: bf16[36,8], index: 1, kind: input, shape index: {}]
  %s2 = inlined_call_operand.vmem [shape: f32[1,8], index: 2, kind: input, shape index: {}]
  %s3 = inlined_call_operand.vmem [shape: bf16[72,8], index: 3, kind: input, shape index: {}]
  %s4 = inlined_call_operand.vmem [shape: f32[1,8], index: 4, kind: input, shape index: {}]
  %s5 = inlined_call_operand.vmem [shape: f32[2,8,8,8], index: 5, kind: output, shape index: {0}]
  %s6 = inlined_call_operand.vmem [shape: s32[2,8,8,8], index: 6, kind: output, shape index: {1}]
  %7 = xla_tuple %s5, %s6
  %s8 = sld [smem:[#allocation0]]
  $region61: #{downsample_block_forward.1} parent=0
    _
  %s10 = ssub.s32 1, %s8
  %s11 = scalar_select 0, %s10, %s8
  loop: start=0, step=1, limit=4
  $region2: #{downsample_block_forward.1} parent=0 // loop_pre_header
    _
  $region3: #{downsample_block_forward.1} parent=0 // loop_header
    %s13 = sphi 0, %s17
    %p14 = scmp.ge.s32.totalorder %s13, 4
    %s23 = sphi 0, %s25
    %s26 = sphi 0, %s23
    %s27 = sphi 0, %s26
    %s43 = sphi 0, %s27
    %s47 = sphi 0, %s47
    %s49 = sphi 0, %s47
    %s50 = sphi 0, %s49
    %s64 = sphi 0, %s50
    %s68 = sphi 0, %s68
    %s70 = sphi 0, %s68
    %s71 = sphi 0, %s70
    %s85 = sphi 0, %s71
    %s89 = sphi 0, %s89
    %s91 = sphi 0, %s89
    %s92 = sphi 0, %s91
    %s106 = sphi 0, %s92
    %s110 = sphi 0, %s110
    %s112 = sphi 0, %s110
    %s113 = sphi 0, %s112
    %s127 = sphi 0, %s113
    %s133 = sphi 0, %s135
    %s136 = sphi 0, %s133
    %s137 = sphi 0, %s136
    %s153 = sphi 0, %s137
    %s159 = sphi 0, %s161
    %s162 = sphi 0, %s159
    %s163 = sphi 0, %s162
    %s179 = sphi 0, %s163
  $region4: #{downsample_block_forward.1} parent=0 // loop_header_branch
    %16 = sbr.rel (%p14) target = $region8
  $region5: #{downsample_block_forward.1} parent=0 // loop_body
    %s18 = ssub.s32 %s13, 1
    %s19 = ssub.s32 %s13, 2
    %s20 = sadd.s32 %s13, 1
    %s21 = ssub.s32 %s13, %s20
    %p22 = scmp.eq.s32.totalorder %s21, 0
    %s24 = sadd.s32 %s23, 1
    %s25 = scalar_select %p22, %s23, %s24
    %p28 = pneg %p22
    %p29 = scmp.eq.s32.totalorder %s13, 1
    %p30 = por %p28, %p29
    %p31 = scmp.ne.s32.totalorder %s23, %s26
    %p32 = scmp.eq.s32.totalorder %s13, 0
    %p33 = por %p31, %p32
    %p34 = scmp.ne.s32.totalorder %s23, %s26
    %p35 = scmp.eq.s32.totalorder %s18, 1
    %p36 = por %p34, %p35
    %p37 = scmp.ne.s32.totalorder %s26, %s27
    %p38 = scmp.eq.s32.totalorder %s18, 0
    %p39 = por %p37, %p38
    %p40 = scmp.ne.s32.totalorder %s26, %s27
    %p41 = scmp.eq.s32.totalorder %s19, 1
    %p42 = por %p40, %p41
    %p44 = scmp.ne.s32.totalorder %s27, %s43
    %p45 = scmp.eq.s32.totalorder %s19, 0
    %p46 = por %p44, %p45
    %s48 = sadd.s32 %s47, 1
    %p51 = scmp.eq.s32.totalorder %s13, 1
    %p52 = scmp.ne.s32.totalorder %s47, %s49
    %p53 = scmp.eq.s32.totalorder %s13, 0
    %p54 = por %p52, %p53
    %p55 = scmp.ne.s32.totalorder %s47, %s49
    %p56 = scmp.eq.s32.totalorder %s18, 1
    %p57 = por %p55, %p56
    %p58 = scmp.ne.s32.totalorder %s49, %s50
    %p59 = scmp.eq.s32.totalorder %s18, 0
    %p60 = por %p58, %p59
    %p61 = scmp.ne.s32.totalorder %s49, %s50
    %p62 = scmp.eq.s32.totalorder %s19, 1
    %p63 = por %p61, %p62
    %p65 = scmp.ne.s32.totalorder %s50, %s64
    %p66 = scmp.eq.s32.totalorder %s19, 0
    %p67 = por %p65, %p66
    %s69 = sadd.s32 %s68, 1
    %p72 = scmp.eq.s32.totalorder %s13, 1
    %p73 = scmp.ne.s32.totalorder %s68, %s70
    %p74 = scmp.eq.s32.totalorder %s13, 0
    %p75 = por %p73, %p74
    %p76 = scmp.ne.s32.totalorder %s68, %s70
    %p77 = scmp.eq.s32.totalorder %s18, 1
    %p78 = por %p76, %p77
    %p79 = scmp.ne.s32.totalorder %s70, %s71
    %p80 = scmp.eq.s32.totalorder %s18, 0
    %p81 = por %p79, %p80
    %p82 = scmp.ne.s32.totalorder %s70, %s71
    %p83 = scmp.eq.s32.totalorder %s19, 1
    %p84 = por %p82, %p83
    %p86 = scmp.ne.s32.totalorder %s71, %s85
    %p87 = scmp.eq.s32.totalorder %s19, 0
    %p88 = por %p86, %p87
    %s90 = sadd.s32 %s89, 1
    %p93 = scmp.eq.s32.totalorder %s13, 1
    %p94 = scmp.ne.s32.totalorder %s89, %s91
    %p95 = scmp.eq.s32.totalorder %s13, 0
    %p96 = por %p94, %p95
    %p97 = scmp.ne.s32.totalorder %s89, %s91
    %p98 = scmp.eq.s32.totalorder %s18, 1
    %p99 = por %p97, %p98
    %p100 = scmp.ne.s32.totalorder %s91, %s92
    %p101 = scmp.eq.s32.totalorder %s18, 0
    %p102 = por %p100, %p101
    %p103 = scmp.ne.s32.totalorder %s91, %s92
    %p104 = scmp.eq.s32.totalorder %s19, 1
    %p105 = por %p103, %p104
    %p107 = scmp.ne.s32.totalorder %s92, %s106
    %p108 = scmp.eq.s32.totalorder %s19, 0
    %p109 = por %p107, %p108
    %s111 = sadd.s32 %s110, 1
    %p114 = scmp.eq.s32.totalorder %s13, 1
    %p115 = scmp.ne.s32.totalorder %s110, %s112
    %p116 = scmp.eq.s32.totalorder %s13, 0
    %p117 = por %p115, %p116
    %p118 = scmp.ne.s32.totalorder %s110, %s112
    %p119 = scmp.eq.s32.totalorder %s18, 1
    %p120 = por %p118, %p119
    %p121 = scmp.ne.s32.totalorder %s112, %s113
    %p122 = scmp.eq.s32.totalorder %s18, 0
    %p123 = por %p121, %p122
    %p124 = scmp.ne.s32.totalorder %s112, %s113
    %p125 = scmp.eq.s32.totalorder %s19, 1
    %p126 = por %p124, %p125
    %p128 = scmp.ne.s32.totalorder %s113, %s127
    %p129 = scmp.eq.s32.totalorder %s19, 0
    %p130 = por %p128, %p129
    %s131 = ssub.s32 %s13, %s20
    %p132 = scmp.eq.s32.totalorder %s131, 0
    %s134 = sadd.s32 %s133, 1
    %s135 = scalar_select %p132, %s133, %s134
    %p138 = pneg %p132
    %p139 = scmp.eq.s32.totalorder %s13, 1
    %p140 = por %p138, %p139
    %p141 = scmp.ne.s32.totalorder %s133, %s136
    %p142 = scmp.eq.s32.totalorder %s13, 0
    %p143 = por %p141, %p142
    %p144 = scmp.ne.s32.totalorder %s133, %s136
    %p145 = scmp.eq.s32.totalorder %s18, 1
    %p146 = por %p144, %p145
    %p147 = scmp.ne.s32.totalorder %s136, %s137
    %p148 = scmp.eq.s32.totalorder %s18, 0
    %p149 = por %p147, %p148
    %p150 = scmp.ne.s32.totalorder %s136, %s137
    %p151 = scmp.eq.s32.totalorder %s19, 1
    %p152 = por %p150, %p151
    %p154 = scmp.ne.s32.totalorder %s137, %s153
    %p155 = scmp.eq.s32.totalorder %s19, 0
    %p156 = por %p154, %p155
    %s157 = ssub.s32 %s13, %s20
    %p158 = scmp.eq.s32.totalorder %s157, 0
    %s160 = sadd.s32 %s159, 1
    %s161 = scalar_select %p158, %s159, %s160
    %p164 = pneg %p158
    %p165 = scmp.eq.s32.totalorder %s13, 1
    %p166 = por %p164, %p165
    %p167 = scmp.ne.s32.totalorder %s159, %s162
    %p168 = scmp.eq.s32.totalorder %s13, 0
    %p169 = por %p167, %p168
    %p170 = scmp.ne.s32.totalorder %s159, %s162
    %p171 = scmp.eq.s32.totalorder %s18, 1
    %p172 = por %p170, %p171
    %p173 = scmp.ne.s32.totalorder %s162, %s163
    %p174 = scmp.eq.s32.totalorder %s18, 0
    %p175 = por %p173, %p174
    %p176 = scmp.ne.s32.totalorder %s162, %s163
    %p177 = scmp.eq.s32.totalorder %s19, 1
    %p178 = por %p176, %p177
    %p180 = scmp.ne.s32.totalorder %s163, %s179
    %p181 = scmp.eq.s32.totalorder %s19, 0
    %p182 = por %p180, %p181
    %p183 = scmp.le.s32.totalorder 1, %s13
    %p184 = scmp.lt.s32.totalorder %s13, 3
    %p185 = pnand %p183, %p184
    %p186 = pneg %p185
    // Predicated region
    $region9: #{downsample_block_forward.1} parent=5 // pred_check
      _
    $region10: #{downsample_block_forward.1} parent=5 // pred_check_branch
      %188 = sbr.rel (%p185) target = $region12
    $region11: #{downsample_block_forward.1} parent=5 // pred_region
      %s189 = ssub.s32 %s13, 1
      // Predicated region
      $region13: #{downsample_block_forward.1} parent=11 // pred_check
        %p190 = pneg %p60
      $region14: #{downsample_block_forward.1} parent=11 // pred_check_branch
        %192 = sbr.rel (%p190) target = $region16
      $region15: #{downsample_block_forward.1} parent=11 // pred_region
        _
      $region16: #{downsample_block_forward.1} parent=11 // pred_fallthru
        _
      // Predicated region
      $region17: #{downsample_block_forward.1} parent=11 // pred_check
        %p193 = pneg %p81
      $region18: #{downsample_block_forward.1} parent=11 // pred_check_branch
        %195 = sbr.rel (%p193) target = $region20
      $region19: #{downsample_block_forward.1} parent=11 // pred_region
        _
      $region20: #{downsample_block_forward.1} parent=11 // pred_fallthru
        _
      // Predicated region
      $region21: #{downsample_block_forward.1} parent=11 // pred_check
        %p196 = pneg %p102
      $region22: #{downsample_block_forward.1} parent=11 // pred_check_branch
        %198 = sbr.rel (%p196) target = $region24
      $region23: #{downsample_block_forward.1} parent=11 // pred_region
        _
      $region24: #{downsample_block_forward.1} parent=11 // pred_fallthru
        _
      // Predicated region
      $region25: #{downsample_block_forward.1} parent=11 // pred_check
        %p199 = pneg %p123
      $region26: #{downsample_block_forward.1} parent=11 // pred_check_branch
        %201 = sbr.rel (%p199) target = $region28
      $region27: #{downsample_block_forward.1} parent=11 // pred_region
        _
      $region28: #{downsample_block_forward.1} parent=11 // pred_fallthru
        _
    $region12: #{downsample_block_forward.1} parent=5 // pred_fallthru
      _
    %p202 = scmp.lt.s32.totalorder %s13, 2
    // Predicated region
    $region29: #{downsample_block_forward.1} parent=5 // pred_check
      %p203 = pneg %p202
    $region30: #{downsample_block_forward.1} parent=5 // pred_check_branch
      %205 = sbr.rel (%p203) target = $region32
    $region31: #{downsample_block_forward.1} parent=5 // pred_region
      // Predicated region
      $region33: #{downsample_block_forward.1} parent=31 // pred_check
        %p206 = pneg %p33
      $region34: #{downsample_block_forward.1} parent=31 // pred_check_branch
        %208 = sbr.rel (%p206) target = $region36
      $region35: #{downsample_block_forward.1} parent=31 // pred_region
        %p209 = scmp.lt.s32.totalorder %s13, 1
        %s210 = scalar_select %p209, %s13, 1
        %s211 = smul.addr %s210, 32
        %s212 = smul.addr %s211, 4
        %s213 = scalar_lea.vmem %s0, %s212
      $region36: #{downsample_block_forward.1} parent=31 // pred_fallthru
        _
    $region32: #{downsample_block_forward.1} parent=5 // pred_fallthru
      _
    %p214 = scmp.le.s32.totalorder 1, %s13
    %p215 = scmp.lt.s32.totalorder %s13, 3
    %p216 = pnand %p214, %p215
    %p217 = pneg %p216
    // Predicated region
    $region37: #{downsample_block_forward.1} parent=5 // pred_check
      _
    $region38: #{downsample_block_forward.1} parent=5 // pred_check_branch
      %219 = sbr.rel (%p216) target = $region40
    $region39: #{downsample_block_forward.1} parent=5 // pred_region
      %s220 = ssub.s32 %s13, 1
      %p221 = scmp.lt.s32.totalorder %s18, 1
      %s222 = scalar_select %p221, %s18, 1
      %s223 = smul.addr %s222, 32
      %s224 = smul.addr %s223, 4
      %s225 = scalar_lea.vmem %s0, %s224
      %p226 = pneg %p39
      %p227 = pneg %p36
      %p228 = pneg %p60
      %p229 = pneg %p57
      %p230 = pneg %p81
      %p231 = pneg %p78
      %p232 = pneg %p102
      %p233 = pneg %p99
      %p234 = pneg %p123
      %p235 = pneg %p120
      %p236 = pneg %p149
      %p237 = pneg %p146
      %p238 = scmp.lt.s32.totalorder %s18, 1
      %s239 = scalar_select %p238, %s18, 1
      %s240 = smul.addr %s239, 8
      %s241 = smul.addr %s240, 8
      %s242 = scalar_lea.vmem %s5, %s241
      %p243 = pneg %p175
      %p244 = pneg %p172
      %p245 = scmp.lt.s32.totalorder %s18, 1
      %s246 = scalar_select %p245, %s18, 1
      %s247 = smul.addr %s246, 8
      %s248 = smul.addr %s247, 8
      %s249 = scalar_lea.vmem %s6, %s248
      %p250 = scmp.lt.s32.totalorder %s18, 1
      %s251 = scalar_select %p250, %s18, 1
      %s252 = smul.addr %s251, 32
      %s253 = smul.addr %s252, 4
      %s254 = scalar_lea.vmem %s0, %s253
      %p255 = scmp.lt.s32.totalorder %s18, 1
      %s256 = scalar_select %p255, %s18, 1
      %s257 = smul.addr %s256, 8
      %s258 = smul.addr %s257, 8
      %s259 = scalar_lea.vmem %s5, %s258
      %p260 = scmp.lt.s32.totalorder %s18, 1
      %s261 = scalar_select %p260, %s18, 1
      %s262 = smul.addr %s261, 8
      %s263 = smul.addr %s262, 8
      %s264 = scalar_lea.vmem %s6, %s263
      %v266 = vld [vmem:[%s254] sm:$0xf]
      %v267 = vld [vmem:[%s254 + $0x4] sm:$0xf]
      %v268 = vld [vmem:[%s254 + $0x8] sm:$0xf]
      %v269 = vld [vmem:[%s254 + $0xc] sm:$0xf]
      %v270 = vld [vmem:[%s254 + $0x10] sm:$0xf]
      %v271 = vld [vmem:[%s254 + $0x14] sm:$0xf]
      %v272 = vld [vmem:[%s254 + $0x18] sm:$0xf]
      %v273 = vld [vmem:[%s254 + $0x1c] sm:$0xf]
      %v274 = vld [vmem:[%s254 + $0x20] sm:$0xf]
      %v275 = vld [vmem:[%s254 + $0x24] sm:$0xf]
      %v276 = vld [vmem:[%s254 + $0x28] sm:$0xf]
      %v277 = vld [vmem:[%s254 + $0x2c] sm:$0xf]
      %v278 = vld [vmem:[%s254 + $0x30] sm:$0xf]
      %v279 = vld [vmem:[%s254 + $0x34] sm:$0xf]
      %v280 = vld [vmem:[%s254 + $0x38] sm:$0xf]
      %v281 = vld [vmem:[%s254 + $0x3c] sm:$0xf]
      %v282 = vld [vmem:[%s254 + $0x40] sm:$0xf]
      %v283 = vld [vmem:[%s254 + $0x44] sm:$0xf]
      %v284 = vld [vmem:[%s254 + $0x48] sm:$0xf]
      %v285 = vld [vmem:[%s254 + $0x4c] sm:$0xf]
      %v286 = vld [vmem:[%s254 + $0x50] sm:$0xf]
      %v287 = vld [vmem:[%s254 + $0x54] sm:$0xf]
      %v288 = vld [vmem:[%s254 + $0x58] sm:$0xf]
      %v289 = vld [vmem:[%s254 + $0x5c] sm:$0xf]
      %v290 = vld [vmem:[%s254 + $0x60] sm:$0xf]
      %v291 = vld [vmem:[%s254 + $0x64] sm:$0xf]
      %v292 = vld [vmem:[%s254 + $0x68] sm:$0xf]
      %v293 = vld [vmem:[%s254 + $0x6c] sm:$0xf]
      %v294 = vld [vmem:[%s254 + $0x70] sm:$0xf]
      %v295 = vld [vmem:[%s254 + $0x74] sm:$0xf]
      %v296 = vld [vmem:[%s254 + $0x78] sm:$0xf]
      %v297 = vld [vmem:[%s254 + $0x7c] sm:$0xf]
      %v330 = vunpack.c.l.b16 %v266
      %v331 = vunpack.c.l.b16 %v267
      %v332 = vunpack.c.l.b16 %v268
      %v333 = vunpack.c.l.b16 %v269
      %v334 = vunpack.c.l.b16 %v270
      %v335 = vunpack.c.l.b16 %v271
      %v336 = vunpack.c.l.b16 %v272
      %v337 = vunpack.c.l.b16 %v273
      %v338 = vunpack.c.l.b16 %v274
      %v339 = vunpack.c.l.b16 %v275
      %v340 = vunpack.c.l.b16 %v276
      %v341 = vunpack.c.l.b16 %v277
      %v342 = vunpack.c.l.b16 %v278
      %v343 = vunpack.c.l.b16 %v279
      %v344 = vunpack.c.l.b16 %v280
      %v345 = vunpack.c.l.b16 %v281
      %v346 = vunpack.c.l.b16 %v282
      %v347 = vunpack.c.l.b16 %v283
      %v348 = vunpack.c.l.b16 %v284
      %v349 = vunpack.c.l.b16 %v285
      %v350 = vunpack.c.l.b16 %v286
      %v351 = vunpack.c.l.b16 %v287
      %v352 = vunpack.c.l.b16 %v288
      %v353 = vunpack.c.l.b16 %v289
      %v354 = vunpack.c.l.b16 %v290
      %v355 = vunpack.c.l.b16 %v291
      %v356 = vunpack.c.l.b16 %v292
      %v357 = vunpack.c.l.b16 %v293
      %v358 = vunpack.c.l.b16 %v294
      %v359 = vunpack.c.l.b16 %v295
      %v360 = vunpack.c.l.b16 %v296
      %v361 = vunpack.c.l.b16 %v297
      %v362 = vpack.c.b16 %v331, %v330
      %v363 = vpack.c.b16 %v333, %v332
      %v364 = vpack.c.b16 %v335, %v334
      %v365 = vpack.c.b16 %v337, %v336
      %v366 = vpack.c.b16 %v339, %v338
      %v367 = vpack.c.b16 %v341, %v340
      %v368 = vpack.c.b16 %v343, %v342
      %v369 = vpack.c.b16 %v345, %v344
      %v370 = vpack.c.b16 %v347, %v346
      %v371 = vpack.c.b16 %v349, %v348
      %v372 = vpack.c.b16 %v351, %v350
      %v373 = vpack.c.b16 %v353, %v352
      %v374 = vpack.c.b16 %v355, %v354
      %v375 = vpack.c.b16 %v357, %v356
      %v376 = vpack.c.b16 %v359, %v358
      %v377 = vpack.c.b16 %v361, %v360
      %v379 = vshrl.u32 0, 16
      %v381 = vrot.slane %v379, 7
      %v382 = vshll.u32 0, 16
      %v384 = vor.u32 %v381, %v382
      %v386 = vshrl.u32 %v362, 16
      %v388 = vrot.slane %v386, 7
      %v389 = vshll.u32 %v362, 16
      %v391 = vor.u32 %v388, %v389
      %v393 = vshrl.u32 %v363, 16
      %v395 = vrot.slane %v393, 7
      %v396 = vshll.u32 %v363, 16
      %v398 = vor.u32 %v395, %v396
      %v400 = vshrl.u32 %v364, 16
      %v402 = vrot.slane %v400, 7
      %v403 = vshll.u32 %v364, 16
      %v405 = vor.u32 %v402, %v403
      %v407 = vshrl.u32 %v365, 16
      %v409 = vrot.slane %v407, 7
      %v410 = vshll.u32 %v365, 16
      %v412 = vor.u32 %v409, %v410
      %v414 = vshrl.u32 %v366, 16
      %v416 = vrot.slane %v414, 7
      %v417 = vshll.u32 %v366, 16
      %v419 = vor.u32 %v416, %v417
      %v421 = vshrl.u32 %v367, 16
      %v423 = vrot.slane %v421, 7
      %v424 = vshll.u32 %v367, 16
      %v426 = vor.u32 %v423, %v424
      %v428 = vshrl.u32 %v368, 16
      %v430 = vrot.slane %v428, 7
      %v431 = vshll.u32 %v368, 16
      %v433 = vor.u32 %v430, %v431
      %v435 = vshrl.u32 %v369, 16
      %v437 = vrot.slane %v435, 7
      %v438 = vshll.u32 %v369, 16
      %v440 = vor.u32 %v437, %v438
      %v442 = vshrl.u32 %v370, 16
      %v444 = vrot.slane %v442, 7
      %v445 = vshll.u32 %v370, 16
      %v447 = vor.u32 %v444, %v445
      %v449 = vshrl.u32 %v371, 16
      %v451 = vrot.slane %v449, 7
      %v452 = vshll.u32 %v371, 16
      %v454 = vor.u32 %v451, %v452
      %v456 = vshrl.u32 %v372, 16
      %v458 = vrot.slane %v456, 7
      %v459 = vshll.u32 %v372, 16
      %v461 = vor.u32 %v458, %v459
      %v463 = vshrl.u32 %v373, 16
      %v465 = vrot.slane %v463, 7
      %v466 = vshll.u32 %v373, 16
      %v468 = vor.u32 %v465, %v466
      %v470 = vshrl.u32 %v374, 16
      %v472 = vrot.slane %v470, 7
      %v473 = vshll.u32 %v374, 16
      %v475 = vor.u32 %v472, %v473
      %v477 = vshrl.u32 %v375, 16
      %v479 = vrot.slane %v477, 7
      %v480 = vshll.u32 %v375, 16
      %v482 = vor.u32 %v479, %v480
      %v484 = vshrl.u32 %v376, 16
      %v486 = vrot.slane %v484, 7
      %v487 = vshll.u32 %v376, 16
      %v489 = vor.u32 %v486, %v487
      %v491 = vshrl.u32 %v377, 16
      %v493 = vrot.slane %v491, 7
      %v494 = vshll.u32 %v377, 16
      %v496 = vor.u32 %v493, %v494
      %vm531 = vcmask 1040384
      %vm532 = vsmask.f32 256
      %vm533 = vmand %vm531, %vm532
      %v534 = vsel %vm533, 0, %v384
      %v535 = vsel %vm533, 0, %v391
      %v536 = vsel %vm533, 0, %v398
      %v537 = vsel %vm533, 0, %v405
      %v538 = vsel %vm533, 0, %v412
      %v539 = vsel %vm533, 0, %v419
      %v540 = vsel %vm533, 0, %v426
      %v541 = vsel %vm533, 0, %v433
      %v542 = vsel %vm533, 0, %v440
      %v543 = vsel %vm533, 0, %v447
      %v544 = vsel %vm533, 0, %v454
      %v545 = vsel %vm533, 0, %v461
      %v546 = vsel %vm533, 0, %v468
      %v547 = vsel %vm533, 0, %v475
      %v548 = vsel %vm533, 0, %v482
      %v549 = vsel %vm533, 0, %v489
      %v550 = vsel %vm533, 0, %v496
      %v551 = vsel %vm533, %v381, 0
      %v552 = vsel %vm533, %v388, 0
      %v553 = vsel %vm533, %v395, 0
      %v554 = vsel %vm533, %v402, 0
      %v555 = vsel %vm533, %v409, 0
      %v556 = vsel %vm533, %v416, 0
      %v557 = vsel %vm533, %v423, 0
      %v558 = vsel %vm533, %v430, 0
      %v559 = vsel %vm533, %v437, 0
      %v560 = vsel %vm533, %v444, 0
      %v561 = vsel %vm533, %v451, 0
      %v562 = vsel %vm533, %v458, 0
      %v563 = vsel %vm533, %v465, 0
      %v564 = vsel %vm533, %v472, 0
      %v565 = vsel %vm533, %v479, 0
      %v566 = vsel %vm533, %v486, 0
      %v567 = vsel %vm533, %v493, 0
      %vm568 = vsmask.f32 7424
      %v570 = vshrl.u32 %v534, 16
      %v572 = vshll.u32 %v534, 16
      %v574 = vrot.slane %v572, 1
      %v575 = vor.u32 %v570, %v574
      %v577 = vshll.u32 %v551, 16
      %v579 = vrot.slane %v577, 1
      %v580 = vsel %vm568, %v575, %v579
      %v582 = vshrl.u32 %v535, 16
      %v584 = vshll.u32 %v535, 16
      %v586 = vrot.slane %v584, 1
      %v587 = vor.u32 %v582, %v586
      %v589 = vshll.u32 %v552, 16
      %v591 = vrot.slane %v589, 1
      %v592 = vsel %vm568, %v587, %v591
      %v594 = vshrl.u32 %v536, 16
      %v596 = vshll.u32 %v536, 16
      %v598 = vrot.slane %v596, 1
      %v599 = vor.u32 %v594, %v598
      %v601 = vshll.u32 %v553, 16
      %v603 = vrot.slane %v601, 1
      %v604 = vsel %vm568, %v599, %v603
      %v606 = vshrl.u32 %v537, 16
      %v608 = vshll.u32 %v537, 16
      %v610 = vrot.slane %v608, 1
      %v611 = vor.u32 %v606, %v610
      %v613 = vshll.u32 %v554, 16
      %v615 = vrot.slane %v613, 1
      %v616 = vsel %vm568, %v611, %v615
      %v618 = vshrl.u32 %v538, 16
      %v620 = vshll.u32 %v538, 16
      %v622 = vrot.slane %v620, 1
      %v623 = vor.u32 %v618, %v622
      %v625 = vshll.u32 %v555, 16
      %v627 = vrot.slane %v625, 1
      %v628 = vsel %vm568, %v623, %v627
      %v630 = vshrl.u32 %v539, 16
      %v632 = vshll.u32 %v539, 16
      %v634 = vrot.slane %v632, 1
      %v635 = vor.u32 %v630, %v634
      %v637 = vshll.u32 %v556, 16
      %v639 = vrot.slane %v637, 1
      %v640 = vsel %vm568, %v635, %v639
      %v642 = vshrl.u32 %v540, 16
      %v644 = vshll.u32 %v540, 16
      %v646 = vrot.slane %v644, 1
      %v647 = vor.u32 %v642, %v646
      %v649 = vshll.u32 %v557, 16
      %v651 = vrot.slane %v649, 1
      %v652 = vsel %vm568, %v647, %v651
      %v654 = vshrl.u32 %v541, 16
      %v656 = vshll.u32 %v541, 16
      %v658 = vrot.slane %v656, 1
      %v659 = vor.u32 %v654, %v658
      %v661 = vshll.u32 %v558, 16
      %v663 = vrot.slane %v661, 1
      %v664 = vsel %vm568, %v659, %v663
      %v666 = vshrl.u32 %v542, 16
      %v668 = vshll.u32 %v542, 16
      %v670 = vrot.slane %v668, 1
      %v671 = vor.u32 %v666, %v670
      %v673 = vshll.u32 %v559, 16
      %v675 = vrot.slane %v673, 1
      %v676 = vsel %vm568, %v671, %v675
      %v678 = vshrl.u32 %v543, 16
      %v680 = vshll.u32 %v543, 16
      %v682 = vrot.slane %v680, 1
      %v683 = vor.u32 %v678, %v682
      %v685 = vshll.u32 %v560, 16
      %v687 = vrot.slane %v685, 1
      %v688 = vsel %vm568, %v683, %v687
      %v690 = vshrl.u32 %v544, 16
      %v692 = vshll.u32 %v544, 16
      %v694 = vrot.slane %v692, 1
      %v695 = vor.u32 %v690, %v694
      %v697 = vshll.u32 %v561, 16
      %v699 = vrot.slane %v697, 1
      %v700 = vsel %vm568, %v695, %v699
      %v702 = vshrl.u32 %v545, 16
      %v704 = vshll.u32 %v545, 16
      %v706 = vrot.slane %v704, 1
      %v707 = vor.u32 %v702, %v706
      %v709 = vshll.u32 %v562, 16
      %v711 = vrot.slane %v709, 1
      %v712 = vsel %vm568, %v707, %v711
      %v714 = vshrl.u32 %v546, 16
      %v716 = vshll.u32 %v546, 16
      %v718 = vrot.slane %v716, 1
      %v719 = vor.u32 %v714, %v718
      %v721 = vshll.u32 %v563, 16
      %v723 = vrot.slane %v721, 1
      %v724 = vsel %vm568, %v719, %v723
      %v726 = vshrl.u32 %v547, 16
      %v728 = vshll.u32 %v547, 16
      %v730 = vrot.slane %v728, 1
      %v731 = vor.u32 %v726, %v730
      %v733 = vshll.u32 %v564, 16
      %v735 = vrot.slane %v733, 1
      %v736 = vsel %vm568, %v731, %v735
      %v738 = vshrl.u32 %v548, 16
      %v740 = vshll.u32 %v548, 16
      %v742 = vrot.slane %v740, 1
      %v743 = vor.u32 %v738, %v742
      %v745 = vshll.u32 %v565, 16
      %v747 = vrot.slane %v745, 1
      %v748 = vsel %vm568, %v743, %v747
      %v750 = vshrl.u32 %v549, 16
      %v752 = vshll.u32 %v549, 16
      %v754 = vrot.slane %v752, 1
      %v755 = vor.u32 %v750, %v754
      %v757 = vshll.u32 %v566, 16
      %v759 = vrot.slane %v757, 1
      %v760 = vsel %vm568, %v755, %v759
      %761 = vrot.lane.b32.xlu0 %v580, 4
      %v762 = vpop.permute.xlu0 %761
      %763 = vrot.lane.b32.xlu0 %v592, 4
      %v764 = vpop.permute.xlu0 %763
      %765 = vrot.lane.b32.xlu0 %v604, 4
      %v766 = vpop.permute.xlu0 %765
      %767 = vrot.lane.b32.xlu0 %v616, 4
      %v768 = vpop.permute.xlu0 %767
      %769 = vrot.lane.b32.xlu0 %v628, 4
      %v770 = vpop.permute.xlu0 %769
      %771 = vrot.lane.b32.xlu0 %v640, 4
      %v772 = vpop.permute.xlu0 %771
      %773 = vrot.lane.b32.xlu0 %v652, 4
      %v774 = vpop.permute.xlu0 %773
      %775 = vrot.lane.b32.xlu0 %v664, 4
      %v776 = vpop.permute.xlu0 %775
      %777 = vrot.lane.b32.xlu0 %v676, 4
      %v778 = vpop.permute.xlu0 %777
      %779 = vrot.lane.b32.xlu0 %v688, 4
      %v780 = vpop.permute.xlu0 %779
      %781 = vrot.lane.b32.xlu0 %v700, 4
      %v782 = vpop.permute.xlu0 %781
      %783 = vrot.lane.b32.xlu0 %v712, 4
      %v784 = vpop.permute.xlu0 %783
      %785 = vrot.lane.b32.xlu0 %v724, 4
      %v786 = vpop.permute.xlu0 %785
      %787 = vrot.lane.b32.xlu0 %v736, 4
      %v788 = vpop.permute.xlu0 %787
      %789 = vrot.lane.b32.xlu0 %v748, 4
      %v790 = vpop.permute.xlu0 %789
      %791 = vrot.lane.b32.xlu0 %v760, 4
      %v792 = vpop.permute.xlu0 %791
      %vm825 = vcmask 1046528
      %v826 = vrot.slane %v534, 1
      %v827 = vrot.slane %v551, 1
      %v828 = vsel %vm825, %v826, %v827
      %v829 = vrot.slane %v535, 1
      %v830 = vrot.slane %v552, 1
      %v831 = vsel %vm825, %v829, %v830
      %v832 = vrot.slane %v536, 1
      %v833 = vrot.slane %v553, 1
      %v834 = vsel %vm825, %v832, %v833
      %v835 = vrot.slane %v537, 1
      %v836 = vrot.slane %v554, 1
      %v837 = vsel %vm825, %v835, %v836
      %v838 = vrot.slane %v538, 1
      %v839 = vrot.slane %v555, 1
      %v840 = vsel %vm825, %v838, %v839
      %v841 = vrot.slane %v539, 1
      %v842 = vrot.slane %v556, 1
      %v843 = vsel %vm825, %v841, %v842
      %v844 = vrot.slane %v540, 1
      %v845 = vrot.slane %v557, 1
      %v846 = vsel %vm825, %v844, %v845
      %v847 = vrot.slane %v541, 1
      %v848 = vrot.slane %v558, 1
      %v849 = vsel %vm825, %v847, %v848
      %v850 = vrot.slane %v542, 1
      %v851 = vrot.slane %v559, 1
      %v852 = vsel %vm825, %v850, %v851
      %v853 = vrot.slane %v543, 1
      %v854 = vrot.slane %v560, 1
      %v855 = vsel %vm825, %v853, %v854
      %v856 = vrot.slane %v544, 1
      %v857 = vrot.slane %v561, 1
      %v858 = vsel %vm825, %v856, %v857
      %v859 = vrot.slane %v545, 1
      %v860 = vrot.slane %v562, 1
      %v861 = vsel %vm825, %v859, %v860
      %v862 = vrot.slane %v546, 1
      %v863 = vrot.slane %v563, 1
      %v864 = vsel %vm825, %v862, %v863
      %v865 = vrot.slane %v547, 1
      %v866 = vrot.slane %v564, 1
      %v867 = vsel %vm825, %v865, %v866
      %v868 = vrot.slane %v548, 1
      %v869 = vrot.slane %v565, 1
      %v870 = vsel %vm825, %v868, %v869
      %v871 = vrot.slane %v549, 1
      %v872 = vrot.slane %v566, 1
      %v873 = vsel %vm825, %v871, %v872
      %874 = vrot.lane.b32.xlu0 %v828, 8
      %v875 = vpop.permute.xlu0 %874
      %876 = vrot.lane.b32.xlu0 %v831, 8
      %v877 = vpop.permute.xlu0 %876
      %878 = vrot.lane.b32.xlu0 %v834, 8
      %v879 = vpop.permute.xlu0 %878
      %880 = vrot.lane.b32.xlu0 %v837, 8
      %v881 = vpop.permute.xlu0 %880
      %882 = vrot.lane.b32.xlu0 %v840, 8
      %v883 = vpop.permute.xlu0 %882
      %884 = vrot.lane.b32.xlu0 %v843, 8
      %v885 = vpop.permute.xlu0 %884
      %886 = vrot.lane.b32.xlu0 %v846, 8
      %v887 = vpop.permute.xlu0 %886
      %888 = vrot.lane.b32.xlu0 %v849, 8
      %v889 = vpop.permute.xlu0 %888
      %890 = vrot.lane.b32.xlu0 %v852, 8
      %v891 = vpop.permute.xlu0 %890
      %892 = vrot.lane.b32.xlu0 %v855, 8
      %v893 = vpop.permute.xlu0 %892
      %894 = vrot.lane.b32.xlu0 %v858, 8
      %v895 = vpop.permute.xlu0 %894
      %896 = vrot.lane.b32.xlu0 %v861, 8
      %v897 = vpop.permute.xlu0 %896
      %898 = vrot.lane.b32.xlu0 %v864, 8
      %v899 = vpop.permute.xlu0 %898
      %900 = vrot.lane.b32.xlu0 %v867, 8
      %v901 = vpop.permute.xlu0 %900
      %902 = vrot.lane.b32.xlu0 %v870, 8
      %v903 = vpop.permute.xlu0 %902
      %904 = vrot.lane.b32.xlu0 %v873, 8
      %v905 = vpop.permute.xlu0 %904
      %907 = vrot.lane.b32.xlu0 %v535, 12
      %v908 = vpop.permute.xlu0 %907
      %909 = vrot.lane.b32.xlu0 %v536, 12
      %v910 = vpop.permute.xlu0 %909
      %911 = vrot.lane.b32.xlu0 %v537, 12
      %v912 = vpop.permute.xlu0 %911
      %913 = vrot.lane.b32.xlu0 %v538, 12
      %v914 = vpop.permute.xlu0 %913
      %915 = vrot.lane.b32.xlu0 %v539, 12
      %v916 = vpop.permute.xlu0 %915
      %917 = vrot.lane.b32.xlu0 %v540, 12
      %v918 = vpop.permute.xlu0 %917
      %919 = vrot.lane.b32.xlu0 %v541, 12
      %v920 = vpop.permute.xlu0 %919
      %921 = vrot.lane.b32.xlu0 %v542, 12
      %v922 = vpop.permute.xlu0 %921
      %923 = vrot.lane.b32.xlu0 %v543, 12
      %v924 = vpop.permute.xlu0 %923
      %925 = vrot.lane.b32.xlu0 %v544, 12
      %v926 = vpop.permute.xlu0 %925
      %927 = vrot.lane.b32.xlu0 %v545, 12
      %v928 = vpop.permute.xlu0 %927
      %929 = vrot.lane.b32.xlu0 %v546, 12
      %v930 = vpop.permute.xlu0 %929
      %931 = vrot.lane.b32.xlu0 %v547, 12
      %v932 = vpop.permute.xlu0 %931
      %933 = vrot.lane.b32.xlu0 %v548, 12
      %v934 = vpop.permute.xlu0 %933
      %935 = vrot.lane.b32.xlu0 %v549, 12
      %v936 = vpop.permute.xlu0 %935
      %937 = vrot.lane.b32.xlu0 %v550, 12
      %v938 = vpop.permute.xlu0 %937
      %v940 = vshrl.u32 %v550, 16
      %v942 = vshll.u32 %v550, 16
      %v944 = vrot.slane %v942, 1
      %v945 = vor.u32 %v940, %v944
      %v947 = vshll.u32 %v567, 16
      %v949 = vrot.slane %v947, 1
      %v950 = vsel %vm568, %v945, %v949
      %951 = vrot.lane.b32.xlu0 %v592, 16
      %v952 = vpop.permute.xlu0 %951
      %953 = vrot.lane.b32.xlu0 %v604, 16
      %v954 = vpop.permute.xlu0 %953
      %955 = vrot.lane.b32.xlu0 %v616, 16
      %v956 = vpop.permute.xlu0 %955
      %957 = vrot.lane.b32.xlu0 %v628, 16
      %v958 = vpop.permute.xlu0 %957
      %959 = vrot.lane.b32.xlu0 %v640, 16
      %v960 = vpop.permute.xlu0 %959
      %961 = vrot.lane.b32.xlu0 %v652, 16
      %v962 = vpop.permute.xlu0 %961
      %963 = vrot.lane.b32.xlu0 %v664, 16
      %v964 = vpop.permute.xlu0 %963
      %965 = vrot.lane.b32.xlu0 %v676, 16
      %v966 = vpop.permute.xlu0 %965
      %967 = vrot.lane.b32.xlu0 %v688, 16
      %v968 = vpop.permute.xlu0 %967
      %969 = vrot.lane.b32.xlu0 %v700, 16
      %v970 = vpop.permute.xlu0 %969
      %971 = vrot.lane.b32.xlu0 %v712, 16
      %v972 = vpop.permute.xlu0 %971
      %973 = vrot.lane.b32.xlu0 %v724, 16
      %v974 = vpop.permute.xlu0 %973
      %975 = vrot.lane.b32.xlu0 %v736, 16
      %v976 = vpop.permute.xlu0 %975
      %977 = vrot.lane.b32.xlu0 %v748, 16
      %v978 = vpop.permute.xlu0 %977
      %979 = vrot.lane.b32.xlu0 %v760, 16
      %v980 = vpop.permute.xlu0 %979
      %981 = vrot.lane.b32.xlu0 %v950, 16
      %v982 = vpop.permute.xlu0 %981
      %v984 = vrot.slane %v550, 1
      %v985 = vrot.slane %v567, 1
      %v986 = vsel %vm825, %v984, %v985
      %987 = vrot.lane.b32.xlu0 %v831, 20
      %v988 = vpop.permute.xlu0 %987
      %989 = vrot.lane.b32.xlu0 %v834, 20
      %v990 = vpop.permute.xlu0 %989
      %991 = vrot.lane.b32.xlu0 %v837, 20
      %v992 = vpop.permute.xlu0 %991
      %993 = vrot.lane.b32.xlu0 %v840, 20
      %v994 = vpop.permute.xlu0 %993
      %995 = vrot.lane.b32.xlu0 %v843, 20
      %v996 = vpop.permute.xlu0 %995
      %997 = vrot.lane.b32.xlu0 %v846, 20
      %v998 = vpop.permute.xlu0 %997
      %999 = vrot.lane.b32.xlu0 %v849, 20
      %v1000 = vpop.permute.xlu0 %999
      %1001 = vrot.lane.b32.xlu0 %v852, 20
      %v1002 = vpop.permute.xlu0 %1001
      %1003 = vrot.lane.b32.xlu0 %v855, 20
      %v1004 = vpop.permute.xlu0 %1003
      %1005 = vrot.lane.b32.xlu0 %v858, 20
      %v1006 = vpop.permute.xlu0 %1005
      %1007 = vrot.lane.b32.xlu0 %v861, 20
      %v1008 = vpop.permute.xlu0 %1007
      %1009 = vrot.lane.b32.xlu0 %v864, 20
      %v1010 = vpop.permute.xlu0 %1009
      %1011 = vrot.lane.b32.xlu0 %v867, 20
      %v1012 = vpop.permute.xlu0 %1011
      %1013 = vrot.lane.b32.xlu0 %v870, 20
      %v1014 = vpop.permute.xlu0 %1013
      %1015 = vrot.lane.b32.xlu0 %v873, 20
      %v1016 = vpop.permute.xlu0 %1015
      %1017 = vrot.lane.b32.xlu0 %v986, 20
      %v1018 = vpop.permute.xlu0 %1017
      %1019 = vrot.lane.b32.xlu0 %v536, 24
      %v1020 = vpop.permute.xlu0 %1019
      %1021 = vrot.lane.b32.xlu0 %v537, 24
      %v1022 = vpop.permute.xlu0 %1021
      %1023 = vrot.lane.b32.xlu0 %v538, 24
      %v1024 = vpop.permute.xlu0 %1023
      %1025 = vrot.lane.b32.xlu0 %v539, 24
      %v1026 = vpop.permute.xlu0 %1025
      %1027 = vrot.lane.b32.xlu0 %v540, 24
      %v1028 = vpop.permute.xlu0 %1027
      %1029 = vrot.lane.b32.xlu0 %v541, 24
      %v1030 = vpop.permute.xlu0 %1029
      %1031 = vrot.lane.b32.xlu0 %v542, 24
      %v1032 = vpop.permute.xlu0 %1031
      %1033 = vrot.lane.b32.xlu0 %v543, 24
      %v1034 = vpop.permute.xlu0 %1033
      %1035 = vrot.lane.b32.xlu0 %v544, 24
      %v1036 = vpop.permute.xlu0 %1035
      %1037 = vrot.lane.b32.xlu0 %v545, 24
      %v1038 = vpop.permute.xlu0 %1037
      %1039 = vrot.lane.b32.xlu0 %v546, 24
      %v1040 = vpop.permute.xlu0 %1039
      %1041 = vrot.lane.b32.xlu0 %v547, 24
      %v1042 = vpop.permute.xlu0 %1041
      %1043 = vrot.lane.b32.xlu0 %v548, 24
      %v1044 = vpop.permute.xlu0 %1043
      %1045 = vrot.lane.b32.xlu0 %v549, 24
      %v1046 = vpop.permute.xlu0 %1045
      %1047 = vrot.lane.b32.xlu0 %v550, 24
      %v1048 = vpop.permute.xlu0 %1047
      %1049 = vrot.lane.b32.xlu0 %v534, 24
      %v1050 = vpop.permute.xlu0 %1049
      %1051 = vrot.lane.b32.xlu0 %v604, 28
      %v1052 = vpop.permute.xlu0 %1051
      %1053 = vrot.lane.b32.xlu0 %v616, 28
      %v1054 = vpop.permute.xlu0 %1053
      %1055 = vrot.lane.b32.xlu0 %v628, 28
      %v1056 = vpop.permute.xlu0 %1055
      %1057 = vrot.lane.b32.xlu0 %v640, 28
      %v1058 = vpop.permute.xlu0 %1057
      %1059 = vrot.lane.b32.xlu0 %v652, 28
      %v1060 = vpop.permute.xlu0 %1059
      %1061 = vrot.lane.b32.xlu0 %v664, 28
      %v1062 = vpop.permute.xlu0 %1061
      %1063 = vrot.lane.b32.xlu0 %v676, 28
      %v1064 = vpop.permute.xlu0 %1063
      %1065 = vrot.lane.b32.xlu0 %v688, 28
      %v1066 = vpop.permute.xlu0 %1065
      %1067 = vrot.lane.b32.xlu0 %v700, 28
      %v1068 = vpop.permute.xlu0 %1067
      %1069 = vrot.lane.b32.xlu0 %v712, 28
      %v1070 = vpop.permute.xlu0 %1069
      %1071 = vrot.lane.b32.xlu0 %v724, 28
      %v1072 = vpop.permute.xlu0 %1071
      %1073 = vrot.lane.b32.xlu0 %v736, 28
      %v1074 = vpop.permute.xlu0 %1073
      %1075 = vrot.lane.b32.xlu0 %v748, 28
      %v1076 = vpop.permute.xlu0 %1075
      %1077 = vrot.lane.b32.xlu0 %v760, 28
      %v1078 = vpop.permute.xlu0 %1077
      %1079 = vrot.lane.b32.xlu0 %v950, 28
      %v1080 = vpop.permute.xlu0 %1079
      %1081 = vrot.lane.b32.xlu0 %v580, 28
      %v1082 = vpop.permute.xlu0 %1081
      %1083 = vrot.lane.b32.xlu0 %v834, 32
      %v1084 = vpop.permute.xlu0 %1083
      %1085 = vrot.lane.b32.xlu0 %v837, 32
      %v1086 = vpop.permute.xlu0 %1085
      %1087 = vrot.lane.b32.xlu0 %v840, 32
      %v1088 = vpop.permute.xlu0 %1087
      %1089 = vrot.lane.b32.xlu0 %v843, 32
      %v1090 = vpop.permute.xlu0 %1089
      %1091 = vrot.lane.b32.xlu0 %v846, 32
      %v1092 = vpop.permute.xlu0 %1091
      %1093 = vrot.lane.b32.xlu0 %v849, 32
      %v1094 = vpop.permute.xlu0 %1093
      %1095 = vrot.lane.b32.xlu0 %v852, 32
      %v1096 = vpop.permute.xlu0 %1095
      %1097 = vrot.lane.b32.xlu0 %v855, 32
      %v1098 = vpop.permute.xlu0 %1097
      %1099 = vrot.lane.b32.xlu0 %v858, 32
      %v1100 = vpop.permute.xlu0 %1099
      %1101 = vrot.lane.b32.xlu0 %v861, 32
      %v1102 = vpop.permute.xlu0 %1101
      %1103 = vrot.lane.b32.xlu0 %v864, 32
      %v1104 = vpop.permute.xlu0 %1103
      %1105 = vrot.lane.b32.xlu0 %v867, 32
      %v1106 = vpop.permute.xlu0 %1105
      %1107 = vrot.lane.b32.xlu0 %v870, 32
      %v1108 = vpop.permute.xlu0 %1107
      %1109 = vrot.lane.b32.xlu0 %v873, 32
      %v1110 = vpop.permute.xlu0 %1109
      %1111 = vrot.lane.b32.xlu0 %v986, 32
      %v1112 = vpop.permute.xlu0 %1111
      %1113 = vrot.lane.b32.xlu0 %v828, 32
      %v1114 = vpop.permute.xlu0 %1113
      %vm1115 = vcmask 31744
      %v1117 = vsel %vm1115, %v534, %v762
      %v1119 = vsel %vm1115, %v535, %v764
      %v1121 = vsel %vm1115, %v536, %v766
      %v1123 = vsel %vm1115, %v537, %v768
      %v1125 = vsel %vm1115, %v538, %v770
      %v1127 = vsel %vm1115, %v539, %v772
      %v1129 = vsel %vm1115, %v540, %v774
      %v1131 = vsel %vm1115, %v541, %v776
      %v1133 = vsel %vm1115, %v542, %v778
      %v1135 = vsel %vm1115, %v543, %v780
      %v1137 = vsel %vm1115, %v544, %v782
      %v1139 = vsel %vm1115, %v545, %v784
      %v1141 = vsel %vm1115, %v546, %v786
      %v1143 = vsel %vm1115, %v547, %v788
      %v1145 = vsel %vm1115, %v548, %v790
      %v1147 = vsel %vm1115, %v549, %v792
      %vm1148 = vcmask 64512
      %v1150 = vsel %vm1148, %v1117, %v875
      %v1152 = vsel %vm1148, %v1119, %v877
      %v1154 = vsel %vm1148, %v1121, %v879
      %v1156 = vsel %vm1148, %v1123, %v881
      %v1158 = vsel %vm1148, %v1125, %v883
      %v1160 = vsel %vm1148, %v1127, %v885
      %v1162 = vsel %vm1148, %v1129, %v887
      %v1164 = vsel %vm1148, %v1131, %v889
      %v1166 = vsel %vm1148, %v1133, %v891
      %v1168 = vsel %vm1148, %v1135, %v893
      %v1170 = vsel %vm1148, %v1137, %v895
      %v1172 = vsel %vm1148, %v1139, %v897
      %v1174 = vsel %vm1148, %v1141, %v899
      %v1176 = vsel %vm1148, %v1143, %v901
      %v1178 = vsel %vm1148, %v1145, %v903
      %v1180 = vsel %vm1148, %v1147, %v905
      %vm1181 = vcmask 97280
      %v1183 = vsel %vm1181, %v1150, %v908
      %v1185 = vsel %vm1181, %v1152, %v910
      %v1187 = vsel %vm1181, %v1154, %v912
      %v1189 = vsel %vm1181, %v1156, %v914
      %v1191 = vsel %vm1181, %v1158, %v916
      %v1193 = vsel %vm1181, %v1160, %v918
      %v1195 = vsel %vm1181, %v1162, %v920
      %v1197 = vsel %vm1181, %v1164, %v922
      %v1199 = vsel %vm1181, %v1166, %v924
      %v1201 = vsel %vm1181, %v1168, %v926
      %v1203 = vsel %vm1181, %v1170, %v928
      %v1205 = vsel %vm1181, %v1172, %v930
      %v1207 = vsel %vm1181, %v1174, %v932
      %v1209 = vsel %vm1181, %v1176, %v934
      %v1211 = vsel %vm1181, %v1178, %v936
      %v1213 = vsel %vm1181, %v1180, %v938
      %vm1214 = vcmask 130048
      %v1216 = vsel %vm1214, %v1183, %v952
      %v1218 = vsel %vm1214, %v1185, %v954
      %v1220 = vsel %vm1214, %v1187, %v956
      %v1222 = vsel %vm1214, %v1189, %v958
      %v1224 = vsel %vm1214, %v1191, %v960
      %v1226 = vsel %vm1214, %v1193, %v962
      %v1228 = vsel %vm1214, %v1195, %v964
      %v1230 = vsel %vm1214, %v1197, %v966
      %v1232 = vsel %vm1214, %v1199, %v968
      %v1234 = vsel %vm1214, %v1201, %v970
      %v1236 = vsel %vm1214, %v1203, %v972
      %v1238 = vsel %vm1214, %v1205, %v974
      %v1240 = vsel %vm1214, %v1207, %v976
      %v1242 = vsel %vm1214, %v1209, %v978
      %v1244 = vsel %vm1214, %v1211, %v980
      %v1246 = vsel %vm1214, %v1213, %v982
      %vm1247 = vcmask 162816
      %v1249 = vsel %vm1247, %v1216, %v988
      %v1251 = vsel %vm1247, %v1218, %v990
      %v1253 = vsel %vm1247, %v1220, %v992
      %v1255 = vsel %vm1247, %v1222, %v994
      %v1257 = vsel %vm1247, %v1224, %v996
      %v1259 = vsel %vm1247, %v1226, %v998
      %v1261 = vsel %vm1247, %v1228, %v1000
      %v1263 = vsel %vm1247, %v1230, %v1002
      %v1265 = vsel %vm1247, %v1232, %v1004
      %v1267 = vsel %vm1247, %v1234, %v1006
      %v1269 = vsel %vm1247, %v1236, %v1008
      %v1271 = vsel %vm1247, %v1238, %v1010
      %v1273 = vsel %vm1247, %v1240, %v1012
      %v1275 = vsel %vm1247, %v1242, %v1014
      %v1277 = vsel %vm1247, %v1244, %v1016
      %v1279 = vsel %vm1247, %v1246, %v1018
      %vm1280 = vcmask 195584
      %v1282 = vsel %vm1280, %v1249, %v1020
      %v1284 = vsel %vm1280, %v1251, %v1022
      %v1286 = vsel %vm1280, %v1253, %v1024
      %v1288 = vsel %vm1280, %v1255, %v1026
      %v1290 = vsel %vm1280, %v1257, %v1028
      %v1292 = vsel %vm1280, %v1259, %v1030
      %v1294 = vsel %vm1280, %v1261, %v1032
      %v1296 = vsel %vm1280, %v1263, %v1034
      %v1298 = vsel %vm1280, %v1265, %v1036
      %v1300 = vsel %vm1280, %v1267, %v1038
      %v1302 = vsel %vm1280, %v1269, %v1040
      %v1304 = vsel %vm1280, %v1271, %v1042
      %v1306 = vsel %vm1280, %v1273, %v1044
      %v1308 = vsel %vm1280, %v1275, %v1046
      %v1310 = vsel %vm1280, %v1277, %v1048
      %v1312 = vsel %vm1280, %v1279, %v1050
      %vm1313 = vcmask 228352
      %v1315 = vsel %vm1313, %v1282, %v1052
      %v1317 = vsel %vm1313, %v1284, %v1054
      %v1319 = vsel %vm1313, %v1286, %v1056
      %v1321 = vsel %vm1313, %v1288, %v1058
      %v1323 = vsel %vm1313, %v1290, %v1060
      %v1325 = vsel %vm1313, %v1292, %v1062
      %v1327 = vsel %vm1313, %v1294, %v1064
      %v1329 = vsel %vm1313, %v1296, %v1066
      %v1331 = vsel %vm1313, %v1298, %v1068
      %v1333 = vsel %vm1313, %v1300, %v1070
      %v1335 = vsel %vm1313, %v1302, %v1072
      %v1337 = vsel %vm1313, %v1304, %v1074
      %v1339 = vsel %vm1313, %v1306, %v1076
      %v1341 = vsel %vm1313, %v1308, %v1078
      %v1343 = vsel %vm1313, %v1310, %v1080
      %v1345 = vsel %vm1313, %v1312, %v1082
      %vm1346 = vcmask 261120
      %v1348 = vsel %vm1346, %v1315, %v1084
      %v1350 = vsel %vm1346, %v1317, %v1086
      %v1352 = vsel %vm1346, %v1319, %v1088
      %v1354 = vsel %vm1346, %v1321, %v1090
      %v1356 = vsel %vm1346, %v1323, %v1092
      %v1358 = vsel %vm1346, %v1325, %v1094
      %v1360 = vsel %vm1346, %v1327, %v1096
      %v1362 = vsel %vm1346, %v1329, %v1098
      %v1364 = vsel %vm1346, %v1331, %v1100
      %v1366 = vsel %vm1346, %v1333, %v1102
      %v1368 = vsel %vm1346, %v1335, %v1104
      %v1370 = vsel %vm1346, %v1337, %v1106
      %v1372 = vsel %vm1346, %v1339, %v1108
      %v1374 = vsel %vm1346, %v1341, %v1110
      %v1376 = vsel %vm1346, %v1343, %v1112
      %v1378 = vsel %vm1346, %v1345, %v1114
      %v1379 = vld [vmem:[%s1] sm:$0xf]
      %v1380 = vld [vmem:[%s1 + $0x4] sm:$0xf]
      %v1381 = vld [vmem:[%s1 + $0x8] sm:$0xf]
      %v1382 = vld [vmem:[%s1 + $0xc] sm:$0xf]
      %v1383 = vld [vmem:[%s1 + $0x10] sm:$0x3]
      %v1384 = vld [vmem:[%s2] sm:$0x1]
      %v1386 = vlaneseq
      %v1387 = vshrl.u32 %v1386, 7
      %v1388 = vsub.s32 0, %v1387
      %v1389 = vrot.slane %v1384, %v1388
      %v1396 = vunpack.c.l.b16 %v1379
      %v1397 = vunpack.c.l.b16 %v1380
      %v1398 = vunpack.c.l.b16 %v1381
      %v1399 = vunpack.c.l.b16 %v1382
      %v1400 = vunpack.c.l.b16 %v1383
      %v1401 = vpack.c.b16 %v1397, %v1396
      %v1402 = vpack.c.b16 %v1399, %v1398
      %v1403 = vpack.c.b16 %v1400, %v1400
      %vm1406 = vcmask 293888
      %v1407 = vsel %vm1406, %v1348, 0
      %v1409 = vsel %vm1406, %v1350, 0
      %v1411 = vsel %vm1406, %v1352, 0
      %v1413 = vsel %vm1406, %v1354, 0
      %v1415 = vsel %vm1406, %v1356, 0
      %v1417 = vsel %vm1406, %v1358, 0
      %v1419 = vsel %vm1406, %v1360, 0
      %v1421 = vsel %vm1406, %v1362, 0
      %v1423 = vsel %vm1406, %v1364, 0
      %v1425 = vsel %vm1406, %v1366, 0
      %v1427 = vsel %vm1406, %v1368, 0
      %v1429 = vsel %vm1406, %v1370, 0
      %v1431 = vsel %vm1406, %v1372, 0
      %v1433 = vsel %vm1406, %v1374, 0
      %v1435 = vsel %vm1406, %v1376, 0
      %v1437 = vsel %vm1406, %v1378, 0
      %vm1439 = vcmask 1041408
      %v1441 = vsel %vm1439, %v1403, 0
      %1443 = vmatprep.subr.bf16.mxu0 0
      %1444 = vmatpush1.bf16.msra.mxu0 0
      %1445 = vmatprep.subr.bf16.mxu0 0
      %1446 = vmatpush1.bf16.msra.mxu0 0
      %1447 = vmatprep.subr.bf16.mxu0 0
      %1448 = vmatpush1.bf16.msra.mxu0 0
      %1449 = vmatprep.subr.bf16.mxu0 0
      %1450 = vmatpush1.bf16.msra.mxu0 0
      %1451 = vmatprep.subr.bf16.mxu0 0
      %1452 = vmatpush1.bf16.msra.mxu0 0
      %1453 = vmatprep.subr.bf16.mxu0 0
      %1454 = vmatpush1.bf16.msra.mxu0 %v1441
      %1455 = vmatprep.subr.bf16.mxu0 0
      %1456 = vmatpush1.bf16.msra.mxu0 %v1402
      %1457 = vmatprep.subr.bf16.mxu0 0
      %1458 = vmatpush1.bf16.msra.mxu0 %v1401
      %1459 = vmatprep.subr.bf16.mxu0 0
      %1460 = vmatpush2.bf16.msra.mxu0 0
      %1461 = vmatprep.subr.bf16.mxu0 0
      %1462 = vmatpush2.bf16.msra.mxu0 0
      %1463 = vmatprep.subr.bf16.mxu0 0
      %1464 = vmatpush2.bf16.msra.mxu0 0
      %1465 = vmatprep.subr.bf16.mxu0 0
      %1466 = vmatpush2.bf16.msra.mxu0 0
      %1467 = vmatprep.subr.bf16.mxu0 0
      %1468 = vmatpush2.bf16.msra.mxu0 0
      %1469 = vmatprep.subr.bf16.mxu0 0
      %1470 = vmatpush2.bf16.msra.mxu0 0
      %1471 = vmatprep.subr.bf16.mxu0 0
      %1472 = vmatpush2.bf16.msra.mxu0 0
      %1473 = vmatprep.subr.bf16.mxu0 0
      %1474 = vmatpush2.bf16.msra.mxu0 0
      %1475 = vmatprep.mubr.bf16.mxu0 0
      %1476 = vmatmul.mubr.bf16.gmra.mxu0 %v1407
      %v1477 = vpop.f32.mrf.mxu0
      %v1478 = vadd.f32 %v1389, %v1477
      %v1479 = vpop.f32.mrf.mxu0
      %v1480 = vpop.f32.mrf.mxu0
      %v1481 = vadd.f32 %v1389, %v1480
      %v1482 = vpop.f32.mrf.mxu0
      %1483 = vmatprep.mubr.bf16.mxu0 0
      %1484 = vmatmul.mubr.bf16.gmra.mxu0 %v1409
      %v1485 = vpop.f32.mrf.mxu0
      %v1486 = vadd.f32 %v1389, %v1485
      %v1487 = vpop.f32.mrf.mxu0
      %v1488 = vpop.f32.mrf.mxu0
      %v1489 = vadd.f32 %v1389, %v1488
      %v1490 = vpop.f32.mrf.mxu0
      %1491 = vmatprep.mubr.bf16.mxu0 0
      %1492 = vmatmul.mubr.bf16.gmra.mxu0 %v1411
      %v1493 = vpop.f32.mrf.mxu0
      %v1494 = vadd.f32 %v1389, %v1493
      %v1495 = vpop.f32.mrf.mxu0
      %v1496 = vpop.f32.mrf.mxu0
      %v1497 = vadd.f32 %v1389, %v1496
      %v1498 = vpop.f32.mrf.mxu0
      %1499 = vmatprep.mubr.bf16.mxu0 0
      %1500 = vmatmul.mubr.bf16.gmra.mxu0 %v1413
      %v1501 = vpop.f32.mrf.mxu0
      %v1502 = vadd.f32 %v1389, %v1501
      %v1503 = vpop.f32.mrf.mxu0
      %v1504 = vpop.f32.mrf.mxu0
      %v1505 = vadd.f32 %v1389, %v1504
      %v1506 = vpop.f32.mrf.mxu0
      %1507 = vmatprep.mubr.bf16.mxu0 0
      %1508 = vmatmul.mubr.bf16.gmra.mxu0 %v1415
      %v1509 = vpop.f32.mrf.mxu0
      %v1510 = vadd.f32 %v1389, %v1509
      %v1511 = vpop.f32.mrf.mxu0
      %v1512 = vpop.f32.mrf.mxu0
      %v1513 = vadd.f32 %v1389, %v1512
      %v1514 = vpop.f32.mrf.mxu0
      %1515 = vmatprep.mubr.bf16.mxu0 0
      %1516 = vmatmul.mubr.bf16.gmra.mxu0 %v1417
      %v1517 = vpop.f32.mrf.mxu0
      %v1518 = vadd.f32 %v1389, %v1517
      %v1519 = vpop.f32.mrf.mxu0
      %v1520 = vpop.f32.mrf.mxu0
      %v1521 = vadd.f32 %v1389, %v1520
      %v1522 = vpop.f32.mrf.mxu0
      %1523 = vmatprep.mubr.bf16.mxu0 0
      %1524 = vmatmul.mubr.bf16.gmra.mxu0 %v1419
      %v1525 = vpop.f32.mrf.mxu0
      %v1526 = vadd.f32 %v1389, %v1525
      %v1527 = vpop.f32.mrf.mxu0
      %v1528 = vpop.f32.mrf.mxu0
      %v1529 = vadd.f32 %v1389, %v1528
      %v1530 = vpop.f32.mrf.mxu0
      %1531 = vmatprep.mubr.bf16.mxu0 0
      %1532 = vmatmul.mubr.bf16.gmra.mxu0 %v1421
      %v1533 = vpop.f32.mrf.mxu0
      %v1534 = vadd.f32 %v1389, %v1533
      %v1535 = vpop.f32.mrf.mxu0
      %v1536 = vpop.f32.mrf.mxu0
      %v1537 = vadd.f32 %v1389, %v1536
      %v1538 = vpop.f32.mrf.mxu0
      %1539 = vmatprep.mubr.bf16.mxu0 0
      %1540 = vmatmul.mubr.bf16.gmra.mxu0 %v1423
      %v1541 = vpop.f32.mrf.mxu0
      %v1542 = vadd.f32 %v1389, %v1541
      %v1543 = vpop.f32.mrf.mxu0
      %v1544 = vpop.f32.mrf.mxu0
      %v1545 = vadd.f32 %v1389, %v1544
      %v1546 = vpop.f32.mrf.mxu0
      %1547 = vmatprep.mubr.bf16.mxu0 0
      %1548 = vmatmul.mubr.bf16.gmra.mxu0 %v1425
      %v1549 = vpop.f32.mrf.mxu0
      %v1550 = vadd.f32 %v1389, %v1549
      %v1551 = vpop.f32.mrf.mxu0
      %v1552 = vpop.f32.mrf.mxu0
      %v1553 = vadd.f32 %v1389, %v1552
      %v1554 = vpop.f32.mrf.mxu0
      %1555 = vmatprep.mubr.bf16.mxu0 0
      %1556 = vmatmul.mubr.bf16.gmra.mxu0 %v1427
      %v1557 = vpop.f32.mrf.mxu0
      %v1558 = vadd.f32 %v1389, %v1557
      %v1559 = vpop.f32.mrf.mxu0
      %v1560 = vpop.f32.mrf.mxu0
      %v1561 = vadd.f32 %v1389, %v1560
      %v1562 = vpop.f32.mrf.mxu0
      %1563 = vmatprep.mubr.bf16.mxu0 0
      %1564 = vmatmul.mubr.bf16.gmra.mxu0 %v1429
      %v1565 = vpop.f32.mrf.mxu0
      %v1566 = vadd.f32 %v1389, %v1565
      %v1567 = vpop.f32.mrf.mxu0
      %v1568 = vpop.f32.mrf.mxu0
      %v1569 = vadd.f32 %v1389, %v1568
      %v1570 = vpop.f32.mrf.mxu0
      %1571 = vmatprep.mubr.bf16.mxu0 0
      %1572 = vmatmul.mubr.bf16.gmra.mxu0 %v1431
      %v1573 = vpop.f32.mrf.mxu0
      %v1574 = vadd.f32 %v1389, %v1573
      %v1575 = vpop.f32.mrf.mxu0
      %v1576 = vpop.f32.mrf.mxu0
      %v1577 = vadd.f32 %v1389, %v1576
      %v1578 = vpop.f32.mrf.mxu0
      %1579 = vmatprep.mubr.bf16.mxu0 0
      %1580 = vmatmul.mubr.bf16.gmra.mxu0 %v1433
      %v1581 = vpop.f32.mrf.mxu0
      %v1582 = vadd.f32 %v1389, %v1581
      %v1583 = vpop.f32.mrf.mxu0
      %v1584 = vpop.f32.mrf.mxu0
      %v1585 = vadd.f32 %v1389, %v1584
      %v1586 = vpop.f32.mrf.mxu0
      %1587 = vmatprep.mubr.bf16.mxu0 0
      %1588 = vmatmul.mubr.bf16.gmra.mxu0 %v1435
      %v1589 = vpop.f32.mrf.mxu0
      %v1590 = vadd.f32 %v1389, %v1589
      %v1591 = vpop.f32.mrf.mxu0
      %v1592 = vpop.f32.mrf.mxu0
      %v1593 = vadd.f32 %v1389, %v1592
      %v1594 = vpop.f32.mrf.mxu0
      %1595 = vmatprep.mubr.bf16.mxu0 0
      %1596 = vmatmul.mubr.bf16.gmra.mxu0 %v1437
      %v1597 = vpop.f32.mrf.mxu0
      %v1598 = vadd.f32 %v1389, %v1597
      %v1599 = vpop.f32.mrf.mxu0
      %v1600 = vpop.f32.mrf.mxu0
      %v1601 = vadd.f32 %v1389, %v1600
      %v1602 = vpop.f32.mrf.mxu0
      %1603 = vdwg.mxu0
      %v1604 = vmax.f32 %v1478, 0.0
      %v1605 = vmax.f32 %v1481, 0.0
      %v1606 = vmax.f32 %v1486, 0.0
      %v1607 = vmax.f32 %v1489, 0.0
      %v1608 = vmax.f32 %v1494, 0.0
      %v1609 = vmax.f32 %v1497, 0.0
      %v1610 = vmax.f32 %v1502, 0.0
      %v1611 = vmax.f32 %v1505, 0.0
      %v1612 = vmax.f32 %v1510, 0.0
      %v1613 = vmax.f32 %v1513, 0.0
      %v1614 = vmax.f32 %v1518, 0.0
      %v1615 = vmax.f32 %v1521, 0.0
      %v1616 = vmax.f32 %v1526, 0.0
      %v1617 = vmax.f32 %v1529, 0.0
      %v1618 = vmax.f32 %v1534, 0.0
      %v1619 = vmax.f32 %v1537, 0.0
      %v1620 = vmax.f32 %v1542, 0.0
      %v1621 = vmax.f32 %v1545, 0.0
      %v1622 = vmax.f32 %v1550, 0.0
      %v1623 = vmax.f32 %v1553, 0.0
      %v1624 = vmax.f32 %v1558, 0.0
      %v1625 = vmax.f32 %v1561, 0.0
      %v1626 = vmax.f32 %v1566, 0.0
      %v1627 = vmax.f32 %v1569, 0.0
      %v1628 = vmax.f32 %v1574, 0.0
      %v1629 = vmax.f32 %v1577, 0.0
      %v1630 = vmax.f32 %v1582, 0.0
      %v1631 = vmax.f32 %v1585, 0.0
      %v1632 = vmax.f32 %v1590, 0.0
      %v1633 = vmax.f32 %v1593, 0.0
      %v1634 = vmax.f32 %v1598, 0.0
      %v1635 = vmax.f32 %v1601, 0.0
      %v1636 = vpack.c.bf16 %v1605, %v1604
      %v1637 = vpack.c.bf16 %v1607, %v1606
      %v1638 = vpack.c.bf16 %v1609, %v1608
      %v1639 = vpack.c.bf16 %v1611, %v1610
      %v1640 = vpack.c.bf16 %v1613, %v1612
      %v1641 = vpack.c.bf16 %v1615, %v1614
      %v1642 = vpack.c.bf16 %v1617, %v1616
      %v1643 = vpack.c.bf16 %v1619, %v1618
      %v1644 = vpack.c.bf16 %v1621, %v1620
      %v1645 = vpack.c.bf16 %v1623, %v1622
      %v1646 = vpack.c.bf16 %v1625, %v1624
      %v1647 = vpack.c.bf16 %v1627, %v1626
      %v1648 = vpack.c.bf16 %v1629, %v1628
      %v1649 = vpack.c.bf16 %v1631, %v1630
      %v1650 = vpack.c.bf16 %v1633, %v1632
      %v1651 = vpack.c.bf16 %v1635, %v1634
      %v1653 = vshrl.u32 %v1636, 16
      %v1655 = vrot.slane %v1653, 7
      %v1656 = vshll.u32 %v1636, 16
      %v1658 = vor.u32 %v1655, %v1656
      %v1660 = vshrl.u32 %v1637, 16
      %v1662 = vrot.slane %v1660, 7
      %v1663 = vshll.u32 %v1637, 16
      %v1665 = vor.u32 %v1662, %v1663
      %v1667 = vshrl.u32 %v1638, 16
      %v1669 = vrot.slane %v1667, 7
      %v1670 = vshll.u32 %v1638, 16
      %v1672 = vor.u32 %v1669, %v1670
      %v1674 = vshrl.u32 %v1639, 16
      %v1676 = vrot.slane %v1674, 7
      %v1677 = vshll.u32 %v1639, 16
      %v1679 = vor.u32 %v1676, %v1677
      %v1681 = vshrl.u32 %v1640, 16
      %v1683 = vrot.slane %v1681, 7
      %v1684 = vshll.u32 %v1640, 16
      %v1686 = vor.u32 %v1683, %v1684
      %v1688 = vshrl.u32 %v1641, 16
      %v1690 = vrot.slane %v1688, 7
      %v1691 = vshll.u32 %v1641, 16
      %v1693 = vor.u32 %v1690, %v1691
      %v1695 = vshrl.u32 %v1642, 16
      %v1697 = vrot.slane %v1695, 7
      %v1698 = vshll.u32 %v1642, 16
      %v1700 = vor.u32 %v1697, %v1698
      %v1702 = vshrl.u32 %v1643, 16
      %v1704 = vrot.slane %v1702, 7
      %v1705 = vshll.u32 %v1643, 16
      %v1707 = vor.u32 %v1704, %v1705
      %v1709 = vshrl.u32 %v1644, 16
      %v1711 = vrot.slane %v1709, 7
      %v1712 = vshll.u32 %v1644, 16
      %v1714 = vor.u32 %v1711, %v1712
      %v1716 = vshrl.u32 %v1645, 16
      %v1718 = vrot.slane %v1716, 7
      %v1719 = vshll.u32 %v1645, 16
      %v1721 = vor.u32 %v1718, %v1719
      %v1723 = vshrl.u32 %v1646, 16
      %v1725 = vrot.slane %v1723, 7
      %v1726 = vshll.u32 %v1646, 16
      %v1728 = vor.u32 %v1725, %v1726
      %v1730 = vshrl.u32 %v1647, 16
      %v1732 = vrot.slane %v1730, 7
      %v1733 = vshll.u32 %v1647, 16
      %v1735 = vor.u32 %v1732, %v1733
      %v1737 = vshrl.u32 %v1648, 16
      %v1739 = vrot.slane %v1737, 7
      %v1740 = vshll.u32 %v1648, 16
      %v1742 = vor.u32 %v1739, %v1740
      %v1744 = vshrl.u32 %v1649, 16
      %v1746 = vrot.slane %v1744, 7
      %v1747 = vshll.u32 %v1649, 16
      %v1749 = vor.u32 %v1746, %v1747
      %v1751 = vshrl.u32 %v1650, 16
      %v1753 = vrot.slane %v1751, 7
      %v1754 = vshll.u32 %v1650, 16
      %v1756 = vor.u32 %v1753, %v1754
      %v1758 = vshrl.u32 %v1651, 16
      %v1760 = vrot.slane %v1758, 7
      %v1761 = vshll.u32 %v1651, 16
      %v1763 = vor.u32 %v1760, %v1761
      %v1796 = vsel %vm533, 0, %v1658
      %v1797 = vsel %vm533, 0, %v1665
      %v1798 = vsel %vm533, 0, %v1672
      %v1799 = vsel %vm533, 0, %v1679
      %v1800 = vsel %vm533, 0, %v1686
      %v1801 = vsel %vm533, 0, %v1693
      %v1802 = vsel %vm533, 0, %v1700
      %v1803 = vsel %vm533, 0, %v1707
      %v1804 = vsel %vm533, 0, %v1714
      %v1805 = vsel %vm533, 0, %v1721
      %v1806 = vsel %vm533, 0, %v1728
      %v1807 = vsel %vm533, 0, %v1735
      %v1808 = vsel %vm533, 0, %v1742
      %v1809 = vsel %vm533, 0, %v1749
      %v1810 = vsel %vm533, 0, %v1756
      %v1811 = vsel %vm533, 0, %v1763
      %v1812 = vsel %vm533, %v1655, 0
      %v1813 = vsel %vm533, %v1662, 0
      %v1814 = vsel %vm533, %v1669, 0
      %v1815 = vsel %vm533, %v1676, 0
      %v1816 = vsel %vm533, %v1683, 0
      %v1817 = vsel %vm533, %v1690, 0
      %v1818 = vsel %vm533, %v1697, 0
      %v1819 = vsel %vm533, %v1704, 0
      %v1820 = vsel %vm533, %v1711, 0
      %v1821 = vsel %vm533, %v1718, 0
      %v1822 = vsel %vm533, %v1725, 0
      %v1823 = vsel %vm533, %v1732, 0
      %v1824 = vsel %vm533, %v1739, 0
      %v1825 = vsel %vm533, %v1746, 0
      %v1826 = vsel %vm533, %v1753, 0
      %v1827 = vsel %vm533, %v1760, 0
      %v1829 = vshrl.u32 %v1796, 16
      %v1831 = vshll.u32 %v1796, 16
      %v1833 = vrot.slane %v1831, 1
      %v1834 = vor.u32 %v1829, %v1833
      %v1836 = vshll.u32 %v1812, 16
      %v1838 = vrot.slane %v1836, 1
      %v1839 = vsel %vm568, %v1834, %v1838
      %v1841 = vshrl.u32 %v1797, 16
      %v1843 = vshll.u32 %v1797, 16
      %v1845 = vrot.slane %v1843, 1
      %v1846 = vor.u32 %v1841, %v1845
      %v1848 = vshll.u32 %v1813, 16
      %v1850 = vrot.slane %v1848, 1
      %v1851 = vsel %vm568, %v1846, %v1850
      %v1853 = vshrl.u32 %v1798, 16
      %v1855 = vshll.u32 %v1798, 16
      %v1857 = vrot.slane %v1855, 1
      %v1858 = vor.u32 %v1853, %v1857
      %v1860 = vshll.u32 %v1814, 16
      %v1862 = vrot.slane %v1860, 1
      %v1863 = vsel %vm568, %v1858, %v1862
      %v1865 = vshrl.u32 %v1799, 16
      %v1867 = vshll.u32 %v1799, 16
      %v1869 = vrot.slane %v1867, 1
      %v1870 = vor.u32 %v1865, %v1869
      %v1872 = vshll.u32 %v1815, 16
      %v1874 = vrot.slane %v1872, 1
      %v1875 = vsel %vm568, %v1870, %v1874
      %v1877 = vshrl.u32 %v1800, 16
      %v1879 = vshll.u32 %v1800, 16
      %v1881 = vrot.slane %v1879, 1
      %v1882 = vor.u32 %v1877, %v1881
      %v1884 = vshll.u32 %v1816, 16
      %v1886 = vrot.slane %v1884, 1
      %v1887 = vsel %vm568, %v1882, %v1886
      %v1889 = vshrl.u32 %v1801, 16
      %v1891 = vshll.u32 %v1801, 16
      %v1893 = vrot.slane %v1891, 1
      %v1894 = vor.u32 %v1889, %v1893
      %v1896 = vshll.u32 %v1817, 16
      %v1898 = vrot.slane %v1896, 1
      %v1899 = vsel %vm568, %v1894, %v1898
      %v1901 = vshrl.u32 %v1802, 16
      %v1903 = vshll.u32 %v1802, 16
      %v1905 = vrot.slane %v1903, 1
      %v1906 = vor.u32 %v1901, %v1905
      %v1908 = vshll.u32 %v1818, 16
      %v1910 = vrot.slane %v1908, 1
      %v1911 = vsel %vm568, %v1906, %v1910
      %v1913 = vshrl.u32 %v1803, 16
      %v1915 = vshll.u32 %v1803, 16
      %v1917 = vrot.slane %v1915, 1
      %v1918 = vor.u32 %v1913, %v1917
      %v1920 = vshll.u32 %v1819, 16
      %v1922 = vrot.slane %v1920, 1
      %v1923 = vsel %vm568, %v1918, %v1922
      %v1925 = vshrl.u32 %v1804, 16
      %v1927 = vshll.u32 %v1804, 16
      %v1929 = vrot.slane %v1927, 1
      %v1930 = vor.u32 %v1925, %v1929
      %v1932 = vshll.u32 %v1820, 16
      %v1934 = vrot.slane %v1932, 1
      %v1935 = vsel %vm568, %v1930, %v1934
      %v1937 = vshrl.u32 %v1805, 16
      %v1939 = vshll.u32 %v1805, 16
      %v1941 = vrot.slane %v1939, 1
      %v1942 = vor.u32 %v1937, %v1941
      %v1944 = vshll.u32 %v1821, 16
      %v1946 = vrot.slane %v1944, 1
      %v1947 = vsel %vm568, %v1942, %v1946
      %v1949 = vshrl.u32 %v1806, 16
      %v1951 = vshll.u32 %v1806, 16
      %v1953 = vrot.slane %v1951, 1
      %v1954 = vor.u32 %v1949, %v1953
      %v1956 = vshll.u32 %v1822, 16
      %v1958 = vrot.slane %v1956, 1
      %v1959 = vsel %vm568, %v1954, %v1958
      %v1961 = vshrl.u32 %v1807, 16
      %v1963 = vshll.u32 %v1807, 16
      %v1965 = vrot.slane %v1963, 1
      %v1966 = vor.u32 %v1961, %v1965
      %v1968 = vshll.u32 %v1823, 16
      %v1970 = vrot.slane %v1968, 1
      %v1971 = vsel %vm568, %v1966, %v1970
      %v1973 = vshrl.u32 %v1808, 16
      %v1975 = vshll.u32 %v1808, 16
      %v1977 = vrot.slane %v1975, 1
      %v1978 = vor.u32 %v1973, %v1977
      %v1980 = vshll.u32 %v1824, 16
      %v1982 = vrot.slane %v1980, 1
      %v1983 = vsel %vm568, %v1978, %v1982
      %v1985 = vshrl.u32 %v1809, 16
      %v1987 = vshll.u32 %v1809, 16
      %v1989 = vrot.slane %v1987, 1
      %v1990 = vor.u32 %v1985, %v1989
      %v1992 = vshll.u32 %v1825, 16
      %v1994 = vrot.slane %v1992, 1
      %v1995 = vsel %vm568, %v1990, %v1994
      %v1997 = vshrl.u32 %v1810, 16
      %v1999 = vshll.u32 %v1810, 16
      %v2001 = vrot.slane %v1999, 1
      %v2002 = vor.u32 %v1997, %v2001
      %v2004 = vshll.u32 %v1826, 16
      %v2006 = vrot.slane %v2004, 1
      %v2007 = vsel %vm568, %v2002, %v2006
      %2008 = vrot.lane.b32.xlu0 %v580, 8
      %v2009 = vpop.permute.xlu0 %2008
      %2010 = vrot.lane.b32.xlu0 %v1839, 8
      %v2011 = vpop.permute.xlu0 %2010
      %2012 = vrot.lane.b32.xlu0 %v1851, 8
      %v2013 = vpop.permute.xlu0 %2012
      %2014 = vrot.lane.b32.xlu0 %v1863, 8
      %v2015 = vpop.permute.xlu0 %2014
      %2016 = vrot.lane.b32.xlu0 %v1875, 8
      %v2017 = vpop.permute.xlu0 %2016
      %2018 = vrot.lane.b32.xlu0 %v1887, 8
      %v2019 = vpop.permute.xlu0 %2018
      %2020 = vrot.lane.b32.xlu0 %v1899, 8
      %v2021 = vpop.permute.xlu0 %2020
      %2022 = vrot.lane.b32.xlu0 %v1911, 8
      %v2023 = vpop.permute.xlu0 %2022
      %2024 = vrot.lane.b32.xlu0 %v1923, 8
      %v2025 = vpop.permute.xlu0 %2024
      %2026 = vrot.lane.b32.xlu0 %v1935, 8
      %v2027 = vpop.permute.xlu0 %2026
      %2028 = vrot.lane.b32.xlu0 %v1947, 8
      %v2029 = vpop.permute.xlu0 %2028
      %2030 = vrot.lane.b32.xlu0 %v1959, 8
      %v2031 = vpop.permute.xlu0 %2030
      %2032 = vrot.lane.b32.xlu0 %v1971, 8
      %v2033 = vpop.permute.xlu0 %2032
      %2034 = vrot.lane.b32.xlu0 %v1983, 8
      %v2035 = vpop.permute.xlu0 %2034
      %2036 = vrot.lane.b32.xlu0 %v1995, 8
      %v2037 = vpop.permute.xlu0 %2036
      %2038 = vrot.lane.b32.xlu0 %v2007, 8
      %v2039 = vpop.permute.xlu0 %2038
      %v2070 = vrot.slane %v1796, 1
      %v2071 = vrot.slane %v1812, 1
      %v2072 = vsel %vm825, %v2070, %v2071
      %v2073 = vrot.slane %v1797, 1
      %v2074 = vrot.slane %v1813, 1
      %v2075 = vsel %vm825, %v2073, %v2074
      %v2076 = vrot.slane %v1798, 1
      %v2077 = vrot.slane %v1814, 1
      %v2078 = vsel %vm825, %v2076, %v2077
      %v2079 = vrot.slane %v1799, 1
      %v2080 = vrot.slane %v1815, 1
      %v2081 = vsel %vm825, %v2079, %v2080
      %v2082 = vrot.slane %v1800, 1
      %v2083 = vrot.slane %v1816, 1
      %v2084 = vsel %vm825, %v2082, %v2083
      %v2085 = vrot.slane %v1801, 1
      %v2086 = vrot.slane %v1817, 1
      %v2087 = vsel %vm825, %v2085, %v2086
      %v2088 = vrot.slane %v1802, 1
      %v2089 = vrot.slane %v1818, 1
      %v2090 = vsel %vm825, %v2088, %v2089
      %v2091 = vrot.slane %v1803, 1
      %v2092 = vrot.slane %v1819, 1
      %v2093 = vsel %vm825, %v2091, %v2092
      %v2094 = vrot.slane %v1804, 1
      %v2095 = vrot.slane %v1820, 1
      %v2096 = vsel %vm825, %v2094, %v2095
      %v2097 = vrot.slane %v1805, 1
      %v2098 = vrot.slane %v1821, 1
      %v2099 = vsel %vm825, %v2097, %v2098
      %v2100 = vrot.slane %v1806, 1
      %v2101 = vrot.slane %v1822, 1
      %v2102 = vsel %vm825, %v2100, %v2101
      %v2103 = vrot.slane %v1807, 1
      %v2104 = vrot.slane %v1823, 1
      %v2105 = vsel %vm825, %v2103, %v2104
      %v2106 = vrot.slane %v1808, 1
      %v2107 = vrot.slane %v1824, 1
      %v2108 = vsel %vm825, %v2106, %v2107
      %v2109 = vrot.slane %v1809, 1
      %v2110 = vrot.slane %v1825, 1
      %v2111 = vsel %vm825, %v2109, %v2110
      %v2112 = vrot.slane %v1810, 1
      %v2113 = vrot.slane %v1826, 1
      %v2114 = vsel %vm825, %v2112, %v2113
      %2115 = vrot.lane.b32.xlu0 %v828, 16
      %v2116 = vpop.permute.xlu0 %2115
      %2117 = vrot.lane.b32.xlu0 %v2072, 16
      %v2118 = vpop.permute.xlu0 %2117
      %2119 = vrot.lane.b32.xlu0 %v2075, 16
      %v2120 = vpop.permute.xlu0 %2119
      %2121 = vrot.lane.b32.xlu0 %v2078, 16
      %v2122 = vpop.permute.xlu0 %2121
      %2123 = vrot.lane.b32.xlu0 %v2081, 16
      %v2124 = vpop.permute.xlu0 %2123
      %2125 = vrot.lane.b32.xlu0 %v2084, 16
      %v2126 = vpop.permute.xlu0 %2125
      %2127 = vrot.lane.b32.xlu0 %v2087, 16
      %v2128 = vpop.permute.xlu0 %2127
      %2129 = vrot.lane.b32.xlu0 %v2090, 16
      %v2130 = vpop.permute.xlu0 %2129
      %2131 = vrot.lane.b32.xlu0 %v2093, 16
      %v2132 = vpop.permute.xlu0 %2131
      %2133 = vrot.lane.b32.xlu0 %v2096, 16
      %v2134 = vpop.permute.xlu0 %2133
      %2135 = vrot.lane.b32.xlu0 %v2099, 16
      %v2136 = vpop.permute.xlu0 %2135
      %2137 = vrot.lane.b32.xlu0 %v2102, 16
      %v2138 = vpop.permute.xlu0 %2137
      %2139 = vrot.lane.b32.xlu0 %v2105, 16
      %v2140 = vpop.permute.xlu0 %2139
      %2141 = vrot.lane.b32.xlu0 %v2108, 16
      %v2142 = vpop.permute.xlu0 %2141
      %2143 = vrot.lane.b32.xlu0 %v2111, 16
      %v2144 = vpop.permute.xlu0 %2143
      %2145 = vrot.lane.b32.xlu0 %v2114, 16
      %v2146 = vpop.permute.xlu0 %2145
      %2148 = vrot.lane.b32.xlu0 %v1796, 24
      %v2149 = vpop.permute.xlu0 %2148
      %2150 = vrot.lane.b32.xlu0 %v1797, 24
      %v2151 = vpop.permute.xlu0 %2150
      %2152 = vrot.lane.b32.xlu0 %v1798, 24
      %v2153 = vpop.permute.xlu0 %2152
      %2154 = vrot.lane.b32.xlu0 %v1799, 24
      %v2155 = vpop.permute.xlu0 %2154
      %2156 = vrot.lane.b32.xlu0 %v1800, 24
      %v2157 = vpop.permute.xlu0 %2156
      %2158 = vrot.lane.b32.xlu0 %v1801, 24
      %v2159 = vpop.permute.xlu0 %2158
      %2160 = vrot.lane.b32.xlu0 %v1802, 24
      %v2161 = vpop.permute.xlu0 %2160
      %2162 = vrot.lane.b32.xlu0 %v1803, 24
      %v2163 = vpop.permute.xlu0 %2162
      %2164 = vrot.lane.b32.xlu0 %v1804, 24
      %v2165 = vpop.permute.xlu0 %2164
      %2166 = vrot.lane.b32.xlu0 %v1805, 24
      %v2167 = vpop.permute.xlu0 %2166
      %2168 = vrot.lane.b32.xlu0 %v1806, 24
      %v2169 = vpop.permute.xlu0 %2168
      %2170 = vrot.lane.b32.xlu0 %v1807, 24
      %v2171 = vpop.permute.xlu0 %2170
      %2172 = vrot.lane.b32.xlu0 %v1808, 24
      %v2173 = vpop.permute.xlu0 %2172
      %2174 = vrot.lane.b32.xlu0 %v1809, 24
      %v2175 = vpop.permute.xlu0 %2174
      %2176 = vrot.lane.b32.xlu0 %v1810, 24
      %v2177 = vpop.permute.xlu0 %2176
      %2178 = vrot.lane.b32.xlu0 %v1811, 24
      %v2179 = vpop.permute.xlu0 %2178
      %v2181 = vshrl.u32 %v1811, 16
      %v2183 = vshll.u32 %v1811, 16
      %v2185 = vrot.slane %v2183, 1
      %v2186 = vor.u32 %v2181, %v2185
      %v2188 = vshll.u32 %v1827, 16
      %v2190 = vrot.slane %v2188, 1
      %v2191 = vsel %vm568, %v2186, %v2190
      %2192 = vrot.lane.b32.xlu0 %v1839, 32
      %v2193 = vpop.permute.xlu0 %2192
      %2194 = vrot.lane.b32.xlu0 %v1851, 32
      %v2195 = vpop.permute.xlu0 %2194
      %2196 = vrot.lane.b32.xlu0 %v1863, 32
      %v2197 = vpop.permute.xlu0 %2196
      %2198 = vrot.lane.b32.xlu0 %v1875, 32
      %v2199 = vpop.permute.xlu0 %2198
      %2200 = vrot.lane.b32.xlu0 %v1887, 32
      %v2201 = vpop.permute.xlu0 %2200
      %2202 = vrot.lane.b32.xlu0 %v1899, 32
      %v2203 = vpop.permute.xlu0 %2202
      %2204 = vrot.lane.b32.xlu0 %v1911, 32
      %v2205 = vpop.permute.xlu0 %2204
      %2206 = vrot.lane.b32.xlu0 %v1923, 32
      %v2207 = vpop.permute.xlu0 %2206
      %2208 = vrot.lane.b32.xlu0 %v1935, 32
      %v2209 = vpop.permute.xlu0 %2208
      %2210 = vrot.lane.b32.xlu0 %v1947, 32
      %v2211 = vpop.permute.xlu0 %2210
      %2212 = vrot.lane.b32.xlu0 %v1959, 32
      %v2213 = vpop.permute.xlu0 %2212
      %2214 = vrot.lane.b32.xlu0 %v1971, 32
      %v2215 = vpop.permute.xlu0 %2214
      %2216 = vrot.lane.b32.xlu0 %v1983, 32
      %v2217 = vpop.permute.xlu0 %2216
      %2218 = vrot.lane.b32.xlu0 %v1995, 32
      %v2219 = vpop.permute.xlu0 %2218
      %2220 = vrot.lane.b32.xlu0 %v2007, 32
      %v2221 = vpop.permute.xlu0 %2220
      %2222 = vrot.lane.b32.xlu0 %v2191, 32
      %v2223 = vpop.permute.xlu0 %2222
      %v2225 = vrot.slane %v1811, 1
      %v2226 = vrot.slane %v1827, 1
      %v2227 = vsel %vm825, %v2225, %v2226
      %2228 = vrot.lane.b32.xlu0 %v2072, 40
      %v2229 = vpop.permute.xlu0 %2228
      %2230 = vrot.lane.b32.xlu0 %v2075, 40
      %v2231 = vpop.permute.xlu0 %2230
      %2232 = vrot.lane.b32.xlu0 %v2078, 40
      %v2233 = vpop.permute.xlu0 %2232
      %2234 = vrot.lane.b32.xlu0 %v2081, 40
      %v2235 = vpop.permute.xlu0 %2234
      %2236 = vrot.lane.b32.xlu0 %v2084, 40
      %v2237 = vpop.permute.xlu0 %2236
      %2238 = vrot.lane.b32.xlu0 %v2087, 40
      %v2239 = vpop.permute.xlu0 %2238
      %2240 = vrot.lane.b32.xlu0 %v2090, 40
      %v2241 = vpop.permute.xlu0 %2240
      %2242 = vrot.lane.b32.xlu0 %v2093, 40
      %v2243 = vpop.permute.xlu0 %2242
      %2244 = vrot.lane.b32.xlu0 %v2096, 40
      %v2245 = vpop.permute.xlu0 %2244
      %2246 = vrot.lane.b32.xlu0 %v2099, 40
      %v2247 = vpop.permute.xlu0 %2246
      %2248 = vrot.lane.b32.xlu0 %v2102, 40
      %v2249 = vpop.permute.xlu0 %2248
      %2250 = vrot.lane.b32.xlu0 %v2105, 40
      %v2251 = vpop.permute.xlu0 %2250
      %2252 = vrot.lane.b32.xlu0 %v2108, 40
      %v2253 = vpop.permute.xlu0 %2252
      %2254 = vrot.lane.b32.xlu0 %v2111, 40
      %v2255 = vpop.permute.xlu0 %2254
      %2256 = vrot.lane.b32.xlu0 %v2114, 40
      %v2257 = vpop.permute.xlu0 %2256
      %2258 = vrot.lane.b32.xlu0 %v2227, 40
      %v2259 = vpop.permute.xlu0 %2258
      %2260 = vrot.lane.b32.xlu0 %v1797, 48
      %v2261 = vpop.permute.xlu0 %2260
      %2262 = vrot.lane.b32.xlu0 %v1798, 48
      %v2263 = vpop.permute.xlu0 %2262
      %2264 = vrot.lane.b32.xlu0 %v1799, 48
      %v2265 = vpop.permute.xlu0 %2264
      %2266 = vrot.lane.b32.xlu0 %v1800, 48
      %v2267 = vpop.permute.xlu0 %2266
      %2268 = vrot.lane.b32.xlu0 %v1801, 48
      %v2269 = vpop.permute.xlu0 %2268
      %2270 = vrot.lane.b32.xlu0 %v1802, 48
      %v2271 = vpop.permute.xlu0 %2270
      %2272 = vrot.lane.b32.xlu0 %v1803, 48
      %v2273 = vpop.permute.xlu0 %2272
      %2274 = vrot.lane.b32.xlu0 %v1804, 48
      %v2275 = vpop.permute.xlu0 %2274
      %2276 = vrot.lane.b32.xlu0 %v1805, 48
      %v2277 = vpop.permute.xlu0 %2276
      %2278 = vrot.lane.b32.xlu0 %v1806, 48
      %v2279 = vpop.permute.xlu0 %2278
      %2280 = vrot.lane.b32.xlu0 %v1807, 48
      %v2281 = vpop.permute.xlu0 %2280
      %2282 = vrot.lane.b32.xlu0 %v1808, 48
      %v2283 = vpop.permute.xlu0 %2282
      %2284 = vrot.lane.b32.xlu0 %v1809, 48
      %v2285 = vpop.permute.xlu0 %2284
      %2286 = vrot.lane.b32.xlu0 %v1810, 48
      %v2287 = vpop.permute.xlu0 %2286
      %2288 = vrot.lane.b32.xlu0 %v1811, 48
      %v2289 = vpop.permute.xlu0 %2288
      %2290 = vrot.lane.b32.xlu0 %v534, 48
      %v2291 = vpop.permute.xlu0 %2290
      %2292 = vrot.lane.b32.xlu0 %v1851, 56
      %v2293 = vpop.permute.xlu0 %2292
      %2294 = vrot.lane.b32.xlu0 %v1863, 56
      %v2295 = vpop.permute.xlu0 %2294
      %2296 = vrot.lane.b32.xlu0 %v1875, 56
      %v2297 = vpop.permute.xlu0 %2296
      %2298 = vrot.lane.b32.xlu0 %v1887, 56
      %v2299 = vpop.permute.xlu0 %2298
      %2300 = vrot.lane.b32.xlu0 %v1899, 56
      %v2301 = vpop.permute.xlu0 %2300
      %2302 = vrot.lane.b32.xlu0 %v1911, 56
      %v2303 = vpop.permute.xlu0 %2302
      %2304 = vrot.lane.b32.xlu0 %v1923, 56
      %v2305 = vpop.permute.xlu0 %2304
      %2306 = vrot.lane.b32.xlu0 %v1935, 56
      %v2307 = vpop.permute.xlu0 %2306
      %2308 = vrot.lane.b32.xlu0 %v1947, 56
      %v2309 = vpop.permute.xlu0 %2308
      %2310 = vrot.lane.b32.xlu0 %v1959, 56
      %v2311 = vpop.permute.xlu0 %2310
      %2312 = vrot.lane.b32.xlu0 %v1971, 56
      %v2313 = vpop.permute.xlu0 %2312
      %2314 = vrot.lane.b32.xlu0 %v1983, 56
      %v2315 = vpop.permute.xlu0 %2314
      %2316 = vrot.lane.b32.xlu0 %v1995, 56
      %v2317 = vpop.permute.xlu0 %2316
      %2318 = vrot.lane.b32.xlu0 %v2007, 56
      %v2319 = vpop.permute.xlu0 %2318
      %2320 = vrot.lane.b32.xlu0 %v2191, 56
      %v2321 = vpop.permute.xlu0 %2320
      %2322 = vrot.lane.b32.xlu0 %v580, 56
      %v2323 = vpop.permute.xlu0 %2322
      %2324 = vrot.lane.b32.xlu0 %v2075, 64
      %v2325 = vpop.permute.xlu0 %2324
      %2326 = vrot.lane.b32.xlu0 %v2078, 64
      %v2327 = vpop.permute.xlu0 %2326
      %2328 = vrot.lane.b32.xlu0 %v2081, 64
      %v2329 = vpop.permute.xlu0 %2328
      %2330 = vrot.lane.b32.xlu0 %v2084, 64
      %v2331 = vpop.permute.xlu0 %2330
      %2332 = vrot.lane.b32.xlu0 %v2087, 64
      %v2333 = vpop.permute.xlu0 %2332
      %2334 = vrot.lane.b32.xlu0 %v2090, 64
      %v2335 = vpop.permute.xlu0 %2334
      %2336 = vrot.lane.b32.xlu0 %v2093, 64
      %v2337 = vpop.permute.xlu0 %2336
      %2338 = vrot.lane.b32.xlu0 %v2096, 64
      %v2339 = vpop.permute.xlu0 %2338
      %2340 = vrot.lane.b32.xlu0 %v2099, 64
      %v2341 = vpop.permute.xlu0 %2340
      %2342 = vrot.lane.b32.xlu0 %v2102, 64
      %v2343 = vpop.permute.xlu0 %2342
      %2344 = vrot.lane.b32.xlu0 %v2105, 64
      %v2345 = vpop.permute.xlu0 %2344
      %2346 = vrot.lane.b32.xlu0 %v2108, 64
      %v2347 = vpop.permute.xlu0 %2346
      %2348 = vrot.lane.b32.xlu0 %v2111, 64
      %v2349 = vpop.permute.xlu0 %2348
      %2350 = vrot.lane.b32.xlu0 %v2114, 64
      %v2351 = vpop.permute.xlu0 %2350
      %2352 = vrot.lane.b32.xlu0 %v2227, 64
      %v2353 = vpop.permute.xlu0 %2352
      %2354 = vrot.lane.b32.xlu0 %v828, 64
      %v2355 = vpop.permute.xlu0 %2354
      %v2357 = vsel %vm1148, %v534, %v2009
      %v2359 = vsel %vm1148, %v1796, %v2011
      %v2361 = vsel %vm1148, %v1797, %v2013
      %v2363 = vsel %vm1148, %v1798, %v2015
      %v2365 = vsel %vm1148, %v1799, %v2017
      %v2367 = vsel %vm1148, %v1800, %v2019
      %v2369 = vsel %vm1148, %v1801, %v2021
      %v2371 = vsel %vm1148, %v1802, %v2023
      %v2373 = vsel %vm1148, %v1803, %v2025
      %v2375 = vsel %vm1148, %v1804, %v2027
      %v2377 = vsel %vm1148, %v1805, %v2029
      %v2379 = vsel %vm1148, %v1806, %v2031
      %v2381 = vsel %vm1148, %v1807, %v2033
      %v2383 = vsel %vm1148, %v1808, %v2035
      %v2385 = vsel %vm1148, %v1809, %v2037
      %v2387 = vsel %vm1148, %v1810, %v2039
      %v2389 = vsel %vm1214, %v2357, %v2116
      %v2391 = vsel %vm1214, %v2359, %v2118
      %v2393 = vsel %vm1214, %v2361, %v2120
      %v2395 = vsel %vm1214, %v2363, %v2122
      %v2397 = vsel %vm1214, %v2365, %v2124
      %v2399 = vsel %vm1214, %v2367, %v2126
      %v2401 = vsel %vm1214, %v2369, %v2128
      %v2403 = vsel %vm1214, %v2371, %v2130
      %v2405 = vsel %vm1214, %v2373, %v2132
      %v2407 = vsel %vm1214, %v2375, %v2134
      %v2409 = vsel %vm1214, %v2377, %v2136
      %v2411 = vsel %vm1214, %v2379, %v2138
      %v2413 = vsel %vm1214, %v2381, %v2140
      %v2415 = vsel %vm1214, %v2383, %v2142
      %v2417 = vsel %vm1214, %v2385, %v2144
      %v2419 = vsel %vm1214, %v2387, %v2146
      %v2421 = vsel %vm1280, %v2389, %v2149
      %v2423 = vsel %vm1280, %v2391, %v2151
      %v2425 = vsel %vm1280, %v2393, %v2153
      %v2427 = vsel %vm1280, %v2395, %v2155
      %v2429 = vsel %vm1280, %v2397, %v2157
      %v2431 = vsel %vm1280, %v2399, %v2159
      %v2433 = vsel %vm1280, %v2401, %v2161
      %v2435 = vsel %vm1280, %v2403, %v2163
      %v2437 = vsel %vm1280, %v2405, %v2165
      %v2439 = vsel %vm1280, %v2407, %v2167
      %v2441 = vsel %vm1280, %v2409, %v2169
      %v2443 = vsel %vm1280, %v2411, %v2171
      %v2445 = vsel %vm1280, %v2413, %v2173
      %v2447 = vsel %vm1280, %v2415, %v2175
      %v2449 = vsel %vm1280, %v2417, %v2177
      %v2451 = vsel %vm1280, %v2419, %v2179
      %v2453 = vsel %vm1346, %v2421, %v2193
      %v2455 = vsel %vm1346, %v2423, %v2195
      %v2457 = vsel %vm1346, %v2425, %v2197
      %v2459 = vsel %vm1346, %v2427, %v2199
      %v2461 = vsel %vm1346, %v2429, %v2201
      %v2463 = vsel %vm1346, %v2431, %v2203
      %v2465 = vsel %vm1346, %v2433, %v2205
      %v2467 = vsel %vm1346, %v2435, %v2207
      %v2469 = vsel %vm1346, %v2437, %v2209
      %v2471 = vsel %vm1346, %v2439, %v2211
      %v2473 = vsel %vm1346, %v2441, %v2213
      %v2475 = vsel %vm1346, %v2443, %v2215
      %v2477 = vsel %vm1346, %v2445, %v2217
      %v2479 = vsel %vm1346, %v2447, %v2219
      %v2481 = vsel %vm1346, %v2449, %v2221
      %v2483 = vsel %vm1346, %v2451, %v2223
      %vm2484 = vcmask 326656
      %v2486 = vsel %vm2484, %v2453, %v2229
      %v2488 = vsel %vm2484, %v2455, %v2231
      %v2490 = vsel %vm2484, %v2457, %v2233
      %v2492 = vsel %vm2484, %v2459, %v2235
      %v2494 = vsel %vm2484, %v2461, %v2237
      %v2496 = vsel %vm2484, %v2463, %v2239
      %v2498 = vsel %vm2484, %v2465, %v2241
      %v2500 = vsel %vm2484, %v2467, %v2243
      %v2502 = vsel %vm2484, %v2469, %v2245
      %v2504 = vsel %vm2484, %v2471, %v2247
      %v2506 = vsel %vm2484, %v2473, %v2249
      %v2508 = vsel %vm2484, %v2475, %v2251
      %v2510 = vsel %vm2484, %v2477, %v2253
      %v2512 = vsel %vm2484, %v2479, %v2255
      %v2514 = vsel %vm2484, %v2481, %v2257
      %v2516 = vsel %vm2484, %v2483, %v2259
      %vm2517 = vcmask 392192
      %v2519 = vsel %vm2517, %v2486, %v2261
      %v2521 = vsel %vm2517, %v2488, %v2263
      %v2523 = vsel %vm2517, %v2490, %v2265
      %v2525 = vsel %vm2517, %v2492, %v2267
      %v2527 = vsel %vm2517, %v2494, %v2269
      %v2529 = vsel %vm2517, %v2496, %v2271
      %v2531 = vsel %vm2517, %v2498, %v2273
      %v2533 = vsel %vm2517, %v2500, %v2275
      %v2535 = vsel %vm2517, %v2502, %v2277
      %v2537 = vsel %vm2517, %v2504, %v2279
      %v2539 = vsel %vm2517, %v2506, %v2281
      %v2541 = vsel %vm2517, %v2508, %v2283
      %v2543 = vsel %vm2517, %v2510, %v2285
      %v2545 = vsel %vm2517, %v2512, %v2287
      %v2547 = vsel %vm2517, %v2514, %v2289
      %v2549 = vsel %vm2517, %v2516, %v2291
      %vm2550 = vcmask 457728
      %v2552 = vsel %vm2550, %v2519, %v2293
      %v2554 = vsel %vm2550, %v2521, %v2295
      %v2556 = vsel %vm2550, %v2523, %v2297
      %v2558 = vsel %vm2550, %v2525, %v2299
      %v2560 = vsel %vm2550, %v2527, %v2301
      %v2562 = vsel %vm2550, %v2529, %v2303
      %v2564 = vsel %vm2550, %v2531, %v2305
      %v2566 = vsel %vm2550, %v2533, %v2307
      %v2568 = vsel %vm2550, %v2535, %v2309
      %v2570 = vsel %vm2550, %v2537, %v2311
      %v2572 = vsel %vm2550, %v2539, %v2313
      %v2574 = vsel %vm2550, %v2541, %v2315
      %v2576 = vsel %vm2550, %v2543, %v2317
      %v2578 = vsel %vm2550, %v2545, %v2319
      %v2580 = vsel %vm2550, %v2547, %v2321
      %v2582 = vsel %vm2550, %v2549, %v2323
      %vm2583 = vcmask 523264
      %v2585 = vsel %vm2583, %v2552, %v2325
      %v2587 = vsel %vm2583, %v2554, %v2327
      %v2589 = vsel %vm2583, %v2556, %v2329
      %v2591 = vsel %vm2583, %v2558, %v2331
      %v2593 = vsel %vm2583, %v2560, %v2333
      %v2595 = vsel %vm2583, %v2562, %v2335
      %v2597 = vsel %vm2583, %v2564, %v2337
      %v2599 = vsel %vm2583, %v2566, %v2339
      %v2601 = vsel %vm2583, %v2568, %v2341
      %v2603 = vsel %vm2583, %v2570, %v2343
      %v2605 = vsel %vm2583, %v2572, %v2345
      %v2607 = vsel %vm2583, %v2574, %v2347
      %v2609 = vsel %vm2583, %v2576, %v2349
      %v2611 = vsel %vm2583, %v2578, %v2351
      %v2613 = vsel %vm2583, %v2580, %v2353
      %v2615 = vsel %vm2583, %v2582, %v2355
      %v2616 = vld [vmem:[%s3] sm:$0xf]
      %v2617 = vld [vmem:[%s3 + $0x4] sm:$0xf]
      %v2618 = vld [vmem:[%s3 + $0x8] sm:$0xf]
      %v2619 = vld [vmem:[%s3 + $0xc] sm:$0xf]
      %v2620 = vld [vmem:[%s3 + $0x10] sm:$0xf]
      %v2621 = vld [vmem:[%s3 + $0x14] sm:$0xf]
      %v2622 = vld [vmem:[%s3 + $0x18] sm:$0xf]
      %v2623 = vld [vmem:[%s3 + $0x1c] sm:$0xf]
      %v2624 = vld [vmem:[%s3 + $0x20] sm:$0xf]
      %v2625 = vld [vmem:[%s4] sm:$0x1]
      %v2627 = vlaneseq
      %v2628 = vshrl.u32 %v2627, 7
      %v2629 = vsub.s32 0, %v2628
      %v2630 = vrot.slane %v2625, %v2629
      %v2641 = vunpack.c.l.b16 %v2616
      %v2642 = vunpack.c.l.b16 %v2617
      %v2643 = vunpack.c.l.b16 %v2618
      %v2644 = vunpack.c.l.b16 %v2619
      %v2645 = vunpack.c.l.b16 %v2620
      %v2646 = vunpack.c.l.b16 %v2621
      %v2647 = vunpack.c.l.b16 %v2622
      %v2648 = vunpack.c.l.b16 %v2623
      %v2649 = vunpack.c.l.b16 %v2624
      %v2650 = vpack.c.b16 %v2642, %v2641
      %v2651 = vpack.c.b16 %v2644, %v2643
      %v2652 = vpack.c.b16 %v2646, %v2645
      %v2653 = vpack.c.b16 %v2648, %v2647
      %v2654 = vpack.c.b16 %v2649, %v2649
      %vm2659 = vcmask 588800
      %v2660 = vsel %vm2659, %v2585, 0
      %v2662 = vsel %vm2659, %v2587, 0
      %v2664 = vsel %vm2659, %v2589, 0
      %v2666 = vsel %vm2659, %v2591, 0
      %v2668 = vsel %vm2659, %v2593, 0
      %v2670 = vsel %vm2659, %v2595, 0
      %v2672 = vsel %vm2659, %v2597, 0
      %v2674 = vsel %vm2659, %v2599, 0
      %v2676 = vsel %vm2659, %v2601, 0
      %v2678 = vsel %vm2659, %v2603, 0
      %v2680 = vsel %vm2659, %v2605, 0
      %v2682 = vsel %vm2659, %v2607, 0
      %v2684 = vsel %vm2659, %v2609, 0
      %v2686 = vsel %vm2659, %v2611, 0
      %v2688 = vsel %vm2659, %v2613, 0
      %v2690 = vsel %vm2659, %v2615, 0
      %vm2692 = vcmask 1043456
      %v2694 = vsel %vm2692, %v2654, 0
      %2696 = vmatprep.subr.bf16.mxu0 0
      %2697 = vmatpush1.bf16.msra.mxu0 0
      %2698 = vmatprep.subr.bf16.mxu0 0
      %2699 = vmatpush1.bf16.msra.mxu0 0
      %2700 = vmatprep.subr.bf16.mxu0 0
      %2701 = vmatpush1.bf16.msra.mxu0 0
      %2702 = vmatprep.subr.bf16.mxu0 0
      %2703 = vmatpush1.bf16.msra.mxu0 %v2694
      %2704 = vmatprep.subr.bf16.mxu0 0
      %2705 = vmatpush1.bf16.msra.mxu0 %v2653
      %2706 = vmatprep.subr.bf16.mxu0 0
      %2707 = vmatpush1.bf16.msra.mxu0 %v2652
      %2708 = vmatprep.subr.bf16.mxu0 0
      %2709 = vmatpush1.bf16.msra.mxu0 %v2651
      %2710 = vmatprep.subr.bf16.mxu0 0
      %2711 = vmatpush1.bf16.msra.mxu0 %v2650
      %2712 = vmatprep.subr.bf16.mxu0 0
      %2713 = vmatpush2.bf16.msra.mxu0 0
      %2714 = vmatprep.subr.bf16.mxu0 0
      %2715 = vmatpush2.bf16.msra.mxu0 0
      %2716 = vmatprep.subr.bf16.mxu0 0
      %2717 = vmatpush2.bf16.msra.mxu0 0
      %2718 = vmatprep.subr.bf16.mxu0 0
      %2719 = vmatpush2.bf16.msra.mxu0 0
      %2720 = vmatprep.subr.bf16.mxu0 0
      %2721 = vmatpush2.bf16.msra.mxu0 0
      %2722 = vmatprep.subr.bf16.mxu0 0
      %2723 = vmatpush2.bf16.msra.mxu0 0
      %2724 = vmatprep.subr.bf16.mxu0 0
      %2725 = vmatpush2.bf16.msra.mxu0 0
      %2726 = vmatprep.subr.bf16.mxu0 0
      %2727 = vmatpush2.bf16.msra.mxu0 0
      %2728 = vmatprep.mubr.bf16.mxu0 0
      %2729 = vmatmul.mubr.bf16.gmra.mxu0 %v2660
      %v2730 = vpop.f32.mrf.mxu0
      %v2731 = vadd.f32 %v2630, %v2730
      %v2732 = vpop.f32.mrf.mxu0
      %v2733 = vpop.f32.mrf.mxu0
      %v2734 = vadd.f32 %v2630, %v2733
      %v2735 = vpop.f32.mrf.mxu0
      %2736 = vmatprep.mubr.bf16.mxu0 0
      %2737 = vmatmul.mubr.bf16.gmra.mxu0 %v2662
      %v2738 = vpop.f32.mrf.mxu0
      %v2739 = vadd.f32 %v2630, %v2738
      %v2740 = vpop.f32.mrf.mxu0
      %v2741 = vpop.f32.mrf.mxu0
      %v2742 = vadd.f32 %v2630, %v2741
      %v2743 = vpop.f32.mrf.mxu0
      %2744 = vmatprep.mubr.bf16.mxu0 0
      %2745 = vmatmul.mubr.bf16.gmra.mxu0 %v2664
      %v2746 = vpop.f32.mrf.mxu0
      %v2747 = vadd.f32 %v2630, %v2746
      %v2748 = vpop.f32.mrf.mxu0
      %v2749 = vpop.f32.mrf.mxu0
      %v2750 = vadd.f32 %v2630, %v2749
      %v2751 = vpop.f32.mrf.mxu0
      %2752 = vmatprep.mubr.bf16.mxu0 0
      %2753 = vmatmul.mubr.bf16.gmra.mxu0 %v2666
      %v2754 = vpop.f32.mrf.mxu0
      %v2755 = vadd.f32 %v2630, %v2754
      %v2756 = vpop.f32.mrf.mxu0
      %v2757 = vpop.f32.mrf.mxu0
      %v2758 = vadd.f32 %v2630, %v2757
      %v2759 = vpop.f32.mrf.mxu0
      %2760 = vmatprep.mubr.bf16.mxu0 0
      %2761 = vmatmul.mubr.bf16.gmra.mxu0 %v2668
      %v2762 = vpop.f32.mrf.mxu0
      %v2763 = vadd.f32 %v2630, %v2762
      %v2764 = vpop.f32.mrf.mxu0
      %v2765 = vpop.f32.mrf.mxu0
      %v2766 = vadd.f32 %v2630, %v2765
      %v2767 = vpop.f32.mrf.mxu0
      %2768 = vmatprep.mubr.bf16.mxu0 0
      %2769 = vmatmul.mubr.bf16.gmra.mxu0 %v2670
      %v2770 = vpop.f32.mrf.mxu0
      %v2771 = vadd.f32 %v2630, %v2770
      %v2772 = vpop.f32.mrf.mxu0
      %v2773 = vpop.f32.mrf.mxu0
      %v2774 = vadd.f32 %v2630, %v2773
      %v2775 = vpop.f32.mrf.mxu0
      %2776 = vmatprep.mubr.bf16.mxu0 0
      %2777 = vmatmul.mubr.bf16.gmra.mxu0 %v2672
      %v2778 = vpop.f32.mrf.mxu0
      %v2779 = vadd.f32 %v2630, %v2778
      %v2780 = vpop.f32.mrf.mxu0
      %v2781 = vpop.f32.mrf.mxu0
      %v2782 = vadd.f32 %v2630, %v2781
      %v2783 = vpop.f32.mrf.mxu0
      %2784 = vmatprep.mubr.bf16.mxu0 0
      %2785 = vmatmul.mubr.bf16.gmra.mxu0 %v2674
      %v2786 = vpop.f32.mrf.mxu0
      %v2787 = vadd.f32 %v2630, %v2786
      %v2788 = vpop.f32.mrf.mxu0
      %v2789 = vpop.f32.mrf.mxu0
      %v2790 = vadd.f32 %v2630, %v2789
      %v2791 = vpop.f32.mrf.mxu0
      %2792 = vmatprep.mubr.bf16.mxu0 0
      %2793 = vmatmul.mubr.bf16.gmra.mxu0 %v2676
      %v2794 = vpop.f32.mrf.mxu0
      %v2795 = vadd.f32 %v2630, %v2794
      %v2796 = vpop.f32.mrf.mxu0
      %v2797 = vpop.f32.mrf.mxu0
      %v2798 = vadd.f32 %v2630, %v2797
      %v2799 = vpop.f32.mrf.mxu0
      %2800 = vmatprep.mubr.bf16.mxu0 0
      %2801 = vmatmul.mubr.bf16.gmra.mxu0 %v2678
      %v2802 = vpop.f32.mrf.mxu0
      %v2803 = vadd.f32 %v2630, %v2802
      %v2804 = vpop.f32.mrf.mxu0
      %v2805 = vpop.f32.mrf.mxu0
      %v2806 = vadd.f32 %v2630, %v2805
      %v2807 = vpop.f32.mrf.mxu0
      %2808 = vmatprep.mubr.bf16.mxu0 0
      %2809 = vmatmul.mubr.bf16.gmra.mxu0 %v2680
      %v2810 = vpop.f32.mrf.mxu0
      %v2811 = vadd.f32 %v2630, %v2810
      %v2812 = vpop.f32.mrf.mxu0
      %v2813 = vpop.f32.mrf.mxu0
      %v2814 = vadd.f32 %v2630, %v2813
      %v2815 = vpop.f32.mrf.mxu0
      %2816 = vmatprep.mubr.bf16.mxu0 0
      %2817 = vmatmul.mubr.bf16.gmra.mxu0 %v2682
      %v2818 = vpop.f32.mrf.mxu0
      %v2819 = vadd.f32 %v2630, %v2818
      %v2820 = vpop.f32.mrf.mxu0
      %v2821 = vpop.f32.mrf.mxu0
      %v2822 = vadd.f32 %v2630, %v2821
      %v2823 = vpop.f32.mrf.mxu0
      %2824 = vmatprep.mubr.bf16.mxu0 0
      %2825 = vmatmul.mubr.bf16.gmra.mxu0 %v2684
      %v2826 = vpop.f32.mrf.mxu0
      %v2827 = vadd.f32 %v2630, %v2826
      %v2828 = vpop.f32.mrf.mxu0
      %v2829 = vpop.f32.mrf.mxu0
      %v2830 = vadd.f32 %v2630, %v2829
      %v2831 = vpop.f32.mrf.mxu0
      %2832 = vmatprep.mubr.bf16.mxu0 0
      %2833 = vmatmul.mubr.bf16.gmra.mxu0 %v2686
      %v2834 = vpop.f32.mrf.mxu0
      %v2835 = vadd.f32 %v2630, %v2834
      %v2836 = vpop.f32.mrf.mxu0
      %v2837 = vpop.f32.mrf.mxu0
      %v2838 = vadd.f32 %v2630, %v2837
      %v2839 = vpop.f32.mrf.mxu0
      %2840 = vmatprep.mubr.bf16.mxu0 0
      %2841 = vmatmul.mubr.bf16.gmra.mxu0 %v2688
      %v2842 = vpop.f32.mrf.mxu0
      %v2843 = vadd.f32 %v2630, %v2842
      %v2844 = vpop.f32.mrf.mxu0
      %v2845 = vpop.f32.mrf.mxu0
      %v2846 = vadd.f32 %v2630, %v2845
      %v2847 = vpop.f32.mrf.mxu0
      %2848 = vmatprep.mubr.bf16.mxu0 0
      %2849 = vmatmul.mubr.bf16.gmra.mxu0 %v2690
      %v2850 = vpop.f32.mrf.mxu0
      %v2851 = vadd.f32 %v2630, %v2850
      %v2852 = vpop.f32.mrf.mxu0
      %v2853 = vpop.f32.mrf.mxu0
      %v2854 = vadd.f32 %v2630, %v2853
      %v2855 = vpop.f32.mrf.mxu0
      %2856 = vdwg.mxu0
      %v2857 = vmax.f32 %v2731, 0.0
      %v2858 = vmax.f32 %v2734, 0.0
      %v2859 = vmax.f32 %v2739, 0.0
      %v2860 = vmax.f32 %v2742, 0.0
      %v2861 = vmax.f32 %v2747, 0.0
      %v2862 = vmax.f32 %v2750, 0.0
      %v2863 = vmax.f32 %v2755, 0.0
      %v2864 = vmax.f32 %v2758, 0.0
      %v2865 = vmax.f32 %v2763, 0.0
      %v2866 = vmax.f32 %v2766, 0.0
      %v2867 = vmax.f32 %v2771, 0.0
      %v2868 = vmax.f32 %v2774, 0.0
      %v2869 = vmax.f32 %v2779, 0.0
      %v2870 = vmax.f32 %v2782, 0.0
      %v2871 = vmax.f32 %v2787, 0.0
      %v2872 = vmax.f32 %v2790, 0.0
      %v2873 = vmax.f32 %v2795, 0.0
      %v2874 = vmax.f32 %v2798, 0.0
      %v2875 = vmax.f32 %v2803, 0.0
      %v2876 = vmax.f32 %v2806, 0.0
      %v2877 = vmax.f32 %v2811, 0.0
      %v2878 = vmax.f32 %v2814, 0.0
      %v2879 = vmax.f32 %v2819, 0.0
      %v2880 = vmax.f32 %v2822, 0.0
      %v2881 = vmax.f32 %v2827, 0.0
      %v2882 = vmax.f32 %v2830, 0.0
      %v2883 = vmax.f32 %v2835, 0.0
      %v2884 = vmax.f32 %v2838, 0.0
      %v2885 = vmax.f32 %v2843, 0.0
      %v2886 = vmax.f32 %v2846, 0.0
      %v2887 = vmax.f32 %v2851, 0.0
      %v2888 = vmax.f32 %v2854, 0.0
      %v2921 = vcombine.high %v2857, %v2857
      %v2923 = vunpack.c.l.s4 1983009808
      %v2924 = vunpack.c.0.s8 %v2923
      %v2925 = vlaneseq
      %v2926 = vshrl.u32 %v2925, 7
      %v2927 = vsub.s32 %v2924, %v2926
      %v2928 = vrot.slane %v2857, %v2927
      %v2930 = vunpack.c.l.s4 1983009808
      %v2931 = vunpack.c.0.s8 %v2930
      %v2932 = vlaneseq
      %v2933 = vshrl.u32 %v2932, 7
      %v2934 = vsub.s32 %v2931, %v2933
      %v2935 = vrot.slane %v2921, %v2934
      %v2936 = vcombine.high %v2928, %v2928
      %v2937 = vcombine.high %v2935, %v2935
      %v2938 = vcombine.high %v2858, %v2858
      %v2940 = vunpack.c.l.s4 1983009808
      %v2941 = vunpack.c.0.s8 %v2940
      %v2942 = vlaneseq
      %v2943 = vshrl.u32 %v2942, 7
      %v2944 = vsub.s32 %v2941, %v2943
      %v2945 = vrot.slane %v2858, %v2944
      %v2947 = vunpack.c.l.s4 1983009808
      %v2948 = vunpack.c.0.s8 %v2947
      %v2949 = vlaneseq
      %v2950 = vshrl.u32 %v2949, 7
      %v2951 = vsub.s32 %v2948, %v2950
      %v2952 = vrot.slane %v2938, %v2951
      %v2953 = vcombine.high %v2945, %v2945
      %v2954 = vcombine.high %v2952, %v2952
      %v2955 = vcombine.high %v2859, %v2859
      %v2957 = vunpack.c.l.s4 1983009808
      %v2958 = vunpack.c.0.s8 %v2957
      %v2959 = vlaneseq
      %v2960 = vshrl.u32 %v2959, 7
      %v2961 = vsub.s32 %v2958, %v2960
      %v2962 = vrot.slane %v2859, %v2961
      %v2964 = vunpack.c.l.s4 1983009808
      %v2965 = vunpack.c.0.s8 %v2964
      %v2966 = vlaneseq
      %v2967 = vshrl.u32 %v2966, 7
      %v2968 = vsub.s32 %v2965, %v2967
      %v2969 = vrot.slane %v2955, %v2968
      %v2970 = vcombine.high %v2962, %v2962
      %v2971 = vcombine.high %v2969, %v2969
      %v2972 = vcombine.high %v2860, %v2860
      %v2974 = vunpack.c.l.s4 1983009808
      %v2975 = vunpack.c.0.s8 %v2974
      %v2976 = vlaneseq
      %v2977 = vshrl.u32 %v2976, 7
      %v2978 = vsub.s32 %v2975, %v2977
      %v2979 = vrot.slane %v2860, %v2978
      %v2981 = vunpack.c.l.s4 1983009808
      %v2982 = vunpack.c.0.s8 %v2981
      %v2983 = vlaneseq
      %v2984 = vshrl.u32 %v2983, 7
      %v2985 = vsub.s32 %v2982, %v2984
      %v2986 = vrot.slane %v2972, %v2985
      %v2987 = vcombine.high %v2979, %v2979
      %v2988 = vcombine.high %v2986, %v2986
      %v2989 = vcombine.high %v2861, %v2861
      %v2991 = vunpack.c.l.s4 1983009808
      %v2992 = vunpack.c.0.s8 %v2991
      %v2993 = vlaneseq
      %v2994 = vshrl.u32 %v2993, 7
      %v2995 = vsub.s32 %v2992, %v2994
      %v2996 = vrot.slane %v2861, %v2995
      %v2998 = vunpack.c.l.s4 1983009808
      %v2999 = vunpack.c.0.s8 %v2998
      %v3000 = vlaneseq
      %v3001 = vshrl.u32 %v3000, 7
      %v3002 = vsub.s32 %v2999, %v3001
      %v3003 = vrot.slane %v2989, %v3002
      %v3004 = vcombine.high %v2996, %v2996
      %v3005 = vcombine.high %v3003, %v3003
      %v3006 = vcombine.high %v2862, %v2862
      %v3008 = vunpack.c.l.s4 1983009808
      %v3009 = vunpack.c.0.s8 %v3008
      %v3010 = vlaneseq
      %v3011 = vshrl.u32 %v3010, 7
      %v3012 = vsub.s32 %v3009, %v3011
      %v3013 = vrot.slane %v2862, %v3012
      %v3015 = vunpack.c.l.s4 1983009808
      %v3016 = vunpack.c.0.s8 %v3015
      %v3017 = vlaneseq
      %v3018 = vshrl.u32 %v3017, 7
      %v3019 = vsub.s32 %v3016, %v3018
      %v3020 = vrot.slane %v3006, %v3019
      %v3021 = vcombine.high %v3013, %v3013
      %v3022 = vcombine.high %v3020, %v3020
      %v3023 = vcombine.high %v2863, %v2863
      %v3025 = vunpack.c.l.s4 1983009808
      %v3026 = vunpack.c.0.s8 %v3025
      %v3027 = vlaneseq
      %v3028 = vshrl.u32 %v3027, 7
      %v3029 = vsub.s32 %v3026, %v3028
      %v3030 = vrot.slane %v2863, %v3029
      %v3032 = vunpack.c.l.s4 1983009808
      %v3033 = vunpack.c.0.s8 %v3032
      %v3034 = vlaneseq
      %v3035 = vshrl.u32 %v3034, 7
      %v3036 = vsub.s32 %v3033, %v3035
      %v3037 = vrot.slane %v3023, %v3036
      %v3038 = vcombine.high %v3030, %v3030
      %v3039 = vcombine.high %v3037, %v3037
      %v3040 = vcombine.high %v2864, %v2864
      %v3042 = vunpack.c.l.s4 1983009808
      %v3043 = vunpack.c.0.s8 %v3042
      %v3044 = vlaneseq
      %v3045 = vshrl.u32 %v3044, 7
      %v3046 = vsub.s32 %v3043, %v3045
      %v3047 = vrot.slane %v2864, %v3046
      %v3049 = vunpack.c.l.s4 1983009808
      %v3050 = vunpack.c.0.s8 %v3049
      %v3051 = vlaneseq
      %v3052 = vshrl.u32 %v3051, 7
      %v3053 = vsub.s32 %v3050, %v3052
      %v3054 = vrot.slane %v3040, %v3053
      %v3055 = vcombine.high %v3047, %v3047
      %v3056 = vcombine.high %v3054, %v3054
      %v3057 = vcombine.high %v2865, %v2865
      %v3059 = vunpack.c.l.s4 1983009808
      %v3060 = vunpack.c.0.s8 %v3059
      %v3061 = vlaneseq
      %v3062 = vshrl.u32 %v3061, 7
      %v3063 = vsub.s32 %v3060, %v3062
      %v3064 = vrot.slane %v2865, %v3063
      %v3066 = vunpack.c.l.s4 1983009808
      %v3067 = vunpack.c.0.s8 %v3066
      %v3068 = vlaneseq
      %v3069 = vshrl.u32 %v3068, 7
      %v3070 = vsub.s32 %v3067, %v3069
      %v3071 = vrot.slane %v3057, %v3070
      %v3072 = vcombine.high %v3064, %v3064
      %v3073 = vcombine.high %v3071, %v3071
      %v3074 = vcombine.high %v2866, %v2866
      %v3076 = vunpack.c.l.s4 1983009808
      %v3077 = vunpack.c.0.s8 %v3076
      %v3078 = vlaneseq
      %v3079 = vshrl.u32 %v3078, 7
      %v3080 = vsub.s32 %v3077, %v3079
      %v3081 = vrot.slane %v2866, %v3080
      %v3083 = vunpack.c.l.s4 1983009808
      %v3084 = vunpack.c.0.s8 %v3083
      %v3085 = vlaneseq
      %v3086 = vshrl.u32 %v3085, 7
      %v3087 = vsub.s32 %v3084, %v3086
      %v3088 = vrot.slane %v3074, %v3087
      %v3089 = vcombine.high %v3081, %v3081
      %v3090 = vcombine.high %v3088, %v3088
      %v3091 = vcombine.high %v2867, %v2867
      %v3093 = vunpack.c.l.s4 1983009808
      %v3094 = vunpack.c.0.s8 %v3093
      %v3095 = vlaneseq
      %v3096 = vshrl.u32 %v3095, 7
      %v3097 = vsub.s32 %v3094, %v3096
      %v3098 = vrot.slane %v2867, %v3097
      %v3100 = vunpack.c.l.s4 1983009808
      %v3101 = vunpack.c.0.s8 %v3100
      %v3102 = vlaneseq
      %v3103 = vshrl.u32 %v3102, 7
      %v3104 = vsub.s32 %v3101, %v3103
      %v3105 = vrot.slane %v3091, %v3104
      %v3106 = vcombine.high %v3098, %v3098
      %v3107 = vcombine.high %v3105, %v3105
      %v3108 = vcombine.high %v2868, %v2868
      %v3110 = vunpack.c.l.s4 1983009808
      %v3111 = vunpack.c.0.s8 %v3110
      %v3112 = vlaneseq
      %v3113 = vshrl.u32 %v3112, 7
      %v3114 = vsub.s32 %v3111, %v3113
      %v3115 = vrot.slane %v2868, %v3114
      %v3117 = vunpack.c.l.s4 1983009808
      %v3118 = vunpack.c.0.s8 %v3117
      %v3119 = vlaneseq
      %v3120 = vshrl.u32 %v3119, 7
      %v3121 = vsub.s32 %v3118, %v3120
      %v3122 = vrot.slane %v3108, %v3121
      %v3123 = vcombine.high %v3115, %v3115
      %v3124 = vcombine.high %v3122, %v3122
      %v3125 = vcombine.high %v2869, %v2869
      %v3127 = vunpack.c.l.s4 1983009808
      %v3128 = vunpack.c.0.s8 %v3127
      %v3129 = vlaneseq
      %v3130 = vshrl.u32 %v3129, 7
      %v3131 = vsub.s32 %v3128, %v3130
      %v3132 = vrot.slane %v2869, %v3131
      %v3134 = vunpack.c.l.s4 1983009808
      %v3135 = vunpack.c.0.s8 %v3134
      %v3136 = vlaneseq
      %v3137 = vshrl.u32 %v3136, 7
      %v3138 = vsub.s32 %v3135, %v3137
      %v3139 = vrot.slane %v3125, %v3138
      %v3140 = vcombine.high %v3132, %v3132
      %v3141 = vcombine.high %v3139, %v3139
      %v3142 = vcombine.high %v2870, %v2870
      %v3144 = vunpack.c.l.s4 1983009808
      %v3145 = vunpack.c.0.s8 %v3144
      %v3146 = vlaneseq
      %v3147 = vshrl.u32 %v3146, 7
      %v3148 = vsub.s32 %v3145, %v3147
      %v3149 = vrot.slane %v2870, %v3148
      %v3151 = vunpack.c.l.s4 1983009808
      %v3152 = vunpack.c.0.s8 %v3151
      %v3153 = vlaneseq
      %v3154 = vshrl.u32 %v3153, 7
      %v3155 = vsub.s32 %v3152, %v3154
      %v3156 = vrot.slane %v3142, %v3155
      %v3157 = vcombine.high %v3149, %v3149
      %v3158 = vcombine.high %v3156, %v3156
      %v3159 = vcombine.high %v2871, %v2871
      %v3161 = vunpack.c.l.s4 1983009808
      %v3162 = vunpack.c.0.s8 %v3161
      %v3163 = vlaneseq
      %v3164 = vshrl.u32 %v3163, 7
      %v3165 = vsub.s32 %v3162, %v3164
      %v3166 = vrot.slane %v2871, %v3165
      %v3168 = vunpack.c.l.s4 1983009808
      %v3169 = vunpack.c.0.s8 %v3168
      %v3170 = vlaneseq
      %v3171 = vshrl.u32 %v3170, 7
      %v3172 = vsub.s32 %v3169, %v3171
      %v3173 = vrot.slane %v3159, %v3172
      %v3174 = vcombine.high %v3166, %v3166
      %v3175 = vcombine.high %v3173, %v3173
      %v3176 = vcombine.high %v2872, %v2872
      %v3178 = vunpack.c.l.s4 1983009808
      %v3179 = vunpack.c.0.s8 %v3178
      %v3180 = vlaneseq
      %v3181 = vshrl.u32 %v3180, 7
      %v3182 = vsub.s32 %v3179, %v3181
      %v3183 = vrot.slane %v2872, %v3182
      %v3185 = vunpack.c.l.s4 1983009808
      %v3186 = vunpack.c.0.s8 %v3185
      %v3187 = vlaneseq
      %v3188 = vshrl.u32 %v3187, 7
      %v3189 = vsub.s32 %v3186, %v3188
      %v3190 = vrot.slane %v3176, %v3189
      %v3191 = vcombine.high %v3183, %v3183
      %v3192 = vcombine.high %v3190, %v3190
      %v3193 = vcombine.high %v2873, %v2873
      %v3195 = vunpack.c.l.s4 1983009808
      %v3196 = vunpack.c.0.s8 %v3195
      %v3197 = vlaneseq
      %v3198 = vshrl.u32 %v3197, 7
      %v3199 = vsub.s32 %v3196, %v3198
      %v3200 = vrot.slane %v2873, %v3199
      %v3202 = vunpack.c.l.s4 1983009808
      %v3203 = vunpack.c.0.s8 %v3202
      %v3204 = vlaneseq
      %v3205 = vshrl.u32 %v3204, 7
      %v3206 = vsub.s32 %v3203, %v3205
      %v3207 = vrot.slane %v3193, %v3206
      %v3208 = vcombine.high %v3200, %v3200
      %v3209 = vcombine.high %v3207, %v3207
      %v3210 = vcombine.high %v2874, %v2874
      %v3212 = vunpack.c.l.s4 1983009808
      %v3213 = vunpack.c.0.s8 %v3212
      %v3214 = vlaneseq
      %v3215 = vshrl.u32 %v3214, 7
      %v3216 = vsub.s32 %v3213, %v3215
      %v3217 = vrot.slane %v2874, %v3216
      %v3219 = vunpack.c.l.s4 1983009808
      %v3220 = vunpack.c.0.s8 %v3219
      %v3221 = vlaneseq
      %v3222 = vshrl.u32 %v3221, 7
      %v3223 = vsub.s32 %v3220, %v3222
      %v3224 = vrot.slane %v3210, %v3223
      %v3225 = vcombine.high %v3217, %v3217
      %v3226 = vcombine.high %v3224, %v3224
      %v3227 = vcombine.high %v2875, %v2875
      %v3229 = vunpack.c.l.s4 1983009808
      %v3230 = vunpack.c.0.s8 %v3229
      %v3231 = vlaneseq
      %v3232 = vshrl.u32 %v3231, 7
      %v3233 = vsub.s32 %v3230, %v3232
      %v3234 = vrot.slane %v2875, %v3233
      %v3236 = vunpack.c.l.s4 1983009808
      %v3237 = vunpack.c.0.s8 %v3236
      %v3238 = vlaneseq
      %v3239 = vshrl.u32 %v3238, 7
      %v3240 = vsub.s32 %v3237, %v3239
      %v3241 = vrot.slane %v3227, %v3240
      %v3242 = vcombine.high %v3234, %v3234
      %v3243 = vcombine.high %v3241, %v3241
      %v3244 = vcombine.high %v2876, %v2876
      %v3246 = vunpack.c.l.s4 1983009808
      %v3247 = vunpack.c.0.s8 %v3246
      %v3248 = vlaneseq
      %v3249 = vshrl.u32 %v3248, 7
      %v3250 = vsub.s32 %v3247, %v3249
      %v3251 = vrot.slane %v2876, %v3250
      %v3253 = vunpack.c.l.s4 1983009808
      %v3254 = vunpack.c.0.s8 %v3253
      %v3255 = vlaneseq
      %v3256 = vshrl.u32 %v3255, 7
      %v3257 = vsub.s32 %v3254, %v3256
      %v3258 = vrot.slane %v3244, %v3257
      %v3259 = vcombine.high %v3251, %v3251
      %v3260 = vcombine.high %v3258, %v3258
      %v3261 = vcombine.high %v2877, %v2877
      %v3263 = vunpack.c.l.s4 1983009808
      %v3264 = vunpack.c.0.s8 %v3263
      %v3265 = vlaneseq
      %v3266 = vshrl.u32 %v3265, 7
      %v3267 = vsub.s32 %v3264, %v3266
      %v3268 = vrot.slane %v2877, %v3267
      %v3270 = vunpack.c.l.s4 1983009808
      %v3271 = vunpack.c.0.s8 %v3270
      %v3272 = vlaneseq
      %v3273 = vshrl.u32 %v3272, 7
      %v3274 = vsub.s32 %v3271, %v3273
      %v3275 = vrot.slane %v3261, %v3274
      %v3276 = vcombine.high %v3268, %v3268
      %v3277 = vcombine.high %v3275, %v3275
      %v3278 = vcombine.high %v2878, %v2878
      %v3280 = vunpack.c.l.s4 1983009808
      %v3281 = vunpack.c.0.s8 %v3280
      %v3282 = vlaneseq
      %v3283 = vshrl.u32 %v3282, 7
      %v3284 = vsub.s32 %v3281, %v3283
      %v3285 = vrot.slane %v2878, %v3284
      %v3287 = vunpack.c.l.s4 1983009808
      %v3288 = vunpack.c.0.s8 %v3287
      %v3289 = vlaneseq
      %v3290 = vshrl.u32 %v3289, 7
      %v3291 = vsub.s32 %v3288, %v3290
      %v3292 = vrot.slane %v3278, %v3291
      %v3293 = vcombine.high %v3285, %v3285
      %v3294 = vcombine.high %v3292, %v3292
      %v3295 = vcombine.high %v2879, %v2879
      %v3297 = vunpack.c.l.s4 1983009808
      %v3298 = vunpack.c.0.s8 %v3297
      %v3299 = vlaneseq
      %v3300 = vshrl.u32 %v3299, 7
      %v3301 = vsub.s32 %v3298, %v3300
      %v3302 = vrot.slane %v2879, %v3301
      %v3304 = vunpack.c.l.s4 1983009808
      %v3305 = vunpack.c.0.s8 %v3304
      %v3306 = vlaneseq
      %v3307 = vshrl.u32 %v3306, 7
      %v3308 = vsub.s32 %v3305, %v3307
      %v3309 = vrot.slane %v3295, %v3308
      %v3310 = vcombine.high %v3302, %v3302
      %v3311 = vcombine.high %v3309, %v3309
      %v3312 = vcombine.high %v2880, %v2880
      %v3314 = vunpack.c.l.s4 1983009808
      %v3315 = vunpack.c.0.s8 %v3314
      %v3316 = vlaneseq
      %v3317 = vshrl.u32 %v3316, 7
      %v3318 = vsub.s32 %v3315, %v3317
      %v3319 = vrot.slane %v2880, %v3318
      %v3321 = vunpack.c.l.s4 1983009808
      %v3322 = vunpack.c.0.s8 %v3321
      %v3323 = vlaneseq
      %v3324 = vshrl.u32 %v3323, 7
      %v3325 = vsub.s32 %v3322, %v3324
      %v3326 = vrot.slane %v3312, %v3325
      %v3327 = vcombine.high %v3319, %v3319
      %v3328 = vcombine.high %v3326, %v3326
      %v3329 = vcombine.high %v2881, %v2881
      %v3331 = vunpack.c.l.s4 1983009808
      %v3332 = vunpack.c.0.s8 %v3331
      %v3333 = vlaneseq
      %v3334 = vshrl.u32 %v3333, 7
      %v3335 = vsub.s32 %v3332, %v3334
      %v3336 = vrot.slane %v2881, %v3335
      %v3338 = vunpack.c.l.s4 1983009808
      %v3339 = vunpack.c.0.s8 %v3338
      %v3340 = vlaneseq
      %v3341 = vshrl.u32 %v3340, 7
      %v3342 = vsub.s32 %v3339, %v3341
      %v3343 = vrot.slane %v3329, %v3342
      %v3344 = vcombine.high %v3336, %v3336
      %v3345 = vcombine.high %v3343, %v3343
      %v3346 = vcombine.high %v2882, %v2882
      %v3348 = vunpack.c.l.s4 1983009808
      %v3349 = vunpack.c.0.s8 %v3348
      %v3350 = vlaneseq
      %v3351 = vshrl.u32 %v3350, 7
      %v3352 = vsub.s32 %v3349, %v3351
      %v3353 = vrot.slane %v2882, %v3352
      %v3355 = vunpack.c.l.s4 1983009808
      %v3356 = vunpack.c.0.s8 %v3355
      %v3357 = vlaneseq
      %v3358 = vshrl.u32 %v3357, 7
      %v3359 = vsub.s32 %v3356, %v3358
      %v3360 = vrot.slane %v3346, %v3359
      %v3361 = vcombine.high %v3353, %v3353
      %v3362 = vcombine.high %v3360, %v3360
      %v3363 = vcombine.high %v2883, %v2883
      %v3365 = vunpack.c.l.s4 1983009808
      %v3366 = vunpack.c.0.s8 %v3365
      %v3367 = vlaneseq
      %v3368 = vshrl.u32 %v3367, 7
      %v3369 = vsub.s32 %v3366, %v3368
      %v3370 = vrot.slane %v2883, %v3369
      %v3372 = vunpack.c.l.s4 1983009808
      %v3373 = vunpack.c.0.s8 %v3372
      %v3374 = vlaneseq
      %v3375 = vshrl.u32 %v3374, 7
      %v3376 = vsub.s32 %v3373, %v3375
      %v3377 = vrot.slane %v3363, %v3376
      %v3378 = vcombine.high %v3370, %v3370
      %v3379 = vcombine.high %v3377, %v3377
      %v3380 = vcombine.high %v2884, %v2884
      %v3382 = vunpack.c.l.s4 1983009808
      %v3383 = vunpack.c.0.s8 %v3382
      %v3384 = vlaneseq
      %v3385 = vshrl.u32 %v3384, 7
      %v3386 = vsub.s32 %v3383, %v3385
      %v3387 = vrot.slane %v2884, %v3386
      %v3389 = vunpack.c.l.s4 1983009808
      %v3390 = vunpack.c.0.s8 %v3389
      %v3391 = vlaneseq
      %v3392 = vshrl.u32 %v3391, 7
      %v3393 = vsub.s32 %v3390, %v3392
      %v3394 = vrot.slane %v3380, %v3393
      %v3395 = vcombine.high %v3387, %v3387
      %v3396 = vcombine.high %v3394, %v3394
      %v3397 = vcombine.high %v2885, %v2885
      %v3399 = vunpack.c.l.s4 1983009808
      %v3400 = vunpack.c.0.s8 %v3399
      %v3401 = vlaneseq
      %v3402 = vshrl.u32 %v3401, 7
      %v3403 = vsub.s32 %v3400, %v3402
      %v3404 = vrot.slane %v2885, %v3403
      %v3406 = vunpack.c.l.s4 1983009808
      %v3407 = vunpack.c.0.s8 %v3406
      %v3408 = vlaneseq
      %v3409 = vshrl.u32 %v3408, 7
      %v3410 = vsub.s32 %v3407, %v3409
      %v3411 = vrot.slane %v3397, %v3410
      %v3412 = vcombine.high %v3404, %v3404
      %v3413 = vcombine.high %v3411, %v3411
      %v3414 = vcombine.high %v2886, %v2886
      %v3416 = vunpack.c.l.s4 1983009808
      %v3417 = vunpack.c.0.s8 %v3416
      %v3418 = vlaneseq
      %v3419 = vshrl.u32 %v3418, 7
      %v3420 = vsub.s32 %v3417, %v3419
      %v3421 = vrot.slane %v2886, %v3420
      %v3423 = vunpack.c.l.s4 1983009808
      %v3424 = vunpack.c.0.s8 %v3423
      %v3425 = vlaneseq
      %v3426 = vshrl.u32 %v3425, 7
      %v3427 = vsub.s32 %v3424, %v3426
      %v3428 = vrot.slane %v3414, %v3427
      %v3429 = vcombine.high %v3421, %v3421
      %v3430 = vcombine.high %v3428, %v3428
      %v3431 = vcombine.high %v2887, %v2887
      %v3433 = vunpack.c.l.s4 1983009808
      %v3434 = vunpack.c.0.s8 %v3433
      %v3435 = vlaneseq
      %v3436 = vshrl.u32 %v3435, 7
      %v3437 = vsub.s32 %v3434, %v3436
      %v3438 = vrot.slane %v2887, %v3437
      %v3440 = vunpack.c.l.s4 1983009808
      %v3441 = vunpack.c.0.s8 %v3440
      %v3442 = vlaneseq
      %v3443 = vshrl.u32 %v3442, 7
      %v3444 = vsub.s32 %v3441, %v3443
      %v3445 = vrot.slane %v3431, %v3444
      %v3446 = vcombine.high %v3438, %v3438
      %v3447 = vcombine.high %v3445, %v3445
      %v3448 = vcombine.high %v2888, %v2888
      %v3450 = vunpack.c.l.s4 1983009808
      %v3451 = vunpack.c.0.s8 %v3450
      %v3452 = vlaneseq
      %v3453 = vshrl.u32 %v3452, 7
      %v3454 = vsub.s32 %v3451, %v3453
      %v3455 = vrot.slane %v2888, %v3454
      %v3457 = vunpack.c.l.s4 1983009808
      %v3458 = vunpack.c.0.s8 %v3457
      %v3459 = vlaneseq
      %v3460 = vshrl.u32 %v3459, 7
      %v3461 = vsub.s32 %v3458, %v3460
      %v3462 = vrot.slane %v3448, %v3461
      %v3463 = vcombine.high %v3455, %v3455
      %v3464 = vcombine.high %v3462, %v3462
      %v3593 = vrot.slane %v2928, 7
      %v3594 = vrot.slane %v2936, 7
      %v3595 = vrot.slane %v2935, 7
      %v3596 = vrot.slane %v2937, 7
      %v3597 = vrot.slane %v2945, 7
      %v3598 = vrot.slane %v2953, 7
      %v3599 = vrot.slane %v2952, 7
      %v3600 = vrot.slane %v2954, 7
      %v3601 = vrot.slane %v2996, 7
      %v3602 = vrot.slane %v3004, 7
      %v3603 = vrot.slane %v3003, 7
      %v3604 = vrot.slane %v3005, 7
      %v3605 = vrot.slane %v3013, 7
      %v3606 = vrot.slane %v3021, 7
      %v3607 = vrot.slane %v3020, 7
      %v3608 = vrot.slane %v3022, 7
      %v3609 = vrot.slane %v3064, 7
      %v3610 = vrot.slane %v3072, 7
      %v3611 = vrot.slane %v3071, 7
      %v3612 = vrot.slane %v3073, 7
      %v3613 = vrot.slane %v3081, 7
      %v3614 = vrot.slane %v3089, 7
      %v3615 = vrot.slane %v3088, 7
      %v3616 = vrot.slane %v3090, 7
      %v3617 = vrot.slane %v3132, 7
      %v3618 = vrot.slane %v3140, 7
      %v3619 = vrot.slane %v3139, 7
      %v3620 = vrot.slane %v3141, 7
      %v3621 = vrot.slane %v3149, 7
      %v3622 = vrot.slane %v3157, 7
      %v3623 = vrot.slane %v3156, 7
      %v3624 = vrot.slane %v3158, 7
      %v3625 = vrot.slane %v3200, 7
      %v3626 = vrot.slane %v3208, 7
      %v3627 = vrot.slane %v3207, 7
      %v3628 = vrot.slane %v3209, 7
      %v3629 = vrot.slane %v3217, 7
      %v3630 = vrot.slane %v3225, 7
      %v3631 = vrot.slane %v3224, 7
      %v3632 = vrot.slane %v3226, 7
      %v3633 = vrot.slane %v3268, 7
      %v3634 = vrot.slane %v3276, 7
      %v3635 = vrot.slane %v3275, 7
      %v3636 = vrot.slane %v3277, 7
      %v3637 = vrot.slane %v3285, 7
      %v3638 = vrot.slane %v3293, 7
      %v3639 = vrot.slane %v3292, 7
      %v3640 = vrot.slane %v3294, 7
      %v3641 = vrot.slane %v3336, 7
      %v3642 = vrot.slane %v3344, 7
      %v3643 = vrot.slane %v3343, 7
      %v3644 = vrot.slane %v3345, 7
      %v3645 = vrot.slane %v3353, 7
      %v3646 = vrot.slane %v3361, 7
      %v3647 = vrot.slane %v3360, 7
      %v3648 = vrot.slane %v3362, 7
      %v3649 = vrot.slane %v3404, 7
      %v3650 = vrot.slane %v3412, 7
      %v3651 = vrot.slane %v3411, 7
      %v3652 = vrot.slane %v3413, 7
      %v3653 = vrot.slane %v3421, 7
      %v3654 = vrot.slane %v3429, 7
      %v3655 = vrot.slane %v3428, 7
      %v3656 = vrot.slane %v3430, 7
      %vm3721 = vcmp.gt.f32.partialorder %v2928, %v3593
      %vm3722 = vcmp.gt.f32.partialorder %v2936, %v3594
      %vm3723 = vcmp.gt.f32.partialorder %v2935, %v3595
      %vm3724 = vcmp.gt.f32.partialorder %v2937, %v3596
      %vm3725 = vcmp.gt.f32.partialorder %v2945, %v3597
      %vm3726 = vcmp.gt.f32.partialorder %v2953, %v3598
      %vm3727 = vcmp.gt.f32.partialorder %v2952, %v3599
      %vm3728 = vcmp.gt.f32.partialorder %v2954, %v3600
      %vm3729 = vcmp.gt.f32.partialorder %v2996, %v3601
      %vm3730 = vcmp.gt.f32.partialorder %v3004, %v3602
      %vm3731 = vcmp.gt.f32.partialorder %v3003, %v3603
      %vm3732 = vcmp.gt.f32.partialorder %v3005, %v3604
      %vm3733 = vcmp.gt.f32.partialorder %v3013, %v3605
      %vm3734 = vcmp.gt.f32.partialorder %v3021, %v3606
      %vm3735 = vcmp.gt.f32.partialorder %v3020, %v3607
      %vm3736 = vcmp.gt.f32.partialorder %v3022, %v3608
      %vm3737 = vcmp.gt.f32.partialorder %v3064, %v3609
      %vm3738 = vcmp.gt.f32.partialorder %v3072, %v3610
      %vm3739 = vcmp.gt.f32.partialorder %v3071, %v3611
      %vm3740 = vcmp.gt.f32.partialorder %v3073, %v3612
      %vm3741 = vcmp.gt.f32.partialorder %v3081, %v3613
      %vm3742 = vcmp.gt.f32.partialorder %v3089, %v3614
      %vm3743 = vcmp.gt.f32.partialorder %v3088, %v3615
      %vm3744 = vcmp.gt.f32.partialorder %v3090, %v3616
      %vm3745 = vcmp.gt.f32.partialorder %v3132, %v3617
      %vm3746 = vcmp.gt.f32.partialorder %v3140, %v3618
      %vm3747 = vcmp.gt.f32.partialorder %v3139, %v3619
      %vm3748 = vcmp.gt.f32.partialorder %v3141, %v3620
      %vm3749 = vcmp.gt.f32.partialorder %v3149, %v3621
      %vm3750 = vcmp.gt.f32.partialorder %v3157, %v3622
      %vm3751 = vcmp.gt.f32.partialorder %v3156, %v3623
      %vm3752 = vcmp.gt.f32.partialorder %v3158, %v3624
      %vm3753 = vcmp.gt.f32.partialorder %v3200, %v3625
      %vm3754 = vcmp.gt.f32.partialorder %v3208, %v3626
      %vm3755 = vcmp.gt.f32.partialorder %v3207, %v3627
      %vm3756 = vcmp.gt.f32.partialorder %v3209, %v3628
      %vm3757 = vcmp.gt.f32.partialorder %v3217, %v3629
      %vm3758 = vcmp.gt.f32.partialorder %v3225, %v3630
      %vm3759 = vcmp.gt.f32.partialorder %v3224, %v3631
      %vm3760 = vcmp.gt.f32.partialorder %v3226, %v3632
      %vm3761 = vcmp.gt.f32.partialorder %v3268, %v3633
      %vm3762 = vcmp.gt.f32.partialorder %v3276, %v3634
      %vm3763 = vcmp.gt.f32.partialorder %v3275, %v3635
      %vm3764 = vcmp.gt.f32.partialorder %v3277, %v3636
      %vm3765 = vcmp.gt.f32.partialorder %v3285, %v3637
      %vm3766 = vcmp.gt.f32.partialorder %v3293, %v3638
      %vm3767 = vcmp.gt.f32.partialorder %v3292, %v3639
      %vm3768 = vcmp.gt.f32.partialorder %v3294, %v3640
      %vm3769 = vcmp.gt.f32.partialorder %v3336, %v3641
      %vm3770 = vcmp.gt.f32.partialorder %v3344, %v3642
      %vm3771 = vcmp.gt.f32.partialorder %v3343, %v3643
      %vm3772 = vcmp.gt.f32.partialorder %v3345, %v3644
      %vm3773 = vcmp.gt.f32.partialorder %v3353, %v3645
      %vm3774 = vcmp.gt.f32.partialorder %v3361, %v3646
      %vm3775 = vcmp.gt.f32.partialorder %v3360, %v3647
      %vm3776 = vcmp.gt.f32.partialorder %v3362, %v3648
      %vm3777 = vcmp.gt.f32.partialorder %v3404, %v3649
      %vm3778 = vcmp.gt.f32.partialorder %v3412, %v3650
      %vm3779 = vcmp.gt.f32.partialorder %v3411, %v3651
      %vm3780 = vcmp.gt.f32.partialorder %v3413, %v3652
      %vm3781 = vcmp.gt.f32.partialorder %v3421, %v3653
      %vm3782 = vcmp.gt.f32.partialorder %v3429, %v3654
      %vm3783 = vcmp.gt.f32.partialorder %v3428, %v3655
      %vm3784 = vcmp.gt.f32.partialorder %v3430, %v3656
      %v3785 = vsel %vm3721, %v2928, %v3593
      %v3786 = vsel %vm3722, %v2936, %v3594
      %v3787 = vsel %vm3723, %v2935, %v3595
      %v3788 = vsel %vm3724, %v2937, %v3596
      %v3789 = vsel %vm3725, %v2945, %v3597
      %v3790 = vsel %vm3726, %v2953, %v3598
      %v3791 = vsel %vm3727, %v2952, %v3599
      %v3792 = vsel %vm3728, %v2954, %v3600
      %v3793 = vsel %vm3729, %v2996, %v3601
      %v3794 = vsel %vm3730, %v3004, %v3602
      %v3795 = vsel %vm3731, %v3003, %v3603
      %v3796 = vsel %vm3732, %v3005, %v3604
      %v3797 = vsel %vm3733, %v3013, %v3605
      %v3798 = vsel %vm3734, %v3021, %v3606
      %v3799 = vsel %vm3735, %v3020, %v3607
      %v3800 = vsel %vm3736, %v3022, %v3608
      %v3801 = vsel %vm3737, %v3064, %v3609
      %v3802 = vsel %vm3738, %v3072, %v3610
      %v3803 = vsel %vm3739, %v3071, %v3611
      %v3804 = vsel %vm3740, %v3073, %v3612
      %v3805 = vsel %vm3741, %v3081, %v3613
      %v3806 = vsel %vm3742, %v3089, %v3614
      %v3807 = vsel %vm3743, %v3088, %v3615
      %v3808 = vsel %vm3744, %v3090, %v3616
      %v3809 = vsel %vm3745, %v3132, %v3617
      %v3810 = vsel %vm3746, %v3140, %v3618
      %v3811 = vsel %vm3747, %v3139, %v3619
      %v3812 = vsel %vm3748, %v3141, %v3620
      %v3813 = vsel %vm3749, %v3149, %v3621
      %v3814 = vsel %vm3750, %v3157, %v3622
      %v3815 = vsel %vm3751, %v3156, %v3623
      %v3816 = vsel %vm3752, %v3158, %v3624
      %v3817 = vsel %vm3753, %v3200, %v3625
      %v3818 = vsel %vm3754, %v3208, %v3626
      %v3819 = vsel %vm3755, %v3207, %v3627
      %v3820 = vsel %vm3756, %v3209, %v3628
      %v3821 = vsel %vm3757, %v3217, %v3629
      %v3822 = vsel %vm3758, %v3225, %v3630
      %v3823 = vsel %vm3759, %v3224, %v3631
      %v3824 = vsel %vm3760, %v3226, %v3632
      %v3825 = vsel %vm3761, %v3268, %v3633
      %v3826 = vsel %vm3762, %v3276, %v3634
      %v3827 = vsel %vm3763, %v3275, %v3635
      %v3828 = vsel %vm3764, %v3277, %v3636
      %v3829 = vsel %vm3765, %v3285, %v3637
      %v3830 = vsel %vm3766, %v3293, %v3638
      %v3831 = vsel %vm3767, %v3292, %v3639
      %v3832 = vsel %vm3768, %v3294, %v3640
      %v3833 = vsel %vm3769, %v3336, %v3641
      %v3834 = vsel %vm3770, %v3344, %v3642
      %v3835 = vsel %vm3771, %v3343, %v3643
      %v3836 = vsel %vm3772, %v3345, %v3644
      %v3837 = vsel %vm3773, %v3353, %v3645
      %v3838 = vsel %vm3774, %v3361, %v3646
      %v3839 = vsel %vm3775, %v3360, %v3647
      %v3840 = vsel %vm3776, %v3362, %v3648
      %v3841 = vsel %vm3777, %v3404, %v3649
      %v3842 = vsel %vm3778, %v3412, %v3650
      %v3843 = vsel %vm3779, %v3411, %v3651
      %v3844 = vsel %vm3780, %v3413, %v3652
      %v3845 = vsel %vm3781, %v3421, %v3653
      %v3846 = vsel %vm3782, %v3429, %v3654
      %v3847 = vsel %vm3783, %v3428, %v3655
      %v3848 = vsel %vm3784, %v3430, %v3656
      %v3849 = vsel %vm3721, 1, 0
      %v3850 = vsel %vm3722, 1, 0
      %v3851 = vsel %vm3723, 1, 0
      %v3852 = vsel %vm3724, 1, 0
      %v3853 = vsel %vm3725, 1, 0
      %v3854 = vsel %vm3726, 1, 0
      %v3855 = vsel %vm3727, 1, 0
      %v3856 = vsel %vm3728, 1, 0
      %v3857 = vsel %vm3729, 1, 0
      %v3858 = vsel %vm3730, 1, 0
      %v3859 = vsel %vm3731, 1, 0
      %v3860 = vsel %vm3732, 1, 0
      %v3861 = vsel %vm3733, 1, 0
      %v3862 = vsel %vm3734, 1, 0
      %v3863 = vsel %vm3735, 1, 0
      %v3864 = vsel %vm3736, 1, 0
      %v3865 = vsel %vm3737, 1, 0
      %v3866 = vsel %vm3738, 1, 0
      %v3867 = vsel %vm3739, 1, 0
      %v3868 = vsel %vm3740, 1, 0
      %v3869 = vsel %vm3741, 1, 0
      %v3870 = vsel %vm3742, 1, 0
      %v3871 = vsel %vm3743, 1, 0
      %v3872 = vsel %vm3744, 1, 0
      %v3873 = vsel %vm3745, 1, 0
      %v3874 = vsel %vm3746, 1, 0
      %v3875 = vsel %vm3747, 1, 0
      %v3876 = vsel %vm3748, 1, 0
      %v3877 = vsel %vm3749, 1, 0
      %v3878 = vsel %vm3750, 1, 0
      %v3879 = vsel %vm3751, 1, 0
      %v3880 = vsel %vm3752, 1, 0
      %v3881 = vsel %vm3753, 1, 0
      %v3882 = vsel %vm3754, 1, 0
      %v3883 = vsel %vm3755, 1, 0
      %v3884 = vsel %vm3756, 1, 0
      %v3885 = vsel %vm3757, 1, 0
      %v3886 = vsel %vm3758, 1, 0
      %v3887 = vsel %vm3759, 1, 0
      %v3888 = vsel %vm3760, 1, 0
      %v3889 = vsel %vm3761, 1, 0
      %v3890 = vsel %vm3762, 1, 0
      %v3891 = vsel %vm3763, 1, 0
      %v3892 = vsel %vm3764, 1, 0
      %v3893 = vsel %vm3765, 1, 0
      %v3894 = vsel %vm3766, 1, 0
      %v3895 = vsel %vm3767, 1, 0
      %v3896 = vsel %vm3768, 1, 0
      %v3897 = vsel %vm3769, 1, 0
      %v3898 = vsel %vm3770, 1, 0
      %v3899 = vsel %vm3771, 1, 0
      %v3900 = vsel %vm3772, 1, 0
      %v3901 = vsel %vm3773, 1, 0
      %v3902 = vsel %vm3774, 1, 0
      %v3903 = vsel %vm3775, 1, 0
      %v3904 = vsel %vm3776, 1, 0
      %v3905 = vsel %vm3777, 1, 0
      %v3906 = vsel %vm3778, 1, 0
      %v3907 = vsel %vm3779, 1, 0
      %v3908 = vsel %vm3780, 1, 0
      %v3909 = vsel %vm3781, 1, 0
      %v3910 = vsel %vm3782, 1, 0
      %v3911 = vsel %vm3783, 1, 0
      %v3912 = vsel %vm3784, 1, 0
      %v3977 = vrot.slane %v3785, 7
      %v3978 = vrot.slane %v3977, 2
      %v3979 = vrot.slane %v3786, 7
      %v3980 = vrot.slane %v3979, 2
      %v3981 = vrot.slane %v3787, 7
      %v3982 = vrot.slane %v3981, 2
      %v3983 = vrot.slane %v3788, 7
      %v3984 = vrot.slane %v3983, 2
      %v3985 = vrot.slane %v3789, 7
      %v3986 = vrot.slane %v3985, 2
      %v3987 = vrot.slane %v3790, 7
      %v3988 = vrot.slane %v3987, 2
      %v3989 = vrot.slane %v3791, 7
      %v3990 = vrot.slane %v3989, 2
      %v3991 = vrot.slane %v3792, 7
      %v3992 = vrot.slane %v3991, 2
      %v3993 = vrot.slane %v3793, 7
      %v3994 = vrot.slane %v3993, 2
      %v3995 = vrot.slane %v3794, 7
      %v3996 = vrot.slane %v3995, 2
      %v3997 = vrot.slane %v3795, 7
      %v3998 = vrot.slane %v3997, 2
      %v3999 = vrot.slane %v3796, 7
      %v4000 = vrot.slane %v3999, 2
      %v4001 = vrot.slane %v3797, 7
      %v4002 = vrot.slane %v4001, 2
      %v4003 = vrot.slane %v3798, 7
      %v4004 = vrot.slane %v4003, 2
      %v4005 = vrot.slane %v3799, 7
      %v4006 = vrot.slane %v4005, 2
      %v4007 = vrot.slane %v3800, 7
      %v4008 = vrot.slane %v4007, 2
      %v4009 = vrot.slane %v3801, 7
      %v4010 = vrot.slane %v4009, 2
      %v4011 = vrot.slane %v3802, 7
      %v4012 = vrot.slane %v4011, 2
      %v4013 = vrot.slane %v3803, 7
      %v4014 = vrot.slane %v4013, 2
      %v4015 = vrot.slane %v3804, 7
      %v4016 = vrot.slane %v4015, 2
      %v4017 = vrot.slane %v3805, 7
      %v4018 = vrot.slane %v4017, 2
      %v4019 = vrot.slane %v3806, 7
      %v4020 = vrot.slane %v4019, 2
      %v4021 = vrot.slane %v3807, 7
      %v4022 = vrot.slane %v4021, 2
      %v4023 = vrot.slane %v3808, 7
      %v4024 = vrot.slane %v4023, 2
      %v4025 = vrot.slane %v3809, 7
      %v4026 = vrot.slane %v4025, 2
      %v4027 = vrot.slane %v3810, 7
      %v4028 = vrot.slane %v4027, 2
      %v4029 = vrot.slane %v3811, 7
      %v4030 = vrot.slane %v4029, 2
      %v4031 = vrot.slane %v3812, 7
      %v4032 = vrot.slane %v4031, 2
      %v4033 = vrot.slane %v3813, 7
      %v4034 = vrot.slane %v4033, 2
      %v4035 = vrot.slane %v3814, 7
      %v4036 = vrot.slane %v4035, 2
      %v4037 = vrot.slane %v3815, 7
      %v4038 = vrot.slane %v4037, 2
      %v4039 = vrot.slane %v3816, 7
      %v4040 = vrot.slane %v4039, 2
      %v4041 = vrot.slane %v3817, 7
      %v4042 = vrot.slane %v4041, 2
      %v4043 = vrot.slane %v3818, 7
      %v4044 = vrot.slane %v4043, 2
      %v4045 = vrot.slane %v3819, 7
      %v4046 = vrot.slane %v4045, 2
      %v4047 = vrot.slane %v3820, 7
      %v4048 = vrot.slane %v4047, 2
      %v4049 = vrot.slane %v3821, 7
      %v4050 = vrot.slane %v4049, 2
      %v4051 = vrot.slane %v3822, 7
      %v4052 = vrot.slane %v4051, 2
      %v4053 = vrot.slane %v3823, 7
      %v4054 = vrot.slane %v4053, 2
      %v4055 = vrot.slane %v3824, 7
      %v4056 = vrot.slane %v4055, 2
      %v4057 = vrot.slane %v3825, 7
      %v4058 = vrot.slane %v4057, 2
      %v4059 = vrot.slane %v3826, 7
      %v4060 = vrot.slane %v4059, 2
      %v4061 = vrot.slane %v3827, 7
      %v4062 = vrot.slane %v4061, 2
      %v4063 = vrot.slane %v3828, 7
      %v4064 = vrot.slane %v4063, 2
      %v4065 = vrot.slane %v3829, 7
      %v4066 = vrot.slane %v4065, 2
      %v4067 = vrot.slane %v3830, 7
      %v4068 = vrot.slane %v4067, 2
      %v4069 = vrot.slane %v3831, 7
      %v4070 = vrot.slane %v4069, 2
      %v4071 = vrot.slane %v3832, 7
      %v4072 = vrot.slane %v4071, 2
      %v4073 = vrot.slane %v3833, 7
      %v4074 = vrot.slane %v4073, 2
      %v4075 = vrot.slane %v3834, 7
      %v4076 = vrot.slane %v4075, 2
      %v4077 = vrot.slane %v3835, 7
      %v4078 = vrot.slane %v4077, 2
      %v4079 = vrot.slane %v3836, 7
      %v4080 = vrot.slane %v4079, 2
      %v4081 = vrot.slane %v3837, 7
      %v4082 = vrot.slane %v4081, 2
      %v4083 = vrot.slane %v3838, 7
      %v4084 = vrot.slane %v4083, 2
      %v4085 = vrot.slane %v3839, 7
      %v4086 = vrot.slane %v4085, 2
      %v4087 = vrot.slane %v3840, 7
      %v4088 = vrot.slane %v4087, 2
      %v4089 = vrot.slane %v3841, 7
      %v4090 = vrot.slane %v4089, 2
      %v4091 = vrot.slane %v3842, 7
      %v4092 = vrot.slane %v4091, 2
      %v4093 = vrot.slane %v3843, 7
      %v4094 = vrot.slane %v4093, 2
      %v4095 = vrot.slane %v3844, 7
      %v4096 = vrot.slane %v4095, 2
      %v4097 = vrot.slane %v3845, 7
      %v4098 = vrot.slane %v4097, 2
      %v4099 = vrot.slane %v3846, 7
      %v4100 = vrot.slane %v4099, 2
      %v4101 = vrot.slane %v3847, 7
      %v4102 = vrot.slane %v4101, 2
      %v4103 = vrot.slane %v3848, 7
      %v4104 = vrot.slane %v4103, 2
      %vm4169 = vcmp.gt.f32.partialorder %v2962, %v3978
      %vm4170 = vcmp.gt.f32.partialorder %v2970, %v3980
      %vm4171 = vcmp.gt.f32.partialorder %v2969, %v3982
      %vm4172 = vcmp.gt.f32.partialorder %v2971, %v3984
      %vm4173 = vcmp.gt.f32.partialorder %v2979, %v3986
      %vm4174 = vcmp.gt.f32.partialorder %v2987, %v3988
      %vm4175 = vcmp.gt.f32.partialorder %v2986, %v3990
      %vm4176 = vcmp.gt.f32.partialorder %v2988, %v3992
      %vm4177 = vcmp.gt.f32.partialorder %v3030, %v3994
      %vm4178 = vcmp.gt.f32.partialorder %v3038, %v3996
      %vm4179 = vcmp.gt.f32.partialorder %v3037, %v3998
      %vm4180 = vcmp.gt.f32.partialorder %v3039, %v4000
      %vm4181 = vcmp.gt.f32.partialorder %v3047, %v4002
      %vm4182 = vcmp.gt.f32.partialorder %v3055, %v4004
      %vm4183 = vcmp.gt.f32.partialorder %v3054, %v4006
      %vm4184 = vcmp.gt.f32.partialorder %v3056, %v4008
      %vm4185 = vcmp.gt.f32.partialorder %v3098, %v4010
      %vm4186 = vcmp.gt.f32.partialorder %v3106, %v4012
      %vm4187 = vcmp.gt.f32.partialorder %v3105, %v4014
      %vm4188 = vcmp.gt.f32.partialorder %v3107, %v4016
      %vm4189 = vcmp.gt.f32.partialorder %v3115, %v4018
      %vm4190 = vcmp.gt.f32.partialorder %v3123, %v4020
      %vm4191 = vcmp.gt.f32.partialorder %v3122, %v4022
      %vm4192 = vcmp.gt.f32.partialorder %v3124, %v4024
      %vm4193 = vcmp.gt.f32.partialorder %v3166, %v4026
      %vm4194 = vcmp.gt.f32.partialorder %v3174, %v4028
      %vm4195 = vcmp.gt.f32.partialorder %v3173, %v4030
      %vm4196 = vcmp.gt.f32.partialorder %v3175, %v4032
      %vm4197 = vcmp.gt.f32.partialorder %v3183, %v4034
      %vm4198 = vcmp.gt.f32.partialorder %v3191, %v4036
      %vm4199 = vcmp.gt.f32.partialorder %v3190, %v4038
      %vm4200 = vcmp.gt.f32.partialorder %v3192, %v4040
      %vm4201 = vcmp.gt.f32.partialorder %v3234, %v4042
      %vm4202 = vcmp.gt.f32.partialorder %v3242, %v4044
      %vm4203 = vcmp.gt.f32.partialorder %v3241, %v4046
      %vm4204 = vcmp.gt.f32.partialorder %v3243, %v4048
      %vm4205 = vcmp.gt.f32.partialorder %v3251, %v4050
      %vm4206 = vcmp.gt.f32.partialorder %v3259, %v4052
      %vm4207 = vcmp.gt.f32.partialorder %v3258, %v4054
      %vm4208 = vcmp.gt.f32.partialorder %v3260, %v4056
      %vm4209 = vcmp.gt.f32.partialorder %v3302, %v4058
      %vm4210 = vcmp.gt.f32.partialorder %v3310, %v4060
      %vm4211 = vcmp.gt.f32.partialorder %v3309, %v4062
      %vm4212 = vcmp.gt.f32.partialorder %v3311, %v4064
      %vm4213 = vcmp.gt.f32.partialorder %v3319, %v4066
      %vm4214 = vcmp.gt.f32.partialorder %v3327, %v4068
      %vm4215 = vcmp.gt.f32.partialorder %v3326, %v4070
      %vm4216 = vcmp.gt.f32.partialorder %v3328, %v4072
      %vm4217 = vcmp.gt.f32.partialorder %v3370, %v4074
      %vm4218 = vcmp.gt.f32.partialorder %v3378, %v4076
      %vm4219 = vcmp.gt.f32.partialorder %v3377, %v4078
      %vm4220 = vcmp.gt.f32.partialorder %v3379, %v4080
      %vm4221 = vcmp.gt.f32.partialorder %v3387, %v4082
      %vm4222 = vcmp.gt.f32.partialorder %v3395, %v4084
      %vm4223 = vcmp.gt.f32.partialorder %v3394, %v4086
      %vm4224 = vcmp.gt.f32.partialorder %v3396, %v4088
      %vm4225 = vcmp.gt.f32.partialorder %v3438, %v4090
      %vm4226 = vcmp.gt.f32.partialorder %v3446, %v4092
      %vm4227 = vcmp.gt.f32.partialorder %v3445, %v4094
      %vm4228 = vcmp.gt.f32.partialorder %v3447, %v4096
      %vm4229 = vcmp.gt.f32.partialorder %v3455, %v4098
      %vm4230 = vcmp.gt.f32.partialorder %v3463, %v4100
      %vm4231 = vcmp.gt.f32.partialorder %v3462, %v4102
      %vm4232 = vcmp.gt.f32.partialorder %v3464, %v4104
      %v4233 = vsel %vm4169, %v2962, %v3978
      %v4234 = vsel %vm4170, %v2970, %v3980
      %v4235 = vsel %vm4171, %v2969, %v3982
      %v4236 = vsel %vm4172, %v2971, %v3984
      %v4237 = vsel %vm4173, %v2979, %v3986
      %v4238 = vsel %vm4174, %v2987, %v3988
      %v4239 = vsel %vm4175, %v2986, %v3990
      %v4240 = vsel %vm4176, %v2988, %v3992
      %v4241 = vsel %vm4177, %v3030, %v3994
      %v4242 = vsel %vm4178, %v3038, %v3996
      %v4243 = vsel %vm4179, %v3037, %v3998
      %v4244 = vsel %vm4180, %v3039, %v4000
      %v4245 = vsel %vm4181, %v3047, %v4002
      %v4246 = vsel %vm4182, %v3055, %v4004
      %v4247 = vsel %vm4183, %v3054, %v4006
      %v4248 = vsel %vm4184, %v3056, %v4008
      %v4249 = vsel %vm4185, %v3098, %v4010
      %v4250 = vsel %vm4186, %v3106, %v4012
      %v4251 = vsel %vm4187, %v3105, %v4014
      %v4252 = vsel %vm4188, %v3107, %v4016
      %v4253 = vsel %vm4189, %v3115, %v4018
      %v4254 = vsel %vm4190, %v3123, %v4020
      %v4255 = vsel %vm4191, %v3122, %v4022
      %v4256 = vsel %vm4192, %v3124, %v4024
      %v4257 = vsel %vm4193, %v3166, %v4026
      %v4258 = vsel %vm4194, %v3174, %v4028
      %v4259 = vsel %vm4195, %v3173, %v4030
      %v4260 = vsel %vm4196, %v3175, %v4032
      %v4261 = vsel %vm4197, %v3183, %v4034
      %v4262 = vsel %vm4198, %v3191, %v4036
      %v4263 = vsel %vm4199, %v3190, %v4038
      %v4264 = vsel %vm4200, %v3192, %v4040
      %v4265 = vsel %vm4201, %v3234, %v4042
      %v4266 = vsel %vm4202, %v3242, %v4044
      %v4267 = vsel %vm4203, %v3241, %v4046
      %v4268 = vsel %vm4204, %v3243, %v4048
      %v4269 = vsel %vm4205, %v3251, %v4050
      %v4270 = vsel %vm4206, %v3259, %v4052
      %v4271 = vsel %vm4207, %v3258, %v4054
      %v4272 = vsel %vm4208, %v3260, %v4056
      %v4273 = vsel %vm4209, %v3302, %v4058
      %v4274 = vsel %vm4210, %v3310, %v4060
      %v4275 = vsel %vm4211, %v3309, %v4062
      %v4276 = vsel %vm4212, %v3311, %v4064
      %v4277 = vsel %vm4213, %v3319, %v4066
      %v4278 = vsel %vm4214, %v3327, %v4068
      %v4279 = vsel %vm4215, %v3326, %v4070
      %v4280 = vsel %vm4216, %v3328, %v4072
      %v4281 = vsel %vm4217, %v3370, %v4074
      %v4282 = vsel %vm4218, %v3378, %v4076
      %v4283 = vsel %vm4219, %v3377, %v4078
      %v4284 = vsel %vm4220, %v3379, %v4080
      %v4285 = vsel %vm4221, %v3387, %v4082
      %v4286 = vsel %vm4222, %v3395, %v4084
      %v4287 = vsel %vm4223, %v3394, %v4086
      %v4288 = vsel %vm4224, %v3396, %v4088
      %v4289 = vsel %vm4225, %v3438, %v4090
      %v4290 = vsel %vm4226, %v3446, %v4092
      %v4291 = vsel %vm4227, %v3445, %v4094
      %v4292 = vsel %vm4228, %v3447, %v4096
      %v4293 = vsel %vm4229, %v3455, %v4098
      %v4294 = vsel %vm4230, %v3463, %v4100
      %v4295 = vsel %vm4231, %v3462, %v4102
      %v4296 = vsel %vm4232, %v3464, %v4104
      %v4297 = vrot.slane %v3849, 7
      %v4298 = vrot.slane %v4297, 2
      %v4299 = vrot.slane %v3850, 7
      %v4300 = vrot.slane %v4299, 2
      %v4301 = vrot.slane %v3851, 7
      %v4302 = vrot.slane %v4301, 2
      %v4303 = vrot.slane %v3852, 7
      %v4304 = vrot.slane %v4303, 2
      %v4305 = vrot.slane %v3853, 7
      %v4306 = vrot.slane %v4305, 2
      %v4307 = vrot.slane %v3854, 7
      %v4308 = vrot.slane %v4307, 2
      %v4309 = vrot.slane %v3855, 7
      %v4310 = vrot.slane %v4309, 2
      %v4311 = vrot.slane %v3856, 7
      %v4312 = vrot.slane %v4311, 2
      %v4313 = vrot.slane %v3857, 7
      %v4314 = vrot.slane %v4313, 2
      %v4315 = vrot.slane %v3858, 7
      %v4316 = vrot.slane %v4315, 2
      %v4317 = vrot.slane %v3859, 7
      %v4318 = vrot.slane %v4317, 2
      %v4319 = vrot.slane %v3860, 7
      %v4320 = vrot.slane %v4319, 2
      %v4321 = vrot.slane %v3861, 7
      %v4322 = vrot.slane %v4321, 2
      %v4323 = vrot.slane %v3862, 7
      %v4324 = vrot.slane %v4323, 2
      %v4325 = vrot.slane %v3863, 7
      %v4326 = vrot.slane %v4325, 2
      %v4327 = vrot.slane %v3864, 7
      %v4328 = vrot.slane %v4327, 2
      %v4329 = vrot.slane %v3865, 7
      %v4330 = vrot.slane %v4329, 2
      %v4331 = vrot.slane %v3866, 7
      %v4332 = vrot.slane %v4331, 2
      %v4333 = vrot.slane %v3867, 7
      %v4334 = vrot.slane %v4333, 2
      %v4335 = vrot.slane %v3868, 7
      %v4336 = vrot.slane %v4335, 2
      %v4337 = vrot.slane %v3869, 7
      %v4338 = vrot.slane %v4337, 2
      %v4339 = vrot.slane %v3870, 7
      %v4340 = vrot.slane %v4339, 2
      %v4341 = vrot.slane %v3871, 7
      %v4342 = vrot.slane %v4341, 2
      %v4343 = vrot.slane %v3872, 7
      %v4344 = vrot.slane %v4343, 2
      %v4345 = vrot.slane %v3873, 7
      %v4346 = vrot.slane %v4345, 2
      %v4347 = vrot.slane %v3874, 7
      %v4348 = vrot.slane %v4347, 2
      %v4349 = vrot.slane %v3875, 7
      %v4350 = vrot.slane %v4349, 2
      %v4351 = vrot.slane %v3876, 7
      %v4352 = vrot.slane %v4351, 2
      %v4353 = vrot.slane %v3877, 7
      %v4354 = vrot.slane %v4353, 2
      %v4355 = vrot.slane %v3878, 7
      %v4356 = vrot.slane %v4355, 2
      %v4357 = vrot.slane %v3879, 7
      %v4358 = vrot.slane %v4357, 2
      %v4359 = vrot.slane %v3880, 7
      %v4360 = vrot.slane %v4359, 2
      %v4361 = vrot.slane %v3881, 7
      %v4362 = vrot.slane %v4361, 2
      %v4363 = vrot.slane %v3882, 7
      %v4364 = vrot.slane %v4363, 2
      %v4365 = vrot.slane %v3883, 7
      %v4366 = vrot.slane %v4365, 2
      %v4367 = vrot.slane %v3884, 7
      %v4368 = vrot.slane %v4367, 2
      %v4369 = vrot.slane %v3885, 7
      %v4370 = vrot.slane %v4369, 2
      %v4371 = vrot.slane %v3886, 7
      %v4372 = vrot.slane %v4371, 2
      %v4373 = vrot.slane %v3887, 7
      %v4374 = vrot.slane %v4373, 2
      %v4375 = vrot.slane %v3888, 7
      %v4376 = vrot.slane %v4375, 2
      %v4377 = vrot.slane %v3889, 7
      %v4378 = vrot.slane %v4377, 2
      %v4379 = vrot.slane %v3890, 7
      %v4380 = vrot.slane %v4379, 2
      %v4381 = vrot.slane %v3891, 7
      %v4382 = vrot.slane %v4381, 2
      %v4383 = vrot.slane %v3892, 7
      %v4384 = vrot.slane %v4383, 2
      %v4385 = vrot.slane %v3893, 7
      %v4386 = vrot.slane %v4385, 2
      %v4387 = vrot.slane %v3894, 7
      %v4388 = vrot.slane %v4387, 2
      %v4389 = vrot.slane %v3895, 7
      %v4390 = vrot.slane %v4389, 2
      %v4391 = vrot.slane %v3896, 7
      %v4392 = vrot.slane %v4391, 2
      %v4393 = vrot.slane %v3897, 7
      %v4394 = vrot.slane %v4393, 2
      %v4395 = vrot.slane %v3898, 7
      %v4396 = vrot.slane %v4395, 2
      %v4397 = vrot.slane %v3899, 7
      %v4398 = vrot.slane %v4397, 2
      %v4399 = vrot.slane %v3900, 7
      %v4400 = vrot.slane %v4399, 2
      %v4401 = vrot.slane %v3901, 7
      %v4402 = vrot.slane %v4401, 2
      %v4403 = vrot.slane %v3902, 7
      %v4404 = vrot.slane %v4403, 2
      %v4405 = vrot.slane %v3903, 7
      %v4406 = vrot.slane %v4405, 2
      %v4407 = vrot.slane %v3904, 7
      %v4408 = vrot.slane %v4407, 2
      %v4409 = vrot.slane %v3905, 7
      %v4410 = vrot.slane %v4409, 2
      %v4411 = vrot.slane %v3906, 7
      %v4412 = vrot.slane %v4411, 2
      %v4413 = vrot.slane %v3907, 7
      %v4414 = vrot.slane %v4413, 2
      %v4415 = vrot.slane %v3908, 7
      %v4416 = vrot.slane %v4415, 2
      %v4417 = vrot.slane %v3909, 7
      %v4418 = vrot.slane %v4417, 2
      %v4419 = vrot.slane %v3910, 7
      %v4420 = vrot.slane %v4419, 2
      %v4421 = vrot.slane %v3911, 7
      %v4422 = vrot.slane %v4421, 2
      %v4423 = vrot.slane %v3912, 7
      %v4424 = vrot.slane %v4423, 2
      %v4425 = vsel %vm4169, 16, %v4298
      %v4426 = vsel %vm4170, 16, %v4300
      %v4427 = vsel %vm4171, 16, %v4302
      %v4428 = vsel %vm4172, 16, %v4304
      %v4429 = vsel %vm4173, 16, %v4306
      %v4430 = vsel %vm4174, 16, %v4308
      %v4431 = vsel %vm4175, 16, %v4310
      %v4432 = vsel %vm4176, 16, %v4312
      %v4433 = vsel %vm4177, 16, %v4314
      %v4434 = vsel %vm4178, 16, %v4316
      %v4435 = vsel %vm4179, 16, %v4318
      %v4436 = vsel %vm4180, 16, %v4320
      %v4437 = vsel %vm4181, 16, %v4322
      %v4438 = vsel %vm4182, 16, %v4324
      %v4439 = vsel %vm4183, 16, %v4326
      %v4440 = vsel %vm4184, 16, %v4328
      %v4441 = vsel %vm4185, 16, %v4330
      %v4442 = vsel %vm4186, 16, %v4332
      %v4443 = vsel %vm4187, 16, %v4334
      %v4444 = vsel %vm4188, 16, %v4336
      %v4445 = vsel %vm4189, 16, %v4338
      %v4446 = vsel %vm4190, 16, %v4340
      %v4447 = vsel %vm4191, 16, %v4342
      %v4448 = vsel %vm4192, 16, %v4344
      %v4449 = vsel %vm4193, 16, %v4346
      %v4450 = vsel %vm4194, 16, %v4348
      %v4451 = vsel %vm4195, 16, %v4350
      %v4452 = vsel %vm4196, 16, %v4352
      %v4453 = vsel %vm4197, 16, %v4354
      %v4454 = vsel %vm4198, 16, %v4356
      %v4455 = vsel %vm4199, 16, %v4358
      %v4456 = vsel %vm4200, 16, %v4360
      %v4457 = vsel %vm4201, 16, %v4362
      %v4458 = vsel %vm4202, 16, %v4364
      %v4459 = vsel %vm4203, 16, %v4366
      %v4460 = vsel %vm4204, 16, %v4368
      %v4461 = vsel %vm4205, 16, %v4370
      %v4462 = vsel %vm4206, 16, %v4372
      %v4463 = vsel %vm4207, 16, %v4374
      %v4464 = vsel %vm4208, 16, %v4376
      %v4465 = vsel %vm4209, 16, %v4378
      %v4466 = vsel %vm4210, 16, %v4380
      %v4467 = vsel %vm4211, 16, %v4382
      %v4468 = vsel %vm4212, 16, %v4384
      %v4469 = vsel %vm4213, 16, %v4386
      %v4470 = vsel %vm4214, 16, %v4388
      %v4471 = vsel %vm4215, 16, %v4390
      %v4472 = vsel %vm4216, 16, %v4392
      %v4473 = vsel %vm4217, 16, %v4394
      %v4474 = vsel %vm4218, 16, %v4396
      %v4475 = vsel %vm4219, 16, %v4398
      %v4476 = vsel %vm4220, 16, %v4400
      %v4477 = vsel %vm4221, 16, %v4402
      %v4478 = vsel %vm4222, 16, %v4404
      %v4479 = vsel %vm4223, 16, %v4406
      %v4480 = vsel %vm4224, 16, %v4408
      %v4481 = vsel %vm4225, 16, %v4410
      %v4482 = vsel %vm4226, 16, %v4412
      %v4483 = vsel %vm4227, 16, %v4414
      %v4484 = vsel %vm4228, 16, %v4416
      %v4485 = vsel %vm4229, 16, %v4418
      %v4486 = vsel %vm4230, 16, %v4420
      %v4487 = vsel %vm4231, 16, %v4422
      %v4488 = vsel %vm4232, 16, %v4424
      %v4553 = vrot.slane %v4233, 7
      %v4554 = vrot.slane %v4234, 7
      %v4555 = vrot.slane %v4235, 7
      %v4556 = vrot.slane %v4236, 7
      %v4557 = vrot.slane %v4237, 7
      %v4558 = vrot.slane %v4238, 7
      %v4559 = vrot.slane %v4239, 7
      %v4560 = vrot.slane %v4240, 7
      %v4561 = vrot.slane %v4241, 7
      %v4562 = vrot.slane %v4242, 7
      %v4563 = vrot.slane %v4243, 7
      %v4564 = vrot.slane %v4244, 7
      %v4565 = vrot.slane %v4245, 7
      %v4566 = vrot.slane %v4246, 7
      %v4567 = vrot.slane %v4247, 7
      %v4568 = vrot.slane %v4248, 7
      %v4569 = vrot.slane %v4249, 7
      %v4570 = vrot.slane %v4250, 7
      %v4571 = vrot.slane %v4251, 7
      %v4572 = vrot.slane %v4252, 7
      %v4573 = vrot.slane %v4253, 7
      %v4574 = vrot.slane %v4254, 7
      %v4575 = vrot.slane %v4255, 7
      %v4576 = vrot.slane %v4256, 7
      %v4577 = vrot.slane %v4257, 7
      %v4578 = vrot.slane %v4258, 7
      %v4579 = vrot.slane %v4259, 7
      %v4580 = vrot.slane %v4260, 7
      %v4581 = vrot.slane %v4261, 7
      %v4582 = vrot.slane %v4262, 7
      %v4583 = vrot.slane %v4263, 7
      %v4584 = vrot.slane %v4264, 7
      %v4585 = vrot.slane %v4265, 7
      %v4586 = vrot.slane %v4266, 7
      %v4587 = vrot.slane %v4267, 7
      %v4588 = vrot.slane %v4268, 7
      %v4589 = vrot.slane %v4269, 7
      %v4590 = vrot.slane %v4270, 7
      %v4591 = vrot.slane %v4271, 7
      %v4592 = vrot.slane %v4272, 7
      %v4593 = vrot.slane %v4273, 7
      %v4594 = vrot.slane %v4274, 7
      %v4595 = vrot.slane %v4275, 7
      %v4596 = vrot.slane %v4276, 7
      %v4597 = vrot.slane %v4277, 7
      %v4598 = vrot.slane %v4278, 7
      %v4599 = vrot.slane %v4279, 7
      %v4600 = vrot.slane %v4280, 7
      %v4601 = vrot.slane %v4281, 7
      %v4602 = vrot.slane %v4282, 7
      %v4603 = vrot.slane %v4283, 7
      %v4604 = vrot.slane %v4284, 7
      %v4605 = vrot.slane %v4285, 7
      %v4606 = vrot.slane %v4286, 7
      %v4607 = vrot.slane %v4287, 7
      %v4608 = vrot.slane %v4288, 7
      %v4609 = vrot.slane %v4289, 7
      %v4610 = vrot.slane %v4290, 7
      %v4611 = vrot.slane %v4291, 7
      %v4612 = vrot.slane %v4292, 7
      %v4613 = vrot.slane %v4293, 7
      %v4614 = vrot.slane %v4294, 7
      %v4615 = vrot.slane %v4295, 7
      %v4616 = vrot.slane %v4296, 7
      %vm4681 = vcmp.gt.f32.partialorder %v2962, %v4553
      %vm4682 = vcmp.gt.f32.partialorder %v2970, %v4554
      %vm4683 = vcmp.gt.f32.partialorder %v2969, %v4555
      %vm4684 = vcmp.gt.f32.partialorder %v2971, %v4556
      %vm4685 = vcmp.gt.f32.partialorder %v2979, %v4557
      %vm4686 = vcmp.gt.f32.partialorder %v2987, %v4558
      %vm4687 = vcmp.gt.f32.partialorder %v2986, %v4559
      %vm4688 = vcmp.gt.f32.partialorder %v2988, %v4560
      %vm4689 = vcmp.gt.f32.partialorder %v3030, %v4561
      %vm4690 = vcmp.gt.f32.partialorder %v3038, %v4562
      %vm4691 = vcmp.gt.f32.partialorder %v3037, %v4563
      %vm4692 = vcmp.gt.f32.partialorder %v3039, %v4564
      %vm4693 = vcmp.gt.f32.partialorder %v3047, %v4565
      %vm4694 = vcmp.gt.f32.partialorder %v3055, %v4566
      %vm4695 = vcmp.gt.f32.partialorder %v3054, %v4567
      %vm4696 = vcmp.gt.f32.partialorder %v3056, %v4568
      %vm4697 = vcmp.gt.f32.partialorder %v3098, %v4569
      %vm4698 = vcmp.gt.f32.partialorder %v3106, %v4570
      %vm4699 = vcmp.gt.f32.partialorder %v3105, %v4571
      %vm4700 = vcmp.gt.f32.partialorder %v3107, %v4572
      %vm4701 = vcmp.gt.f32.partialorder %v3115, %v4573
      %vm4702 = vcmp.gt.f32.partialorder %v3123, %v4574
      %vm4703 = vcmp.gt.f32.partialorder %v3122, %v4575
      %vm4704 = vcmp.gt.f32.partialorder %v3124, %v4576
      %vm4705 = vcmp.gt.f32.partialorder %v3166, %v4577
      %vm4706 = vcmp.gt.f32.partialorder %v3174, %v4578
      %vm4707 = vcmp.gt.f32.partialorder %v3173, %v4579
      %vm4708 = vcmp.gt.f32.partialorder %v3175, %v4580
      %vm4709 = vcmp.gt.f32.partialorder %v3183, %v4581
      %vm4710 = vcmp.gt.f32.partialorder %v3191, %v4582
      %vm4711 = vcmp.gt.f32.partialorder %v3190, %v4583
      %vm4712 = vcmp.gt.f32.partialorder %v3192, %v4584
      %vm4713 = vcmp.gt.f32.partialorder %v3234, %v4585
      %vm4714 = vcmp.gt.f32.partialorder %v3242, %v4586
      %vm4715 = vcmp.gt.f32.partialorder %v3241, %v4587
      %vm4716 = vcmp.gt.f32.partialorder %v3243, %v4588
      %vm4717 = vcmp.gt.f32.partialorder %v3251, %v4589
      %vm4718 = vcmp.gt.f32.partialorder %v3259, %v4590
      %vm4719 = vcmp.gt.f32.partialorder %v3258, %v4591
      %vm4720 = vcmp.gt.f32.partialorder %v3260, %v4592
      %vm4721 = vcmp.gt.f32.partialorder %v3302, %v4593
      %vm4722 = vcmp.gt.f32.partialorder %v3310, %v4594
      %vm4723 = vcmp.gt.f32.partialorder %v3309, %v4595
      %vm4724 = vcmp.gt.f32.partialorder %v3311, %v4596
      %vm4725 = vcmp.gt.f32.partialorder %v3319, %v4597
      %vm4726 = vcmp.gt.f32.partialorder %v3327, %v4598
      %vm4727 = vcmp.gt.f32.partialorder %v3326, %v4599
      %vm4728 = vcmp.gt.f32.partialorder %v3328, %v4600
      %vm4729 = vcmp.gt.f32.partialorder %v3370, %v4601
      %vm4730 = vcmp.gt.f32.partialorder %v3378, %v4602
      %vm4731 = vcmp.gt.f32.partialorder %v3377, %v4603
      %vm4732 = vcmp.gt.f32.partialorder %v3379, %v4604
      %vm4733 = vcmp.gt.f32.partialorder %v3387, %v4605
      %vm4734 = vcmp.gt.f32.partialorder %v3395, %v4606
      %vm4735 = vcmp.gt.f32.partialorder %v3394, %v4607
      %vm4736 = vcmp.gt.f32.partialorder %v3396, %v4608
      %vm4737 = vcmp.gt.f32.partialorder %v3438, %v4609
      %vm4738 = vcmp.gt.f32.partialorder %v3446, %v4610
      %vm4739 = vcmp.gt.f32.partialorder %v3445, %v4611
      %vm4740 = vcmp.gt.f32.partialorder %v3447, %v4612
      %vm4741 = vcmp.gt.f32.partialorder %v3455, %v4613
      %vm4742 = vcmp.gt.f32.partialorder %v3463, %v4614
      %vm4743 = vcmp.gt.f32.partialorder %v3462, %v4615
      %vm4744 = vcmp.gt.f32.partialorder %v3464, %v4616
      %v4745 = vsel %vm4681, %v2962, %v4553
      %v4746 = vsel %vm4682, %v2970, %v4554
      %v4747 = vsel %vm4683, %v2969, %v4555
      %v4748 = vsel %vm4684, %v2971, %v4556
      %v4749 = vsel %vm4685, %v2979, %v4557
      %v4750 = vsel %vm4686, %v2987, %v4558
      %v4751 = vsel %vm4687, %v2986, %v4559
      %v4752 = vsel %vm4688, %v2988, %v4560
      %v4753 = vsel %vm4689, %v3030, %v4561
      %v4754 = vsel %vm4690, %v3038, %v4562
      %v4755 = vsel %vm4691, %v3037, %v4563
      %v4756 = vsel %vm4692, %v3039, %v4564
      %v4757 = vsel %vm4693, %v3047, %v4565
      %v4758 = vsel %vm4694, %v3055, %v4566
      %v4759 = vsel %vm4695, %v3054, %v4567
      %v4760 = vsel %vm4696, %v3056, %v4568
      %v4761 = vsel %vm4697, %v3098, %v4569
      %v4762 = vsel %vm4698, %v3106, %v4570
      %v4763 = vsel %vm4699, %v3105, %v4571
      %v4764 = vsel %vm4700, %v3107, %v4572
      %v4765 = vsel %vm4701, %v3115, %v4573
      %v4766 = vsel %vm4702, %v3123, %v4574
      %v4767 = vsel %vm4703, %v3122, %v4575
      %v4768 = vsel %vm4704, %v3124, %v4576
      %v4769 = vsel %vm4705, %v3166, %v4577
      %v4770 = vsel %vm4706, %v3174, %v4578
      %v4771 = vsel %vm4707, %v3173, %v4579
      %v4772 = vsel %vm4708, %v3175, %v4580
      %v4773 = vsel %vm4709, %v3183, %v4581
      %v4774 = vsel %vm4710, %v3191, %v4582
      %v4775 = vsel %vm4711, %v3190, %v4583
      %v4776 = vsel %vm4712, %v3192, %v4584
      %v4777 = vsel %vm4713, %v3234, %v4585
      %v4778 = vsel %vm4714, %v3242, %v4586
      %v4779 = vsel %vm4715, %v3241, %v4587
      %v4780 = vsel %vm4716, %v3243, %v4588
      %v4781 = vsel %vm4717, %v3251, %v4589
      %v4782 = vsel %vm4718, %v3259, %v4590
      %v4783 = vsel %vm4719, %v3258, %v4591
      %v4784 = vsel %vm4720, %v3260, %v4592
      %v4785 = vsel %vm4721, %v3302, %v4593
      %v4786 = vsel %vm4722, %v3310, %v4594
      %v4787 = vsel %vm4723, %v3309, %v4595
      %v4788 = vsel %vm4724, %v3311, %v4596
      %v4789 = vsel %vm4725, %v3319, %v4597
      %v4790 = vsel %vm4726, %v3327, %v4598
      %v4791 = vsel %vm4727, %v3326, %v4599
      %v4792 = vsel %vm4728, %v3328, %v4600
      %v4793 = vsel %vm4729, %v3370, %v4601
      %v4794 = vsel %vm4730, %v3378, %v4602
      %v4795 = vsel %vm4731, %v3377, %v4603
      %v4796 = vsel %vm4732, %v3379, %v4604
      %v4797 = vsel %vm4733, %v3387, %v4605
      %v4798 = vsel %vm4734, %v3395, %v4606
      %v4799 = vsel %vm4735, %v3394, %v4607
      %v4800 = vsel %vm4736, %v3396, %v4608
      %v4801 = vsel %vm4737, %v3438, %v4609
      %v4802 = vsel %vm4738, %v3446, %v4610
      %v4803 = vsel %vm4739, %v3445, %v4611
      %v4804 = vsel %vm4740, %v3447, %v4612
      %v4805 = vsel %vm4741, %v3455, %v4613
      %v4806 = vsel %vm4742, %v3463, %v4614
      %v4807 = vsel %vm4743, %v3462, %v4615
      %v4808 = vsel %vm4744, %v3464, %v4616
      %v4809 = vrot.slane %v4425, 7
      %v4810 = vrot.slane %v4426, 7
      %v4811 = vrot.slane %v4427, 7
      %v4812 = vrot.slane %v4428, 7
      %v4813 = vrot.slane %v4429, 7
      %v4814 = vrot.slane %v4430, 7
      %v4815 = vrot.slane %v4431, 7
      %v4816 = vrot.slane %v4432, 7
      %v4817 = vrot.slane %v4433, 7
      %v4818 = vrot.slane %v4434, 7
      %v4819 = vrot.slane %v4435, 7
      %v4820 = vrot.slane %v4436, 7
      %v4821 = vrot.slane %v4437, 7
      %v4822 = vrot.slane %v4438, 7
      %v4823 = vrot.slane %v4439, 7
      %v4824 = vrot.slane %v4440, 7
      %v4825 = vrot.slane %v4441, 7
      %v4826 = vrot.slane %v4442, 7
      %v4827 = vrot.slane %v4443, 7
      %v4828 = vrot.slane %v4444, 7
      %v4829 = vrot.slane %v4445, 7
      %v4830 = vrot.slane %v4446, 7
      %v4831 = vrot.slane %v4447, 7
      %v4832 = vrot.slane %v4448, 7
      %v4833 = vrot.slane %v4449, 7
      %v4834 = vrot.slane %v4450, 7
      %v4835 = vrot.slane %v4451, 7
      %v4836 = vrot.slane %v4452, 7
      %v4837 = vrot.slane %v4453, 7
      %v4838 = vrot.slane %v4454, 7
      %v4839 = vrot.slane %v4455, 7
      %v4840 = vrot.slane %v4456, 7
      %v4841 = vrot.slane %v4457, 7
      %v4842 = vrot.slane %v4458, 7
      %v4843 = vrot.slane %v4459, 7
      %v4844 = vrot.slane %v4460, 7
      %v4845 = vrot.slane %v4461, 7
      %v4846 = vrot.slane %v4462, 7
      %v4847 = vrot.slane %v4463, 7
      %v4848 = vrot.slane %v4464, 7
      %v4849 = vrot.slane %v4465, 7
      %v4850 = vrot.slane %v4466, 7
      %v4851 = vrot.slane %v4467, 7
      %v4852 = vrot.slane %v4468, 7
      %v4853 = vrot.slane %v4469, 7
      %v4854 = vrot.slane %v4470, 7
      %v4855 = vrot.slane %v4471, 7
      %v4856 = vrot.slane %v4472, 7
      %v4857 = vrot.slane %v4473, 7
      %v4858 = vrot.slane %v4474, 7
      %v4859 = vrot.slane %v4475, 7
      %v4860 = vrot.slane %v4476, 7
      %v4861 = vrot.slane %v4477, 7
      %v4862 = vrot.slane %v4478, 7
      %v4863 = vrot.slane %v4479, 7
      %v4864 = vrot.slane %v4480, 7
      %v4865 = vrot.slane %v4481, 7
      %v4866 = vrot.slane %v4482, 7
      %v4867 = vrot.slane %v4483, 7
      %v4868 = vrot.slane %v4484, 7
      %v4869 = vrot.slane %v4485, 7
      %v4870 = vrot.slane %v4486, 7
      %v4871 = vrot.slane %v4487, 7
      %v4872 = vrot.slane %v4488, 7
      %v4873 = vsel %vm4681, 17, %v4809
      %v4874 = vsel %vm4682, 17, %v4810
      %v4875 = vsel %vm4683, 17, %v4811
      %v4876 = vsel %vm4684, 17, %v4812
      %v4877 = vsel %vm4685, 17, %v4813
      %v4878 = vsel %vm4686, 17, %v4814
      %v4879 = vsel %vm4687, 17, %v4815
      %v4880 = vsel %vm4688, 17, %v4816
      %v4881 = vsel %vm4689, 17, %v4817
      %v4882 = vsel %vm4690, 17, %v4818
      %v4883 = vsel %vm4691, 17, %v4819
      %v4884 = vsel %vm4692, 17, %v4820
      %v4885 = vsel %vm4693, 17, %v4821
      %v4886 = vsel %vm4694, 17, %v4822
      %v4887 = vsel %vm4695, 17, %v4823
      %v4888 = vsel %vm4696, 17, %v4824
      %v4889 = vsel %vm4697, 17, %v4825
      %v4890 = vsel %vm4698, 17, %v4826
      %v4891 = vsel %vm4699, 17, %v4827
      %v4892 = vsel %vm4700, 17, %v4828
      %v4893 = vsel %vm4701, 17, %v4829
      %v4894 = vsel %vm4702, 17, %v4830
      %v4895 = vsel %vm4703, 17, %v4831
      %v4896 = vsel %vm4704, 17, %v4832
      %v4897 = vsel %vm4705, 17, %v4833
      %v4898 = vsel %vm4706, 17, %v4834
      %v4899 = vsel %vm4707, 17, %v4835
      %v4900 = vsel %vm4708, 17, %v4836
      %v4901 = vsel %vm4709, 17, %v4837
      %v4902 = vsel %vm4710, 17, %v4838
      %v4903 = vsel %vm4711, 17, %v4839
      %v4904 = vsel %vm4712, 17, %v4840
      %v4905 = vsel %vm4713, 17, %v4841
      %v4906 = vsel %vm4714, 17, %v4842
      %v4907 = vsel %vm4715, 17, %v4843
      %v4908 = vsel %vm4716, 17, %v4844
      %v4909 = vsel %vm4717, 17, %v4845
      %v4910 = vsel %vm4718, 17, %v4846
      %v4911 = vsel %vm4719, 17, %v4847
      %v4912 = vsel %vm4720, 17, %v4848
      %v4913 = vsel %vm4721, 17, %v4849
      %v4914 = vsel %vm4722, 17, %v4850
      %v4915 = vsel %vm4723, 17, %v4851
      %v4916 = vsel %vm4724, 17, %v4852
      %v4917 = vsel %vm4725, 17, %v4853
      %v4918 = vsel %vm4726, 17, %v4854
      %v4919 = vsel %vm4727, 17, %v4855
      %v4920 = vsel %vm4728, 17, %v4856
      %v4921 = vsel %vm4729, 17, %v4857
      %v4922 = vsel %vm4730, 17, %v4858
      %v4923 = vsel %vm4731, 17, %v4859
      %v4924 = vsel %vm4732, 17, %v4860
      %v4925 = vsel %vm4733, 17, %v4861
      %v4926 = vsel %vm4734, 17, %v4862
      %v4927 = vsel %vm4735, 17, %v4863
      %v4928 = vsel %vm4736, 17, %v4864
      %v4929 = vsel %vm4737, 17, %v4865
      %v4930 = vsel %vm4738, 17, %v4866
      %v4931 = vsel %vm4739, 17, %v4867
      %v4932 = vsel %vm4740, 17, %v4868
      %v4933 = vsel %vm4741, 17, %v4869
      %v4934 = vsel %vm4742, 17, %v4870
      %v4935 = vsel %vm4743, 17, %v4871
      %v4936 = vsel %vm4744, 17, %v4872
      %v4937 = vlaneseq
      %v4938 = vshrl.u32 %v4937, 7
      %v4939 = vmul.u32 %v4938, 2
      %v4940 = vadd.s32 %v4939, 32
      %v4941 = vadd.s32 %v4939, 64
      %v4942 = vadd.s32 %v4939, 96
      %v4943 = vadd.s32 %v4939, 128
      %v4944 = vadd.s32 %v4939, 160
      %v4945 = vadd.s32 %v4939, 192
      %v4946 = vadd.s32 %v4939, 224
      %v5011 = vlaneseq
      %v5012 = vshrl.u32 %v5011, 7
      %v5013 = vsub.s32 1, %v5012
      %v5014 = vrot.slane %v4745, %v5013
      %v5015 = vlaneseq
      %v5016 = vshrl.u32 %v5015, 7
      %v5017 = vsub.s32 1, %v5016
      %v5018 = vrot.slane %v4746, %v5017
      %v5019 = vlaneseq
      %v5020 = vshrl.u32 %v5019, 7
      %v5021 = vsub.s32 1, %v5020
      %v5022 = vrot.slane %v4747, %v5021
      %v5023 = vlaneseq
      %v5024 = vshrl.u32 %v5023, 7
      %v5025 = vsub.s32 1, %v5024
      %v5026 = vrot.slane %v4748, %v5025
      %v5027 = vlaneseq
      %v5028 = vshrl.u32 %v5027, 7
      %v5029 = vsub.s32 1, %v5028
      %v5030 = vrot.slane %v4749, %v5029
      %v5031 = vlaneseq
      %v5032 = vshrl.u32 %v5031, 7
      %v5033 = vsub.s32 1, %v5032
      %v5034 = vrot.slane %v4750, %v5033
      %v5035 = vlaneseq
      %v5036 = vshrl.u32 %v5035, 7
      %v5037 = vsub.s32 1, %v5036
      %v5038 = vrot.slane %v4751, %v5037
      %v5039 = vlaneseq
      %v5040 = vshrl.u32 %v5039, 7
      %v5041 = vsub.s32 1, %v5040
      %v5042 = vrot.slane %v4752, %v5041
      %v5043 = vlaneseq
      %v5044 = vshrl.u32 %v5043, 7
      %v5045 = vsub.s32 1, %v5044
      %v5046 = vrot.slane %v4753, %v5045
      %v5047 = vlaneseq
      %v5048 = vshrl.u32 %v5047, 7
      %v5049 = vsub.s32 1, %v5048
      %v5050 = vrot.slane %v4754, %v5049
      %v5051 = vlaneseq
      %v5052 = vshrl.u32 %v5051, 7
      %v5053 = vsub.s32 1, %v5052
      %v5054 = vrot.slane %v4755, %v5053
      %v5055 = vlaneseq
      %v5056 = vshrl.u32 %v5055, 7
      %v5057 = vsub.s32 1, %v5056
      %v5058 = vrot.slane %v4756, %v5057
      %v5059 = vlaneseq
      %v5060 = vshrl.u32 %v5059, 7
      %v5061 = vsub.s32 1, %v5060
      %v5062 = vrot.slane %v4757, %v5061
      %v5063 = vlaneseq
      %v5064 = vshrl.u32 %v5063, 7
      %v5065 = vsub.s32 1, %v5064
      %v5066 = vrot.slane %v4758, %v5065
      %v5067 = vlaneseq
      %v5068 = vshrl.u32 %v5067, 7
      %v5069 = vsub.s32 1, %v5068
      %v5070 = vrot.slane %v4759, %v5069
      %v5071 = vlaneseq
      %v5072 = vshrl.u32 %v5071, 7
      %v5073 = vsub.s32 1, %v5072
      %v5074 = vrot.slane %v4760, %v5073
      %v5075 = vlaneseq
      %v5076 = vshrl.u32 %v5075, 7
      %v5077 = vsub.s32 1, %v5076
      %v5078 = vrot.slane %v4761, %v5077
      %v5079 = vlaneseq
      %v5080 = vshrl.u32 %v5079, 7
      %v5081 = vsub.s32 1, %v5080
      %v5082 = vrot.slane %v4762, %v5081
      %v5083 = vlaneseq
      %v5084 = vshrl.u32 %v5083, 7
      %v5085 = vsub.s32 1, %v5084
      %v5086 = vrot.slane %v4763, %v5085
      %v5087 = vlaneseq
      %v5088 = vshrl.u32 %v5087, 7
      %v5089 = vsub.s32 1, %v5088
      %v5090 = vrot.slane %v4764, %v5089
      %v5091 = vlaneseq
      %v5092 = vshrl.u32 %v5091, 7
      %v5093 = vsub.s32 1, %v5092
      %v5094 = vrot.slane %v4765, %v5093
      %v5095 = vlaneseq
      %v5096 = vshrl.u32 %v5095, 7
      %v5097 = vsub.s32 1, %v5096
      %v5098 = vrot.slane %v4766, %v5097
      %v5099 = vlaneseq
      %v5100 = vshrl.u32 %v5099, 7
      %v5101 = vsub.s32 1, %v5100
      %v5102 = vrot.slane %v4767, %v5101
      %v5103 = vlaneseq
      %v5104 = vshrl.u32 %v5103, 7
      %v5105 = vsub.s32 1, %v5104
      %v5106 = vrot.slane %v4768, %v5105
      %v5107 = vlaneseq
      %v5108 = vshrl.u32 %v5107, 7
      %v5109 = vsub.s32 1, %v5108
      %v5110 = vrot.slane %v4769, %v5109
      %v5111 = vlaneseq
      %v5112 = vshrl.u32 %v5111, 7
      %v5113 = vsub.s32 1, %v5112
      %v5114 = vrot.slane %v4770, %v5113
      %v5115 = vlaneseq
      %v5116 = vshrl.u32 %v5115, 7
      %v5117 = vsub.s32 1, %v5116
      %v5118 = vrot.slane %v4771, %v5117
      %v5119 = vlaneseq
      %v5120 = vshrl.u32 %v5119, 7
      %v5121 = vsub.s32 1, %v5120
      %v5122 = vrot.slane %v4772, %v5121
      %v5123 = vlaneseq
      %v5124 = vshrl.u32 %v5123, 7
      %v5125 = vsub.s32 1, %v5124
      %v5126 = vrot.slane %v4773, %v5125
      %v5127 = vlaneseq
      %v5128 = vshrl.u32 %v5127, 7
      %v5129 = vsub.s32 1, %v5128
      %v5130 = vrot.slane %v4774, %v5129
      %v5131 = vlaneseq
      %v5132 = vshrl.u32 %v5131, 7
      %v5133 = vsub.s32 1, %v5132
      %v5134 = vrot.slane %v4775, %v5133
      %v5135 = vlaneseq
      %v5136 = vshrl.u32 %v5135, 7
      %v5137 = vsub.s32 1, %v5136
      %v5138 = vrot.slane %v4776, %v5137
      %v5139 = vlaneseq
      %v5140 = vshrl.u32 %v5139, 7
      %v5141 = vsub.s32 1, %v5140
      %v5142 = vrot.slane %v4777, %v5141
      %v5143 = vlaneseq
      %v5144 = vshrl.u32 %v5143, 7
      %v5145 = vsub.s32 1, %v5144
      %v5146 = vrot.slane %v4778, %v5145
      %v5147 = vlaneseq
      %v5148 = vshrl.u32 %v5147, 7
      %v5149 = vsub.s32 1, %v5148
      %v5150 = vrot.slane %v4779, %v5149
      %v5151 = vlaneseq
      %v5152 = vshrl.u32 %v5151, 7
      %v5153 = vsub.s32 1, %v5152
      %v5154 = vrot.slane %v4780, %v5153
      %v5155 = vlaneseq
      %v5156 = vshrl.u32 %v5155, 7
      %v5157 = vsub.s32 1, %v5156
      %v5158 = vrot.slane %v4781, %v5157
      %v5159 = vlaneseq
      %v5160 = vshrl.u32 %v5159, 7
      %v5161 = vsub.s32 1, %v5160
      %v5162 = vrot.slane %v4782, %v5161
      %v5163 = vlaneseq
      %v5164 = vshrl.u32 %v5163, 7
      %v5165 = vsub.s32 1, %v5164
      %v5166 = vrot.slane %v4783, %v5165
      %v5167 = vlaneseq
      %v5168 = vshrl.u32 %v5167, 7
      %v5169 = vsub.s32 1, %v5168
      %v5170 = vrot.slane %v4784, %v5169
      %v5171 = vlaneseq
      %v5172 = vshrl.u32 %v5171, 7
      %v5173 = vsub.s32 1, %v5172
      %v5174 = vrot.slane %v4785, %v5173
      %v5175 = vlaneseq
      %v5176 = vshrl.u32 %v5175, 7
      %v5177 = vsub.s32 1, %v5176
      %v5178 = vrot.slane %v4786, %v5177
      %v5179 = vlaneseq
      %v5180 = vshrl.u32 %v5179, 7
      %v5181 = vsub.s32 1, %v5180
      %v5182 = vrot.slane %v4787, %v5181
      %v5183 = vlaneseq
      %v5184 = vshrl.u32 %v5183, 7
      %v5185 = vsub.s32 1, %v5184
      %v5186 = vrot.slane %v4788, %v5185
      %v5187 = vlaneseq
      %v5188 = vshrl.u32 %v5187, 7
      %v5189 = vsub.s32 1, %v5188
      %v5190 = vrot.slane %v4789, %v5189
      %v5191 = vlaneseq
      %v5192 = vshrl.u32 %v5191, 7
      %v5193 = vsub.s32 1, %v5192
      %v5194 = vrot.slane %v4790, %v5193
      %v5195 = vlaneseq
      %v5196 = vshrl.u32 %v5195, 7
      %v5197 = vsub.s32 1, %v5196
      %v5198 = vrot.slane %v4791, %v5197
      %v5199 = vlaneseq
      %v5200 = vshrl.u32 %v5199, 7
      %v5201 = vsub.s32 1, %v5200
      %v5202 = vrot.slane %v4792, %v5201
      %v5203 = vlaneseq
      %v5204 = vshrl.u32 %v5203, 7
      %v5205 = vsub.s32 1, %v5204
      %v5206 = vrot.slane %v4793, %v5205
      %v5207 = vlaneseq
      %v5208 = vshrl.u32 %v5207, 7
      %v5209 = vsub.s32 1, %v5208
      %v5210 = vrot.slane %v4794, %v5209
      %v5211 = vlaneseq
      %v5212 = vshrl.u32 %v5211, 7
      %v5213 = vsub.s32 1, %v5212
      %v5214 = vrot.slane %v4795, %v5213
      %v5215 = vlaneseq
      %v5216 = vshrl.u32 %v5215, 7
      %v5217 = vsub.s32 1, %v5216
      %v5218 = vrot.slane %v4796, %v5217
      %v5219 = vlaneseq
      %v5220 = vshrl.u32 %v5219, 7
      %v5221 = vsub.s32 1, %v5220
      %v5222 = vrot.slane %v4797, %v5221
      %v5223 = vlaneseq
      %v5224 = vshrl.u32 %v5223, 7
      %v5225 = vsub.s32 1, %v5224
      %v5226 = vrot.slane %v4798, %v5225
      %v5227 = vlaneseq
      %v5228 = vshrl.u32 %v5227, 7
      %v5229 = vsub.s32 1, %v5228
      %v5230 = vrot.slane %v4799, %v5229
      %v5231 = vlaneseq
      %v5232 = vshrl.u32 %v5231, 7
      %v5233 = vsub.s32 1, %v5232
      %v5234 = vrot.slane %v4800, %v5233
      %v5235 = vlaneseq
      %v5236 = vshrl.u32 %v5235, 7
      %v5237 = vsub.s32 1, %v5236
      %v5238 = vrot.slane %v4801, %v5237
      %v5239 = vlaneseq
      %v5240 = vshrl.u32 %v5239, 7
      %v5241 = vsub.s32 1, %v5240
      %v5242 = vrot.slane %v4802, %v5241
      %v5243 = vlaneseq
      %v5244 = vshrl.u32 %v5243, 7
      %v5245 = vsub.s32 1, %v5244
      %v5246 = vrot.slane %v4803, %v5245
      %v5247 = vlaneseq
      %v5248 = vshrl.u32 %v5247, 7
      %v5249 = vsub.s32 1, %v5248
      %v5250 = vrot.slane %v4804, %v5249
      %v5251 = vlaneseq
      %v5252 = vshrl.u32 %v5251, 7
      %v5253 = vsub.s32 1, %v5252
      %v5254 = vrot.slane %v4805, %v5253
      %v5255 = vlaneseq
      %v5256 = vshrl.u32 %v5255, 7
      %v5257 = vsub.s32 1, %v5256
      %v5258 = vrot.slane %v4806, %v5257
      %v5259 = vlaneseq
      %v5260 = vshrl.u32 %v5259, 7
      %v5261 = vsub.s32 1, %v5260
      %v5262 = vrot.slane %v4807, %v5261
      %v5263 = vlaneseq
      %v5264 = vshrl.u32 %v5263, 7
      %v5265 = vsub.s32 1, %v5264
      %v5266 = vrot.slane %v4808, %v5265
      %vm5267 = vcmask 1042434
      %v5268 = vsel %vm5267, %v5018, %v5014
      %vm5269 = vcmask 1043459
      %v5270 = vsel %vm5269, %v5022, %v5268
      %vm5271 = vcmask 1044484
      %v5272 = vsel %vm5271, %v5026, %v5270
      %vm5273 = vcmask 1045509
      %v5274 = vsel %vm5273, %v5030, %v5272
      %vm5275 = vcmask 1046534
      %v5276 = vsel %vm5275, %v5034, %v5274
      %vm5277 = vcmask 1047559
      %v5278 = vsel %vm5277, %v5038, %v5276
      %v5279 = vsel %vm5267, %v5050, %v5046
      %v5280 = vsel %vm5269, %v5054, %v5279
      %v5281 = vsel %vm5271, %v5058, %v5280
      %v5282 = vsel %vm5273, %v5062, %v5281
      %v5283 = vsel %vm5275, %v5066, %v5282
      %v5284 = vsel %vm5277, %v5070, %v5283
      %v5285 = vsel %vm5267, %v5082, %v5078
      %v5286 = vsel %vm5269, %v5086, %v5285
      %v5287 = vsel %vm5271, %v5090, %v5286
      %v5288 = vsel %vm5273, %v5094, %v5287
      %v5289 = vsel %vm5275, %v5098, %v5288
      %v5290 = vsel %vm5277, %v5102, %v5289
      %v5291 = vsel %vm5267, %v5114, %v5110
      %v5292 = vsel %vm5269, %v5118, %v5291
      %v5293 = vsel %vm5271, %v5122, %v5292
      %v5294 = vsel %vm5273, %v5126, %v5293
      %v5295 = vsel %vm5275, %v5130, %v5294
      %v5296 = vsel %vm5277, %v5134, %v5295
      %v5297 = vsel %vm5267, %v5146, %v5142
      %v5298 = vsel %vm5269, %v5150, %v5297
      %v5299 = vsel %vm5271, %v5154, %v5298
      %v5300 = vsel %vm5273, %v5158, %v5299
      %v5301 = vsel %vm5275, %v5162, %v5300
      %v5302 = vsel %vm5277, %v5166, %v5301
      %v5303 = vsel %vm5267, %v5178, %v5174
      %v5304 = vsel %vm5269, %v5182, %v5303
      %v5305 = vsel %vm5271, %v5186, %v5304
      %v5306 = vsel %vm5273, %v5190, %v5305
      %v5307 = vsel %vm5275, %v5194, %v5306
      %v5308 = vsel %vm5277, %v5198, %v5307
      %v5309 = vsel %vm5267, %v5210, %v5206
      %v5310 = vsel %vm5269, %v5214, %v5309
      %v5311 = vsel %vm5271, %v5218, %v5310
      %v5312 = vsel %vm5273, %v5222, %v5311
      %v5313 = vsel %vm5275, %v5226, %v5312
      %v5314 = vsel %vm5277, %v5230, %v5313
      %v5315 = vsel %vm5267, %v5242, %v5238
      %v5316 = vsel %vm5269, %v5246, %v5315
      %v5317 = vsel %vm5271, %v5250, %v5316
      %v5318 = vsel %vm5273, %v5254, %v5317
      %v5319 = vsel %vm5275, %v5258, %v5318
      %v5320 = vsel %vm5277, %v5262, %v5319
      %vm5337 = vcmask 64513
      %5338 = vst.msk [vmem:[%s259 - $0x1] sm:$0xfe] %vm5337, %v5278
      %vm5339 = vcmask 57344
      %5340 = vst.msk [vmem:[%s259 + $0x7] sm:$0x1] %vm5339, %v5042
      %5341 = vst.msk [vmem:[%s259 + $0x7] sm:$0xfe] %vm5337, %v5284
      %5342 = vst.msk [vmem:[%s259 + $0xf] sm:$0x1] %vm5339, %v5074
      %5343 = vst.msk [vmem:[%s259 + $0xf] sm:$0xfe] %vm5337, %v5290
      %5344 = vst.msk [vmem:[%s259 + $0x17] sm:$0x1] %vm5339, %v5106
      %5345 = vst.msk [vmem:[%s259 + $0x17] sm:$0xfe] %vm5337, %v5296
      %5346 = vst.msk [vmem:[%s259 + $0x1f] sm:$0x1] %vm5339, %v5138
      %5347 = vst.msk [vmem:[%s259 + $0x1f] sm:$0xfe] %vm5337, %v5302
      %5348 = vst.msk [vmem:[%s259 + $0x27] sm:$0x1] %vm5339, %v5170
      %5349 = vst.msk [vmem:[%s259 + $0x27] sm:$0xfe] %vm5337, %v5308
      %5350 = vst.msk [vmem:[%s259 + $0x2f] sm:$0x1] %vm5339, %v5202
      %5351 = vst.msk [vmem:[%s259 + $0x2f] sm:$0xfe] %vm5337, %v5314
      %5352 = vst.msk [vmem:[%s259 + $0x37] sm:$0x1] %vm5339, %v5234
      %5353 = vst.msk [vmem:[%s259 + $0x37] sm:$0xfe] %vm5337, %v5320
      %5354 = vst.msk [vmem:[%s259 + $0x3f] sm:$0x1] %vm5339, %v5266
      %v5355 = vlaneseq
      %v5356 = vshrl.u32 %v5355, 7
      %v5357 = vsub.s32 1, %v5356
      %v5358 = vrot.slane %v4873, %v5357
      %v5359 = vlaneseq
      %v5360 = vshrl.u32 %v5359, 7
      %v5361 = vsub.s32 1, %v5360
      %v5362 = vrot.slane %v4874, %v5361
      %v5363 = vlaneseq
      %v5364 = vshrl.u32 %v5363, 7
      %v5365 = vsub.s32 1, %v5364
      %v5366 = vrot.slane %v4875, %v5365
      %v5367 = vlaneseq
      %v5368 = vshrl.u32 %v5367, 7
      %v5369 = vsub.s32 1, %v5368
      %v5370 = vrot.slane %v4876, %v5369
      %v5371 = vlaneseq
      %v5372 = vshrl.u32 %v5371, 7
      %v5373 = vsub.s32 1, %v5372
      %v5374 = vrot.slane %v4877, %v5373
      %v5375 = vlaneseq
      %v5376 = vshrl.u32 %v5375, 7
      %v5377 = vsub.s32 1, %v5376
      %v5378 = vrot.slane %v4878, %v5377
      %v5379 = vlaneseq
      %v5380 = vshrl.u32 %v5379, 7
      %v5381 = vsub.s32 1, %v5380
      %v5382 = vrot.slane %v4879, %v5381
      %v5383 = vlaneseq
      %v5384 = vshrl.u32 %v5383, 7
      %v5385 = vsub.s32 1, %v5384
      %v5386 = vrot.slane %v4880, %v5385
      %v5387 = vlaneseq
      %v5388 = vshrl.u32 %v5387, 7
      %v5389 = vsub.s32 1, %v5388
      %v5390 = vrot.slane %v4881, %v5389
      %v5391 = vlaneseq
      %v5392 = vshrl.u32 %v5391, 7
      %v5393 = vsub.s32 1, %v5392
      %v5394 = vrot.slane %v4882, %v5393
      %v5395 = vlaneseq
      %v5396 = vshrl.u32 %v5395, 7
      %v5397 = vsub.s32 1, %v5396
      %v5398 = vrot.slane %v4883, %v5397
      %v5399 = vlaneseq
      %v5400 = vshrl.u32 %v5399, 7
      %v5401 = vsub.s32 1, %v5400
      %v5402 = vrot.slane %v4884, %v5401
      %v5403 = vlaneseq
      %v5404 = vshrl.u32 %v5403, 7
      %v5405 = vsub.s32 1, %v5404
      %v5406 = vrot.slane %v4885, %v5405
      %v5407 = vlaneseq
      %v5408 = vshrl.u32 %v5407, 7
      %v5409 = vsub.s32 1, %v5408
      %v5410 = vrot.slane %v4886, %v5409
      %v5411 = vlaneseq
      %v5412 = vshrl.u32 %v5411, 7
      %v5413 = vsub.s32 1, %v5412
      %v5414 = vrot.slane %v4887, %v5413
      %v5415 = vlaneseq
      %v5416 = vshrl.u32 %v5415, 7
      %v5417 = vsub.s32 1, %v5416
      %v5418 = vrot.slane %v4888, %v5417
      %v5419 = vlaneseq
      %v5420 = vshrl.u32 %v5419, 7
      %v5421 = vsub.s32 1, %v5420
      %v5422 = vrot.slane %v4889, %v5421
      %v5423 = vlaneseq
      %v5424 = vshrl.u32 %v5423, 7
      %v5425 = vsub.s32 1, %v5424
      %v5426 = vrot.slane %v4890, %v5425
      %v5427 = vlaneseq
      %v5428 = vshrl.u32 %v5427, 7
      %v5429 = vsub.s32 1, %v5428
      %v5430 = vrot.slane %v4891, %v5429
      %v5431 = vlaneseq
      %v5432 = vshrl.u32 %v5431, 7
      %v5433 = vsub.s32 1, %v5432
      %v5434 = vrot.slane %v4892, %v5433
      %v5435 = vlaneseq
      %v5436 = vshrl.u32 %v5435, 7
      %v5437 = vsub.s32 1, %v5436
      %v5438 = vrot.slane %v4893, %v5437
      %v5439 = vlaneseq
      %v5440 = vshrl.u32 %v5439, 7
      %v5441 = vsub.s32 1, %v5440
      %v5442 = vrot.slane %v4894, %v5441
      %v5443 = vlaneseq
      %v5444 = vshrl.u32 %v5443, 7
      %v5445 = vsub.s32 1, %v5444
      %v5446 = vrot.slane %v4895, %v5445
      %v5447 = vlaneseq
      %v5448 = vshrl.u32 %v5447, 7
      %v5449 = vsub.s32 1, %v5448
      %v5450 = vrot.slane %v4896, %v5449
      %v5451 = vlaneseq
      %v5452 = vshrl.u32 %v5451, 7
      %v5453 = vsub.s32 1, %v5452
      %v5454 = vrot.slane %v4897, %v5453
      %v5455 = vlaneseq
      %v5456 = vshrl.u32 %v5455, 7
      %v5457 = vsub.s32 1, %v5456
      %v5458 = vrot.slane %v4898, %v5457
      %v5459 = vlaneseq
      %v5460 = vshrl.u32 %v5459, 7
      %v5461 = vsub.s32 1, %v5460
      %v5462 = vrot.slane %v4899, %v5461
      %v5463 = vlaneseq
      %v5464 = vshrl.u32 %v5463, 7
      %v5465 = vsub.s32 1, %v5464
      %v5466 = vrot.slane %v4900, %v5465
      %v5467 = vlaneseq
      %v5468 = vshrl.u32 %v5467, 7
      %v5469 = vsub.s32 1, %v5468
      %v5470 = vrot.slane %v4901, %v5469
      %v5471 = vlaneseq
      %v5472 = vshrl.u32 %v5471, 7
      %v5473 = vsub.s32 1, %v5472
      %v5474 = vrot.slane %v4902, %v5473
      %v5475 = vlaneseq
      %v5476 = vshrl.u32 %v5475, 7
      %v5477 = vsub.s32 1, %v5476
      %v5478 = vrot.slane %v4903, %v5477
      %v5479 = vlaneseq
      %v5480 = vshrl.u32 %v5479, 7
      %v5481 = vsub.s32 1, %v5480
      %v5482 = vrot.slane %v4904, %v5481
      %v5483 = vlaneseq
      %v5484 = vshrl.u32 %v5483, 7
      %v5485 = vsub.s32 1, %v5484
      %v5486 = vrot.slane %v4905, %v5485
      %v5487 = vlaneseq
      %v5488 = vshrl.u32 %v5487, 7
      %v5489 = vsub.s32 1, %v5488
      %v5490 = vrot.slane %v4906, %v5489
      %v5491 = vlaneseq
      %v5492 = vshrl.u32 %v5491, 7
      %v5493 = vsub.s32 1, %v5492
      %v5494 = vrot.slane %v4907, %v5493
      %v5495 = vlaneseq
      %v5496 = vshrl.u32 %v5495, 7
      %v5497 = vsub.s32 1, %v5496
      %v5498 = vrot.slane %v4908, %v5497
      %v5499 = vlaneseq
      %v5500 = vshrl.u32 %v5499, 7
      %v5501 = vsub.s32 1, %v5500
      %v5502 = vrot.slane %v4909, %v5501
      %v5503 = vlaneseq
      %v5504 = vshrl.u32 %v5503, 7
      %v5505 = vsub.s32 1, %v5504
      %v5506 = vrot.slane %v4910, %v5505
      %v5507 = vlaneseq
      %v5508 = vshrl.u32 %v5507, 7
      %v5509 = vsub.s32 1, %v5508
      %v5510 = vrot.slane %v4911, %v5509
      %v5511 = vlaneseq
      %v5512 = vshrl.u32 %v5511, 7
      %v5513 = vsub.s32 1, %v5512
      %v5514 = vrot.slane %v4912, %v5513
      %v5515 = vlaneseq
      %v5516 = vshrl.u32 %v5515, 7
      %v5517 = vsub.s32 1, %v5516
      %v5518 = vrot.slane %v4913, %v5517
      %v5519 = vlaneseq
      %v5520 = vshrl.u32 %v5519, 7
      %v5521 = vsub.s32 1, %v5520
      %v5522 = vrot.slane %v4914, %v5521
      %v5523 = vlaneseq
      %v5524 = vshrl.u32 %v5523, 7
      %v5525 = vsub.s32 1, %v5524
      %v5526 = vrot.slane %v4915, %v5525
      %v5527 = vlaneseq
      %v5528 = vshrl.u32 %v5527, 7
      %v5529 = vsub.s32 1, %v5528
      %v5530 = vrot.slane %v4916, %v5529
      %v5531 = vlaneseq
      %v5532 = vshrl.u32 %v5531, 7
      %v5533 = vsub.s32 1, %v5532
      %v5534 = vrot.slane %v4917, %v5533
      %v5535 = vlaneseq
      %v5536 = vshrl.u32 %v5535, 7
      %v5537 = vsub.s32 1, %v5536
      %v5538 = vrot.slane %v4918, %v5537
      %v5539 = vlaneseq
      %v5540 = vshrl.u32 %v5539, 7
      %v5541 = vsub.s32 1, %v5540
      %v5542 = vrot.slane %v4919, %v5541
      %v5543 = vlaneseq
      %v5544 = vshrl.u32 %v5543, 7
      %v5545 = vsub.s32 1, %v5544
      %v5546 = vrot.slane %v4920, %v5545
      %v5547 = vlaneseq
      %v5548 = vshrl.u32 %v5547, 7
      %v5549 = vsub.s32 1, %v5548
      %v5550 = vrot.slane %v4921, %v5549
      %v5551 = vlaneseq
      %v5552 = vshrl.u32 %v5551, 7
      %v5553 = vsub.s32 1, %v5552
      %v5554 = vrot.slane %v4922, %v5553
      %v5555 = vlaneseq
      %v5556 = vshrl.u32 %v5555, 7
      %v5557 = vsub.s32 1, %v5556
      %v5558 = vrot.slane %v4923, %v5557
      %v5559 = vlaneseq
      %v5560 = vshrl.u32 %v5559, 7
      %v5561 = vsub.s32 1, %v5560
      %v5562 = vrot.slane %v4924, %v5561
      %v5563 = vlaneseq
      %v5564 = vshrl.u32 %v5563, 7
      %v5565 = vsub.s32 1, %v5564
      %v5566 = vrot.slane %v4925, %v5565
      %v5567 = vlaneseq
      %v5568 = vshrl.u32 %v5567, 7
      %v5569 = vsub.s32 1, %v5568
      %v5570 = vrot.slane %v4926, %v5569
      %v5571 = vlaneseq
      %v5572 = vshrl.u32 %v5571, 7
      %v5573 = vsub.s32 1, %v5572
      %v5574 = vrot.slane %v4927, %v5573
      %v5575 = vlaneseq
      %v5576 = vshrl.u32 %v5575, 7
      %v5577 = vsub.s32 1, %v5576
      %v5578 = vrot.slane %v4928, %v5577
      %v5579 = vlaneseq
      %v5580 = vshrl.u32 %v5579, 7
      %v5581 = vsub.s32 1, %v5580
      %v5582 = vrot.slane %v4929, %v5581
      %v5583 = vlaneseq
      %v5584 = vshrl.u32 %v5583, 7
      %v5585 = vsub.s32 1, %v5584
      %v5586 = vrot.slane %v4930, %v5585
      %v5587 = vlaneseq
      %v5588 = vshrl.u32 %v5587, 7
      %v5589 = vsub.s32 1, %v5588
      %v5590 = vrot.slane %v4931, %v5589
      %v5591 = vlaneseq
      %v5592 = vshrl.u32 %v5591, 7
      %v5593 = vsub.s32 1, %v5592
      %v5594 = vrot.slane %v4932, %v5593
      %v5595 = vlaneseq
      %v5596 = vshrl.u32 %v5595, 7
      %v5597 = vsub.s32 1, %v5596
      %v5598 = vrot.slane %v4933, %v5597
      %v5599 = vlaneseq
      %v5600 = vshrl.u32 %v5599, 7
      %v5601 = vsub.s32 1, %v5600
      %v5602 = vrot.slane %v4934, %v5601
      %v5603 = vlaneseq
      %v5604 = vshrl.u32 %v5603, 7
      %v5605 = vsub.s32 1, %v5604
      %v5606 = vrot.slane %v4935, %v5605
      %v5607 = vlaneseq
      %v5608 = vshrl.u32 %v5607, 7
      %v5609 = vsub.s32 1, %v5608
      %v5610 = vrot.slane %v4936, %v5609
      %vm5611 = vcmask 1041409
      %v5612 = vsel %vm5611, %v5362, %v5358
      %v5613 = vsel %vm5267, %v5366, %v5612
      %v5614 = vsel %vm5269, %v5370, %v5613
      %v5615 = vsel %vm5271, %v5374, %v5614
      %v5616 = vsel %vm5273, %v5378, %v5615
      %v5617 = vsel %vm5275, %v5382, %v5616
      %v5618 = vsel %vm5277, %v5386, %v5617
      %v5619 = vsel %vm5611, %v5394, %v5390
      %v5620 = vsel %vm5267, %v5398, %v5619
      %v5621 = vsel %vm5269, %v5402, %v5620
      %v5622 = vsel %vm5271, %v5406, %v5621
      %v5623 = vsel %vm5273, %v5410, %v5622
      %v5624 = vsel %vm5275, %v5414, %v5623
      %v5625 = vsel %vm5277, %v5418, %v5624
      %v5626 = vsel %vm5611, %v5426, %v5422
      %v5627 = vsel %vm5267, %v5430, %v5626
      %v5628 = vsel %vm5269, %v5434, %v5627
      %v5629 = vsel %vm5271, %v5438, %v5628
      %v5630 = vsel %vm5273, %v5442, %v5629
      %v5631 = vsel %vm5275, %v5446, %v5630
      %v5632 = vsel %vm5277, %v5450, %v5631
      %v5633 = vsel %vm5611, %v5458, %v5454
      %v5634 = vsel %vm5267, %v5462, %v5633
      %v5635 = vsel %vm5269, %v5466, %v5634
      %v5636 = vsel %vm5271, %v5470, %v5635
      %v5637 = vsel %vm5273, %v5474, %v5636
      %v5638 = vsel %vm5275, %v5478, %v5637
      %v5639 = vsel %vm5277, %v5482, %v5638
      %v5640 = vsel %vm5611, %v5490, %v5486
      %v5641 = vsel %vm5267, %v5494, %v5640
      %v5642 = vsel %vm5269, %v5498, %v5641
      %v5643 = vsel %vm5271, %v5502, %v5642
      %v5644 = vsel %vm5273, %v5506, %v5643
      %v5645 = vsel %vm5275, %v5510, %v5644
      %v5646 = vsel %vm5277, %v5514, %v5645
      %v5647 = vsel %vm5611, %v5522, %v5518
      %v5648 = vsel %vm5267, %v5526, %v5647
      %v5649 = vsel %vm5269, %v5530, %v5648
      %v5650 = vsel %vm5271, %v5534, %v5649
      %v5651 = vsel %vm5273, %v5538, %v5650
      %v5652 = vsel %vm5275, %v5542, %v5651
      %v5653 = vsel %vm5277, %v5546, %v5652
      %v5654 = vsel %vm5611, %v5554, %v5550
      %v5655 = vsel %vm5267, %v5558, %v5654
      %v5656 = vsel %vm5269, %v5562, %v5655
      %v5657 = vsel %vm5271, %v5566, %v5656
      %v5658 = vsel %vm5273, %v5570, %v5657
      %v5659 = vsel %vm5275, %v5574, %v5658
      %v5660 = vsel %vm5277, %v5578, %v5659
      %v5661 = vsel %vm5611, %v5586, %v5582
      %v5662 = vsel %vm5267, %v5590, %v5661
      %v5663 = vsel %vm5269, %v5594, %v5662
      %v5664 = vsel %vm5271, %v5598, %v5663
      %v5665 = vsel %vm5273, %v5602, %v5664
      %v5666 = vsel %vm5275, %v5606, %v5665
      %v5667 = vsel %vm5277, %v5610, %v5666
      %v5668 = vadd.s32 %v4939, %v5618
      %v5669 = vadd.s32 %v4940, %v5625
      %v5670 = vadd.s32 %v4941, %v5632
      %v5671 = vadd.s32 %v4942, %v5639
      %v5672 = vadd.s32 %v4943, %v5646
      %v5673 = vadd.s32 %v4944, %v5653
      %v5674 = vadd.s32 %v4945, %v5660
      %v5675 = vadd.s32 %v4946, %v5667
      %5676 = vst.msk [vmem:[%s264] sm:$0xff] %vm1148, %v5668
      %5677 = vst.msk [vmem:[%s264 + $0x8] sm:$0xff] %vm1148, %v5669
      %5678 = vst.msk [vmem:[%s264 + $0x10] sm:$0xff] %vm1148, %v5670
      %5679 = vst.msk [vmem:[%s264 + $0x18] sm:$0xff] %vm1148, %v5671
      %5680 = vst.msk [vmem:[%s264 + $0x20] sm:$0xff] %vm1148, %v5672
      %5681 = vst.msk [vmem:[%s264 + $0x28] sm:$0xff] %vm1148, %v5673
      %5682 = vst.msk [vmem:[%s264 + $0x30] sm:$0xff] %vm1148, %v5674
      %5683 = vst.msk [vmem:[%s264 + $0x38] sm:$0xff] %vm1148, %v5675
      %p5684 = scmp.lt.s32.totalorder %s18, 1
      %s5685 = scalar_select %p5684, %s18, 1
      %s5686 = smul.addr %s5685, 8
      %s5687 = smul.addr %s5686, 8
      %s5688 = scalar_lea.vmem %s5, %s5687
      %p5689 = scmp.lt.s32.totalorder %s18, 1
      %s5690 = scalar_select %p5689, %s18, 1
      %s5691 = smul.addr %s5690, 8
      %s5692 = smul.addr %s5691, 8
      %s5693 = scalar_lea.vmem %s6, %s5692
      // Predicated region
      $region41: #{downsample_block_forward.1} parent=39 // pred_check
        %p5694 = pneg %p146
      $region42: #{downsample_block_forward.1} parent=39 // pred_check_branch
        %5696 = sbr.rel (%p5694) target = $region44
      $region43: #{downsample_block_forward.1} parent=39 // pred_region
        _
      $region44: #{downsample_block_forward.1} parent=39 // pred_fallthru
        _
      // Predicated region
      $region45: #{downsample_block_forward.1} parent=39 // pred_check
        %p5697 = pneg %p172
      $region46: #{downsample_block_forward.1} parent=39 // pred_check_branch
        %5699 = sbr.rel (%p5697) target = $region48
      $region47: #{downsample_block_forward.1} parent=39 // pred_region
        _
      $region48: #{downsample_block_forward.1} parent=39 // pred_fallthru
        _
    $region40: #{downsample_block_forward.1} parent=5 // pred_fallthru
      _
    %p5700 = scmp.le.s32.totalorder 2, %s13
    // Predicated region
    $region49: #{downsample_block_forward.1} parent=5 // pred_check
      %p5701 = pneg %p5700
    $region50: #{downsample_block_forward.1} parent=5 // pred_check_branch
      %5703 = sbr.rel (%p5701) target = $region52
    $region51: #{downsample_block_forward.1} parent=5 // pred_region
      %s5704 = ssub.s32 %s13, 2
      // Predicated region
      $region53: #{downsample_block_forward.1} parent=51 // pred_check
        %p5705 = pneg %p152
      $region54: #{downsample_block_forward.1} parent=51 // pred_check_branch
        %5707 = sbr.rel (%p5705) target = $region56
      $region55: #{downsample_block_forward.1} parent=51 // pred_region
        %p5708 = scmp.lt.s32.totalorder %s19, 1
        %s5709 = scalar_select %p5708, %s19, 1
        %s5710 = smul.addr %s5709, 8
        %s5711 = smul.addr %s5710, 8
        %s5712 = scalar_lea.vmem %s5, %s5711
      $region56: #{downsample_block_forward.1} parent=51 // pred_fallthru
        _
      // Predicated region
      $region57: #{downsample_block_forward.1} parent=51 // pred_check
        %p5713 = pneg %p178
      $region58: #{downsample_block_forward.1} parent=51 // pred_check_branch
        %5715 = sbr.rel (%p5713) target = $region60
      $region59: #{downsample_block_forward.1} parent=51 // pred_region
        %p5716 = scmp.lt.s32.totalorder %s19, 1
        %s5717 = scalar_select %p5716, %s19, 1
        %s5718 = smul.addr %s5717, 8
        %s5719 = smul.addr %s5718, 8
        %s5720 = scalar_lea.vmem %s6, %s5719
      $region60: #{downsample_block_forward.1} parent=51 // pred_fallthru
        _
    $region52: #{downsample_block_forward.1} parent=5 // pred_fallthru
      _
  $region6: #{downsample_block_forward.1} parent=0 // loop_footer
    %s17 = sadd.s32 1, %s13
  $region7: #{downsample_block_forward.1} parent=0 // loop_footer_branch
    %12 = sbr.rel target = $region3
  $region8: #{downsample_block_forward.1} parent=0 // loop_exit
    _

</llo_original>
